<compile_context>
chip_gen: v7x
topology: tpu7x:2x2x1
jax: 0.10.0
libtpu: 0.0.40
codegen_flags: <defaults>
</compile_context>

<pallas_src>
import jax
import jax.numpy as jnp
from jax.experimental import pallas as pl
from jax.experimental.pallas import tpu as pltpu

IN_X = 45            # raw observation features
IN_VIS = 128         # vision latent features
H = 256              # GRU hidden size
ACT_DIM = 8          # np.prod(env.single_action_space.shape) -- synthetic
ACT_PAD = 128        # lane-dense padded action head (sliced back to ACT_DIM)


def _elu(v):
    # exp only on the clamped-negative branch; positive branch is identity.
    return jnp.where(v > 0, v, jnp.exp(jnp.minimum(v, 0.0)) - 1.0)


# ----------------------------------------------------------------------------
# Fused Actor kernel: GRU (PyTorch nn.GRU semantics, gate order r, z, n)
# followed by fc1/fc2/fc3 (ELU) -> fc_mu (tanh) -> * scale + bias.
# Time-major flat layout: row index = t*B + b.
# ----------------------------------------------------------------------------
def _make_actor_kernel(T, B):

    def kernel(x_ref, vis_ref, h0_ref,
               wx_ref, wv_ref, whh_ref, bih_ref, bhh_ref,
               w1_ref, b1_ref, w2_ref, b2_ref, w3_ref, b3_ref,
               wmu_ref, bmu_ref, scale_ref, bias_ref,
               act_ref, hout_ref,
               tl_scr):
        f32 = jnp.float32

        # ---- Prologue: input-to-hidden projection for ALL timesteps at once.
        # (T*B,45)@(45,3H) + (T*B,128)@(128,3H) + b_ih  -> (T*B, 3H)
        gi = (jnp.dot(x_ref[...], wx_ref[...], preferred_element_type=f32)
              + jnp.dot(vis_ref[...], wv_ref[...], preferred_element_type=f32)
              + bih_ref[...])

        whh = whh_ref[...]
        bhh = bhh_ref[...]

        # ---- Recurrence: sequential over T, fully unrolled (T small, static).
        h = h0_ref[...].astype(f32)                          # (B, H)
        for t in range(T):
            gi_t = gi[t * B:(t + 1) * B, :]                  # (B, 3H) static slice
            gh = jnp.dot(h, whh, preferred_element_type=f32) + bhh
            r = jax.nn.sigmoid(gi_t[:, :H] + gh[:, :H])
            z = jax.nn.sigmoid(gi_t[:, H:2 * H] + gh[:, H:2 * H])
            n = jnp.tanh(gi_t[:, 2 * H:] + r * gh[:, 2 * H:])
            h = n + z * (h - n)                              # == (1-z)*n + z*h
            tl_scr[t * B:(t + 1) * B, :] = h                 # buffer in VMEM

        hout_ref[...] = h.astype(hout_ref.dtype)

        # ---- MLP head on the full (T*B, H) latent, still resident in VMEM.
        y = tl_scr[...]
        y = _elu(jnp.dot(y, w1_ref[...], preferred_element_type=f32) + b1_ref[...])
        y = _elu(jnp.dot(y, w2_ref[...], preferred_element_type=f32) + b2_ref[...])
        y = _elu(jnp.dot(y, w3_ref[...], preferred_element_type=f32) + b3_ref[...])
        mu = jnp.tanh(jnp.dot(y, wmu_ref[...], preferred_element_type=f32)
                      + bmu_ref[...])
        # Lane-dense (T*B, 128) store; padded lanes are exactly zero.
        act_ref[...] = (mu * scale_ref[...] + bias_ref[...]).astype(act_ref.dtype)

    return kernel


def run_actor(x_tb, vis_tb, h0, params):
    TB = x_tb.shape[0]
    B = h0.shape[0]
    T = TB // B

    # Lane-dense action head: zero-pad fc_mu / scale / bias from 8 -> 128
    # output lanes so the kernel's final store is an unmasked full-lane vst.
    # Padded lanes produce tanh(0)*0 + 0 = 0 and are sliced off below.
    pad = ACT_PAD - ACT_DIM
    wmu = jnp.pad(params["wmu"], ((0, 0), (0, pad)))
    bmu = jnp.pad(params["bmu"], ((0, 0), (0, pad)))
    scale = jnp.pad(params["action_scale"], ((0, 0), (0, pad)))
    bias = jnp.pad(params["action_bias"], ((0, 0), (0, pad)))

    def full_spec(a):
        nd = a.ndim
        return pl.BlockSpec(a.shape, lambda i, nd=nd: (0,) * nd)

    args = (x_tb, vis_tb, h0,
            params["gru_wx_t"], params["gru_wv_t"], params["gru_whh_t"],
            params["gru_bih"], params["gru_bhh"],
            params["w1"], params["b1"], params["w2"], params["b2"],
            params["w3"], params["b3"], wmu, bmu, scale, bias)

    act_pad, hidden_out = pl.pallas_call(
        _make_actor_kernel(T, B),
        out_shape=(jax.ShapeDtypeStruct((TB, ACT_PAD), jnp.float32),
                   jax.ShapeDtypeStruct((B, H), jnp.float32)),
        grid=(1,),
        in_specs=[full_spec(a) for a in args],
        out_specs=(pl.BlockSpec((TB, ACT_PAD), lambda i: (0, 0)),
                   pl.BlockSpec((B, H), lambda i: (0, 0))),
        scratch_shapes=[pltpu.VMEM((TB, H), jnp.float32)],
        compiler_params=pltpu.CompilerParams(
            dimension_semantics=("arbitrary",)),
    )(*args)
    return act_pad[:, :ACT_DIM], hidden_out


# ----------------------------------------------------------------------------
# Full Actor forward (matches PyTorch batch_first layout)
# ----------------------------------------------------------------------------
@jax.jit
def actor_forward(x, vision_latent, hidden_in, params):
    # x: (B, T, 45), vision_latent: (B, T, 128), hidden_in: (1, B, 256)
    B, T, _ = x.shape
    x_tb = jnp.transpose(x, (1, 0, 2)).reshape(T * B, IN_X)          # time-major
    vis_tb = jnp.transpose(vision_latent, (1, 0, 2)).reshape(T * B, IN_VIS)
    h0 = hidden_in[0]                                                # (B, 256)

    act_flat, hidden_out = run_actor(x_tb, vis_tb, h0, params)       # (T*B,A),(B,H)
    action = jnp.transpose(act_flat.reshape(T, B, ACT_DIM), (1, 0, 2))
    return action, hidden_out[None], None


# ----------------------------------------------------------------------------
# Pure-JAX reference (same math) for a correctness check
# ----------------------------------------------------------------------------
def actor_forward_ref(x, vision_latent, hidden_in, params):
    wih_t = jnp.concatenate([params["gru_wx_t"], params["gru_wv_t"]], axis=0)
    x_cat = jnp.concatenate([x, vision_latent], axis=-1)   # (B, T, 173)

    def step(h, xt):
        gi = xt @ wih_t + params["gru_bih"][0]
        gh = h @ params["gru_whh_t"] + params["gru_bhh"][0]
        i_r, i_z, i_n = gi[:, :H], gi[:, H:2 * H], gi[:, 2 * H:]
        h_r, h_z, h_n = gh[:, :H], gh[:, H:2 * H], gh[:, 2 * H:]
        r = jax.nn.sigmoid(i_r + h_r)
        z = jax.nn.sigmoid(i_z + h_z)
        n = jnp.tanh(i_n + r * h_n)
        h_new = (1.0 - z) * n + z * h
        return h_new, h_new

    h_last, tl = jax.lax.scan(step, hidden_in[0],
                              jnp.transpose(x_cat, (1, 0, 2)))
    y = _elu(tl @ params["w1"] + params["b1"][0])
    y = _elu(y @ params["w2"] + params["b2"][0])
    y = _elu(y @ params["w3"] + params["b3"][0])
    mu = jnp.tanh(y @ params["wmu"] + params["bmu"][0])
    act = mu * params["action_scale"][0] + params["action_bias"][0]
    return jnp.transpose(act, (1, 0, 2)), h_last[None], None


# ----------------------------------------------------------------------------
# Deterministic parameter init (PyTorch-style uniform(-1/sqrt(fan), +))
# ----------------------------------------------------------------------------
def init_params(key):
    def unif(key, shape, fan_in):
        bound = 1.0 / jnp.sqrt(jnp.float32(fan_in))
        return jax.random.uniform(key, shape, jnp.float32, -bound, bound)

    ks = jax.random.split(key, 16)
    p = {}
    # GRU: W_ih split into x-block (45, 3H) and vision-block (128, 3H),
    # stored pre-transposed (in, 3H); PyTorch GRU init bound = 1/sqrt(H).
    p["gru_wx_t"] = unif(ks[0], (IN_X, 3 * H), H)
    p["gru_wv_t"] = unif(ks[12], (IN_VIS, 3 * H), H)
    p["gru_whh_t"] = unif(ks[1], (H, 3 * H), H)
    p["gru_bih"] = unif(ks[2], (1, 3 * H), H)
    p["gru_bhh"] = unif(ks[3], (1, 3 * H), H)
    # Linear layers (stored pre-transposed: (in, out))
    p["w1"] = unif(ks[4], (H, 512), H)
    p["b1"] = unif(ks[5], (1, 512), H)
    p["w2"] = unif(ks[6], (512, 256), 512)
    p["b2"] = unif(ks[7], (1, 256), 512)
    p["w3"] = unif(ks[8], (256, 128), 256)
    p["b3"] = unif(ks[9], (1, 128), 256)
    p["wmu"] = unif(ks[10], (128, ACT_DIM), 128)
    p["bmu"] = unif(ks[11], (1, ACT_DIM), 128)
    # action_scale / action_bias buffers from synthetic high=2.0, low=-1.0
    high = jnp.full((ACT_DIM,), 2.0, jnp.float32)
    low = jnp.full((ACT_DIM,), -1.0, jnp.float32)
    p["action_scale"] = ((high - low) / 2.0)[None, :]
    p["action_bias"] = ((high + low) / 2.0)[None, :]
    return p


if __name__ == "__main__":
    B, T = 2, 8
    key = jax.random.PRNGKey(0)
    kp, kx, kv, kh = jax.random.split(key, 4)

    params = init_params(kp)
    x = jax.random.normal(kx, (B, T, IN_X), jnp.float32)
    vision_latent = jax.random.normal(kv, (B, T, IN_VIS), jnp.float32)
    hidden_in = jax.random.normal(kh, (1, B, H), jnp.float32)

    action, hidden_out, _ = actor_forward(x, vision_latent, hidden_in, params)
    action = jax.block_until_ready(action)
    hidden_out = jax.block_until_ready(hidden_out)

    # Sanity check against a pure-JAX reference of the same math.
    a_ref, h_ref, _ = actor_forward_ref(x, vision_latent, hidden_in, params)
    assert action.shape == (B, T, ACT_DIM)
    assert hidden_out.shape == (1, B, H)
    assert jnp.max(jnp.abs(action - a_ref)) < 5e-4
    assert jnp.max(jnp.abs(hidden_out - h_ref)) < 5e-4

    print("KERNEL_OK")
</pallas_src>

<mosaic_0001>
module attributes {stable_mosaic.version = 11 : i64} {
  func.func @kernel(%arg0: i32, %arg1: memref<16x45xf32, #tpu.memory_space<vmem>>, %arg2: memref<16x128xf32, #tpu.memory_space<vmem>>, %arg3: memref<2x256xf32, #tpu.memory_space<vmem>>, %arg4: memref<45x768xf32, #tpu.memory_space<vmem>>, %arg5: memref<128x768xf32, #tpu.memory_space<vmem>>, %arg6: memref<256x768xf32, #tpu.memory_space<vmem>>, %arg7: memref<1x768xf32, #tpu.memory_space<vmem>>, %arg8: memref<1x768xf32, #tpu.memory_space<vmem>>, %arg9: memref<256x512xf32, #tpu.memory_space<vmem>>, %arg10: memref<1x512xf32, #tpu.memory_space<vmem>>, %arg11: memref<512x256xf32, #tpu.memory_space<vmem>>, %arg12: memref<1x256xf32, #tpu.memory_space<vmem>>, %arg13: memref<256x128xf32, #tpu.memory_space<vmem>>, %arg14: memref<1x128xf32, #tpu.memory_space<vmem>>, %arg15: memref<128x128xf32, #tpu.memory_space<vmem>>, %arg16: memref<1x128xf32, #tpu.memory_space<vmem>>, %arg17: memref<1x128xf32, #tpu.memory_space<vmem>>, %arg18: memref<1x128xf32, #tpu.memory_space<vmem>>, %arg19: memref<16x128xf32, #tpu.memory_space<vmem>>, %arg20: memref<2x256xf32, #tpu.memory_space<vmem>>, %arg21: memref<16x256xf32, #tpu.memory_space<vmem>>) attributes {dimension_semantics = [#tpu.dimension_semantics<arbitrary>], iteration_bounds = array<i64: 1>, scalar_prefetch = 0 : i64, scratch_operands = 1 : i64, tpu.core_type = #tpu.core_type<tc>, window_params = [{pipeline_mode = #tpu.pipeline_mode<synchronous>, transform_indices = @transform_0, window_bounds = array<i64: 16, 45>}, {pipeline_mode = #tpu.pipeline_mode<synchronous>, transform_indices = @transform_1, window_bounds = array<i64: 16, 128>}, {pipeline_mode = #tpu.pipeline_mode<synchronous>, transform_indices = @transform_2, window_bounds = array<i64: 2, 256>}, {pipeline_mode = #tpu.pipeline_mode<synchronous>, transform_indices = @transform_3, window_bounds = array<i64: 45, 768>}, {pipeline_mode = #tpu.pipeline_mode<synchronous>, transform_indices = @transform_4, window_bounds = array<i64: 128, 768>}, {pipeline_mode = #tpu.pipeline_mode<synchronous>, transform_indices = @transform_5, window_bounds = array<i64: 256, 768>}, {pipeline_mode = #tpu.pipeline_mode<synchronous>, transform_indices = @transform_6, window_bounds = array<i64: 1, 768>}, {pipeline_mode = #tpu.pipeline_mode<synchronous>, transform_indices = @transform_7, window_bounds = array<i64: 1, 768>}, {pipeline_mode = #tpu.pipeline_mode<synchronous>, transform_indices = @transform_8, window_bounds = array<i64: 256, 512>}, {pipeline_mode = #tpu.pipeline_mode<synchronous>, transform_indices = @transform_9, window_bounds = array<i64: 1, 512>}, {pipeline_mode = #tpu.pipeline_mode<synchronous>, transform_indices = @transform_10, window_bounds = array<i64: 512, 256>}, {pipeline_mode = #tpu.pipeline_mode<synchronous>, transform_indices = @transform_11, window_bounds = array<i64: 1, 256>}, {pipeline_mode = #tpu.pipeline_mode<synchronous>, transform_indices = @transform_12, window_bounds = array<i64: 256, 128>}, {pipeline_mode = #tpu.pipeline_mode<synchronous>, transform_indices = @transform_13, window_bounds = array<i64: 1, 128>}, {pipeline_mode = #tpu.pipeline_mode<synchronous>, transform_indices = @transform_14, window_bounds = array<i64: 128, 128>}, {pipeline_mode = #tpu.pipeline_mode<synchronous>, transform_indices = @transform_15, window_bounds = array<i64: 1, 128>}, {pipeline_mode = #tpu.pipeline_mode<synchronous>, transform_indices = @transform_16, window_bounds = array<i64: 1, 128>}, {pipeline_mode = #tpu.pipeline_mode<synchronous>, transform_indices = @transform_17, window_bounds = array<i64: 1, 128>}, {pipeline_mode = #tpu.pipeline_mode<synchronous>, transform_indices = @transform_18, window_bounds = array<i64: 16, 128>}, {pipeline_mode = #tpu.pipeline_mode<synchronous>, transform_indices = @transform_19, window_bounds = array<i64: 2, 256>}]} {
    %c0 = arith.constant 0 : index
    %c0_0 = arith.constant 0 : index
    %0 = vector.load %arg1[%c0, %c0_0] : memref<16x45xf32, #tpu.memory_space<vmem>>, vector<16x45xf32>
    %c0_1 = arith.constant 0 : index
    %c0_2 = arith.constant 0 : index
    %1 = vector.load %arg4[%c0_1, %c0_2] : memref<45x768xf32, #tpu.memory_space<vmem>>, vector<45x768xf32>
    %cst = arith.constant dense<0.000000e+00> : vector<16x768xf32>
    %2 = tpu.matmul %0, %1, %cst {dimension_numbers = #tpu.dot_dimension_numbers<[1], [0], [0], [1], [0, 0, 1, 1], [], []>} : vector<16x45xf32>, vector<45x768xf32>, vector<16x768xf32> -> vector<16x768xf32>
    %c0_3 = arith.constant 0 : index
    %c0_4 = arith.constant 0 : index
    %3 = vector.load %arg2[%c0_3, %c0_4] : memref<16x128xf32, #tpu.memory_space<vmem>>, vector<16x128xf32>
    %c0_5 = arith.constant 0 : index
    %c0_6 = arith.constant 0 : index
    %4 = vector.load %arg5[%c0_5, %c0_6] : memref<128x768xf32, #tpu.memory_space<vmem>>, vector<128x768xf32>
    %cst_7 = arith.constant dense<0.000000e+00> : vector<16x768xf32>
    %5 = tpu.matmul %3, %4, %cst_7 {dimension_numbers = #tpu.dot_dimension_numbers<[1], [0], [0], [1], [0, 0, 1, 1], [], []>} : vector<16x128xf32>, vector<128x768xf32>, vector<16x768xf32> -> vector<16x768xf32>
    %6 = arith.addf %2, %5 : vector<16x768xf32>
    %c0_8 = arith.constant 0 : index
    %c0_9 = arith.constant 0 : index
    %7 = vector.load %arg7[%c0_8, %c0_9] : memref<1x768xf32, #tpu.memory_space<vmem>>, vector<1x768xf32>
    %8 = vector.broadcast %7 : vector<1x768xf32> to vector<16x768xf32>
    %9 = arith.addf %6, %8 : vector<16x768xf32>
    %c0_10 = arith.constant 0 : index
    %c0_11 = arith.constant 0 : index
    %10 = vector.load %arg6[%c0_10, %c0_11] : memref<256x768xf32, #tpu.memory_space<vmem>>, vector<256x768xf32>
    %c0_12 = arith.constant 0 : index
    %c0_13 = arith.constant 0 : index
    %11 = vector.load %arg8[%c0_12, %c0_13] : memref<1x768xf32, #tpu.memory_space<vmem>>, vector<1x768xf32>
    %c0_14 = arith.constant 0 : index
    %c0_15 = arith.constant 0 : index
    %12 = vector.load %arg3[%c0_14, %c0_15] : memref<2x256xf32, #tpu.memory_space<vmem>>, vector<2x256xf32>
    %13 = vector.extract_strided_slice %9 {offsets = [0, 0], sizes = [2, 768], strides = [1, 1]} : vector<16x768xf32> to vector<2x768xf32>
    %cst_16 = arith.constant dense<0.000000e+00> : vector<2x768xf32>
    %14 = tpu.matmul %12, %10, %cst_16 {dimension_numbers = #tpu.dot_dimension_numbers<[1], [0], [0], [1], [0, 0, 1, 1], [], []>} : vector<2x256xf32>, vector<256x768xf32>, vector<2x768xf32> -> vector<2x768xf32>
    %15 = vector.broadcast %11 : vector<1x768xf32> to vector<2x768xf32>
    %16 = arith.addf %14, %15 : vector<2x768xf32>
    %17 = vector.extract_strided_slice %13 {offsets = [0, 0], sizes = [2, 256], strides = [1, 1]} : vector<2x768xf32> to vector<2x256xf32>
    %18 = vector.extract_strided_slice %16 {offsets = [0, 0], sizes = [2, 256], strides = [1, 1]} : vector<2x768xf32> to vector<2x256xf32>
    %19 = arith.addf %17, %18 : vector<2x256xf32>
    %20 = arith.negf %19 : vector<2x256xf32>
    %21 = math.exp %20 : vector<2x256xf32>
    %cst_17 = arith.constant 1.000000e+00 : f32
    %22 = vector.broadcast %cst_17 : f32 to vector<2x256xf32>
    %23 = arith.addf %22, %21 : vector<2x256xf32>
    %24 = arith.divf %22, %23 : vector<2x256xf32>
    %25 = vector.extract_strided_slice %13 {offsets = [0, 256], sizes = [2, 256], strides = [1, 1]} : vector<2x768xf32> to vector<2x256xf32>
    %26 = vector.extract_strided_slice %16 {offsets = [0, 256], sizes = [2, 256], strides = [1, 1]} : vector<2x768xf32> to vector<2x256xf32>
    %27 = arith.addf %25, %26 : vector<2x256xf32>
    %28 = arith.negf %27 : vector<2x256xf32>
    %29 = math.exp %28 : vector<2x256xf32>
    %cst_18 = arith.constant 1.000000e+00 : f32
    %30 = vector.broadcast %cst_18 : f32 to vector<2x256xf32>
    %31 = arith.addf %30, %29 : vector<2x256xf32>
    %32 = arith.divf %30, %31 : vector<2x256xf32>
    %33 = vector.extract_strided_slice %13 {offsets = [0, 512], sizes = [2, 256], strides = [1, 1]} : vector<2x768xf32> to vector<2x256xf32>
    %34 = vector.extract_strided_slice %16 {offsets = [0, 512], sizes = [2, 256], strides = [1, 1]} : vector<2x768xf32> to vector<2x256xf32>
    %35 = arith.mulf %24, %34 : vector<2x256xf32>
    %36 = arith.addf %33, %35 : vector<2x256xf32>
    %37 = math.tanh %36 : vector<2x256xf32>
    %38 = arith.subf %12, %37 : vector<2x256xf32>
    %39 = arith.mulf %32, %38 : vector<2x256xf32>
    %40 = arith.addf %37, %39 : vector<2x256xf32>
    %c0_19 = arith.constant 0 : index
    %c0_20 = arith.constant 0 : index
    %41 = vector.load %arg21[%c0_19, %c0_20] : memref<16x256xf32, #tpu.memory_space<vmem>>, vector<2x256xf32>
    tpu.vector_store %arg21[%c0_19, %c0_20], %40 {strides = array<i32>} : memref<16x256xf32, #tpu.memory_space<vmem>>, vector<2x256xf32>,
    %42 = vector.extract_strided_slice %9 {offsets = [2, 0], sizes = [2, 768], strides = [1, 1]} : vector<16x768xf32> to vector<2x768xf32>
    %cst_21 = arith.constant dense<0.000000e+00> : vector<2x768xf32>
    %43 = tpu.matmul %40, %10, %cst_21 {dimension_numbers = #tpu.dot_dimension_numbers<[1], [0], [0], [1], [0, 0, 1, 1], [], []>} : vector<2x256xf32>, vector<256x768xf32>, vector<2x768xf32> -> vector<2x768xf32>
    %44 = vector.broadcast %11 : vector<1x768xf32> to vector<2x768xf32>
    %45 = arith.addf %43, %44 : vector<2x768xf32>
    %46 = vector.extract_strided_slice %42 {offsets = [0, 0], sizes = [2, 256], strides = [1, 1]} : vector<2x768xf32> to vector<2x256xf32>
    %47 = vector.extract_strided_slice %45 {offsets = [0, 0], sizes = [2, 256], strides = [1, 1]} : vector<2x768xf32> to vector<2x256xf32>
    %48 = arith.addf %46, %47 : vector<2x256xf32>
    %49 = arith.negf %48 : vector<2x256xf32>
    %50 = math.exp %49 : vector<2x256xf32>
    %cst_22 = arith.constant 1.000000e+00 : f32
    %51 = vector.broadcast %cst_22 : f32 to vector<2x256xf32>
    %52 = arith.addf %51, %50 : vector<2x256xf32>
    %53 = arith.divf %51, %52 : vector<2x256xf32>
    %54 = vector.extract_strided_slice %42 {offsets = [0, 256], sizes = [2, 256], strides = [1, 1]} : vector<2x768xf32> to vector<2x256xf32>
    %55 = vector.extract_strided_slice %45 {offsets = [0, 256], sizes = [2, 256], strides = [1, 1]} : vector<2x768xf32> to vector<2x256xf32>
    %56 = arith.addf %54, %55 : vector<2x256xf32>
    %57 = arith.negf %56 : vector<2x256xf32>
    %58 = math.exp %57 : vector<2x256xf32>
    %cst_23 = arith.constant 1.000000e+00 : f32
    %59 = vector.broadcast %cst_23 : f32 to vector<2x256xf32>
    %60 = arith.addf %59, %58 : vector<2x256xf32>
    %61 = arith.divf %59, %60 : vector<2x256xf32>
    %62 = vector.extract_strided_slice %42 {offsets = [0, 512], sizes = [2, 256], strides = [1, 1]} : vector<2x768xf32> to vector<2x256xf32>
    %63 = vector.extract_strided_slice %45 {offsets = [0, 512], sizes = [2, 256], strides = [1, 1]} : vector<2x768xf32> to vector<2x256xf32>
    %64 = arith.mulf %53, %63 : vector<2x256xf32>
    %65 = arith.addf %62, %64 : vector<2x256xf32>
    %66 = math.tanh %65 : vector<2x256xf32>
    %67 = arith.subf %40, %66 : vector<2x256xf32>
    %68 = arith.mulf %61, %67 : vector<2x256xf32>
    %69 = arith.addf %66, %68 : vector<2x256xf32>
    %c2 = arith.constant 2 : index
    %c0_24 = arith.constant 0 : index
    %70 = vector.load %arg21[%c2, %c0_24] : memref<16x256xf32, #tpu.memory_space<vmem>>, vector<2x256xf32>
    tpu.vector_store %arg21[%c2, %c0_24], %69 {strides = array<i32>} : memref<16x256xf32, #tpu.memory_space<vmem>>, vector<2x256xf32>,
    %71 = vector.extract_strided_slice %9 {offsets = [4, 0], sizes = [2, 768], strides = [1, 1]} : vector<16x768xf32> to vector<2x768xf32>
    %cst_25 = arith.constant dense<0.000000e+00> : vector<2x768xf32>
    %72 = tpu.matmul %69, %10, %cst_25 {dimension_numbers = #tpu.dot_dimension_numbers<[1], [0], [0], [1], [0, 0, 1, 1], [], []>} : vector<2x256xf32>, vector<256x768xf32>, vector<2x768xf32> -> vector<2x768xf32>
    %73 = vector.broadcast %11 : vector<1x768xf32> to vector<2x768xf32>
    %74 = arith.addf %72, %73 : vector<2x768xf32>
    %75 = vector.extract_strided_slice %71 {offsets = [0, 0], sizes = [2, 256], strides = [1, 1]} : vector<2x768xf32> to vector<2x256xf32>
    %76 = vector.extract_strided_slice %74 {offsets = [0, 0], sizes = [2, 256], strides = [1, 1]} : vector<2x768xf32> to vector<2x256xf32>
    %77 = arith.addf %75, %76 : vector<2x256xf32>
    %78 = arith.negf %77 : vector<2x256xf32>
    %79 = math.exp %78 : vector<2x256xf32>
    %cst_26 = arith.constant 1.000000e+00 : f32
    %80 = vector.broadcast %cst_26 : f32 to vector<2x256xf32>
    %81 = arith.addf %80, %79 : vector<2x256xf32>
    %82 = arith.divf %80, %81 : vector<2x256xf32>
    %83 = vector.extract_strided_slice %71 {offsets = [0, 256], sizes = [2, 256], strides = [1, 1]} : vector<2x768xf32> to vector<2x256xf32>
    %84 = vector.extract_strided_slice %74 {offsets = [0, 256], sizes = [2, 256], strides = [1, 1]} : vector<2x768xf32> to vector<2x256xf32>
    %85 = arith.addf %83, %84 : vector<2x256xf32>
    %86 = arith.negf %85 : vector<2x256xf32>
    %87 = math.exp %86 : vector<2x256xf32>
    %cst_27 = arith.constant 1.000000e+00 : f32
    %88 = vector.broadcast %cst_27 : f32 to vector<2x256xf32>
    %89 = arith.addf %88, %87 : vector<2x256xf32>
    %90 = arith.divf %88, %89 : vector<2x256xf32>
    %91 = vector.extract_strided_slice %71 {offsets = [0, 512], sizes = [2, 256], strides = [1, 1]} : vector<2x768xf32> to vector<2x256xf32>
    %92 = vector.extract_strided_slice %74 {offsets = [0, 512], sizes = [2, 256], strides = [1, 1]} : vector<2x768xf32> to vector<2x256xf32>
    %93 = arith.mulf %82, %92 : vector<2x256xf32>
    %94 = arith.addf %91, %93 : vector<2x256xf32>
    %95 = math.tanh %94 : vector<2x256xf32>
    %96 = arith.subf %69, %95 : vector<2x256xf32>
    %97 = arith.mulf %90, %96 : vector<2x256xf32>
    %98 = arith.addf %95, %97 : vector<2x256xf32>
    %c4 = arith.constant 4 : index
    %c0_28 = arith.constant 0 : index
    %99 = vector.load %arg21[%c4, %c0_28] : memref<16x256xf32, #tpu.memory_space<vmem>>, vector<2x256xf32>
    tpu.vector_store %arg21[%c4, %c0_28], %98 {strides = array<i32>} : memref<16x256xf32, #tpu.memory_space<vmem>>, vector<2x256xf32>,
    %100 = vector.extract_strided_slice %9 {offsets = [6, 0], sizes = [2, 768], strides = [1, 1]} : vector<16x768xf32> to vector<2x768xf32>
    %cst_29 = arith.constant dense<0.000000e+00> : vector<2x768xf32>
    %101 = tpu.matmul %98, %10, %cst_29 {dimension_numbers = #tpu.dot_dimension_numbers<[1], [0], [0], [1], [0, 0, 1, 1], [], []>} : vector<2x256xf32>, vector<256x768xf32>, vector<2x768xf32> -> vector<2x768xf32>
    %102 = vector.broadcast %11 : vector<1x768xf32> to vector<2x768xf32>
    %103 = arith.addf %101, %102 : vector<2x768xf32>
    %104 = vector.extract_strided_slice %100 {offsets = [0, 0], sizes = [2, 256], strides = [1, 1]} : vector<2x768xf32> to vector<2x256xf32>
    %105 = vector.extract_strided_slice %103 {offsets = [0, 0], sizes = [2, 256], strides = [1, 1]} : vector<2x768xf32> to vector<2x256xf32>
    %106 = arith.addf %104, %105 : vector<2x256xf32>
    %107 = arith.negf %106 : vector<2x256xf32>
    %108 = math.exp %107 : vector<2x256xf32>
    %cst_30 = arith.constant 1.000000e+00 : f32
    %109 = vector.broadcast %cst_30 : f32 to vector<2x256xf32>
    %110 = arith.addf %109, %108 : vector<2x256xf32>
    %111 = arith.divf %109, %110 : vector<2x256xf32>
    %112 = vector.extract_strided_slice %100 {offsets = [0, 256], sizes = [2, 256], strides = [1, 1]} : vector<2x768xf32> to vector<2x256xf32>
    %113 = vector.extract_strided_slice %103 {offsets = [0, 256], sizes = [2, 256], strides = [1, 1]} : vector<2x768xf32> to vector<2x256xf32>
    %114 = arith.addf %112, %113 : vector<2x256xf32>
    %115 = arith.negf %114 : vector<2x256xf32>
    %116 = math.exp %115 : vector<2x256xf32>
    %cst_31 = arith.constant 1.000000e+00 : f32
    %117 = vector.broadcast %cst_31 : f32 to vector<2x256xf32>
    %118 = arith.addf %117, %116 : vector<2x256xf32>
    %119 = arith.divf %117, %118 : vector<2x256xf32>
    %120 = vector.extract_strided_slice %100 {offsets = [0, 512], sizes = [2, 256], strides = [1, 1]} : vector<2x768xf32> to vector<2x256xf32>
    %121 = vector.extract_strided_slice %103 {offsets = [0, 512], sizes = [2, 256], strides = [1, 1]} : vector<2x768xf32> to vector<2x256xf32>
    %122 = arith.mulf %111, %121 : vector<2x256xf32>
    %123 = arith.addf %120, %122 : vector<2x256xf32>
    %124 = math.tanh %123 : vector<2x256xf32>
    %125 = arith.subf %98, %124 : vector<2x256xf32>
    %126 = arith.mulf %119, %125 : vector<2x256xf32>
    %127 = arith.addf %124, %126 : vector<2x256xf32>
    %c6 = arith.constant 6 : index
    %c0_32 = arith.constant 0 : index
    %128 = vector.load %arg21[%c6, %c0_32] : memref<16x256xf32, #tpu.memory_space<vmem>>, vector<2x256xf32>
    tpu.vector_store %arg21[%c6, %c0_32], %127 {strides = array<i32>} : memref<16x256xf32, #tpu.memory_space<vmem>>, vector<2x256xf32>,
    %129 = vector.extract_strided_slice %9 {offsets = [8, 0], sizes = [2, 768], strides = [1, 1]} : vector<16x768xf32> to vector<2x768xf32>
    %cst_33 = arith.constant dense<0.000000e+00> : vector<2x768xf32>
    %130 = tpu.matmul %127, %10, %cst_33 {dimension_numbers = #tpu.dot_dimension_numbers<[1], [0], [0], [1], [0, 0, 1, 1], [], []>} : vector<2x256xf32>, vector<256x768xf32>, vector<2x768xf32> -> vector<2x768xf32>
    %131 = vector.broadcast %11 : vector<1x768xf32> to vector<2x768xf32>
    %132 = arith.addf %130, %131 : vector<2x768xf32>
    %133 = vector.extract_strided_slice %129 {offsets = [0, 0], sizes = [2, 256], strides = [1, 1]} : vector<2x768xf32> to vector<2x256xf32>
    %134 = vector.extract_strided_slice %132 {offsets = [0, 0], sizes = [2, 256], strides = [1, 1]} : vector<2x768xf32> to vector<2x256xf32>
    %135 = arith.addf %133, %134 : vector<2x256xf32>
    %136 = arith.negf %135 : vector<2x256xf32>
    %137 = math.exp %136 : vector<2x256xf32>
    %cst_34 = arith.constant 1.000000e+00 : f32
    %138 = vector.broadcast %cst_34 : f32 to vector<2x256xf32>
    %139 = arith.addf %138, %137 : vector<2x256xf32>
    %140 = arith.divf %138, %139 : vector<2x256xf32>
    %141 = vector.extract_strided_slice %129 {offsets = [0, 256], sizes = [2, 256], strides = [1, 1]} : vector<2x768xf32> to vector<2x256xf32>
    %142 = vector.extract_strided_slice %132 {offsets = [0, 256], sizes = [2, 256], strides = [1, 1]} : vector<2x768xf32> to vector<2x256xf32>
    %143 = arith.addf %141, %142 : vector<2x256xf32>
    %144 = arith.negf %143 : vector<2x256xf32>
    %145 = math.exp %144 : vector<2x256xf32>
    %cst_35 = arith.constant 1.000000e+00 : f32
    %146 = vector.broadcast %cst_35 : f32 to vector<2x256xf32>
    %147 = arith.addf %146, %145 : vector<2x256xf32>
    %148 = arith.divf %146, %147 : vector<2x256xf32>
    %149 = vector.extract_strided_slice %129 {offsets = [0, 512], sizes = [2, 256], strides = [1, 1]} : vector<2x768xf32> to vector<2x256xf32>
    %150 = vector.extract_strided_slice %132 {offsets = [0, 512], sizes = [2, 256], strides = [1, 1]} : vector<2x768xf32> to vector<2x256xf32>
    %151 = arith.mulf %140, %150 : vector<2x256xf32>
    %152 = arith.addf %149, %151 : vector<2x256xf32>
    %153 = math.tanh %152 : vector<2x256xf32>
    %154 = arith.subf %127, %153 : vector<2x256xf32>
    %155 = arith.mulf %148, %154 : vector<2x256xf32>
    %156 = arith.addf %153, %155 : vector<2x256xf32>
    %c8 = arith.constant 8 : index
    %c0_36 = arith.constant 0 : index
    %157 = vector.load %arg21[%c8, %c0_36] : memref<16x256xf32, #tpu.memory_space<vmem>>, vector<2x256xf32>
    tpu.vector_store %arg21[%c8, %c0_36], %156 {strides = array<i32>} : memref<16x256xf32, #tpu.memory_space<vmem>>, vector<2x256xf32>,
    %158 = vector.extract_strided_slice %9 {offsets = [10, 0], sizes = [2, 768], strides = [1, 1]} : vector<16x768xf32> to vector<2x768xf32>
    %cst_37 = arith.constant dense<0.000000e+00> : vector<2x768xf32>
    %159 = tpu.matmul %156, %10, %cst_37 {dimension_numbers = #tpu.dot_dimension_numbers<[1], [0], [0], [1], [0, 0, 1, 1], [], []>} : vector<2x256xf32>, vector<256x768xf32>, vector<2x768xf32> -> vector<2x768xf32>
    %160 = vector.broadcast %11 : vector<1x768xf32> to vector<2x768xf32>
    %161 = arith.addf %159, %160 : vector<2x768xf32>
    %162 = vector.extract_strided_slice %158 {offsets = [0, 0], sizes = [2, 256], strides = [1, 1]} : vector<2x768xf32> to vector<2x256xf32>
    %163 = vector.extract_strided_slice %161 {offsets = [0, 0], sizes = [2, 256], strides = [1, 1]} : vector<2x768xf32> to vector<2x256xf32>
    %164 = arith.addf %162, %163 : vector<2x256xf32>
    %165 = arith.negf %164 : vector<2x256xf32>
    %166 = math.exp %165 : vector<2x256xf32>
    %cst_38 = arith.constant 1.000000e+00 : f32
    %167 = vector.broadcast %cst_38 : f32 to vector<2x256xf32>
    %168 = arith.addf %167, %166 : vector<2x256xf32>
    %169 = arith.divf %167, %168 : vector<2x256xf32>
    %170 = vector.extract_strided_slice %158 {offsets = [0, 256], sizes = [2, 256], strides = [1, 1]} : vector<2x768xf32> to vector<2x256xf32>
    %171 = vector.extract_strided_slice %161 {offsets = [0, 256], sizes = [2, 256], strides = [1, 1]} : vector<2x768xf32> to vector<2x256xf32>
    %172 = arith.addf %170, %171 : vector<2x256xf32>
    %173 = arith.negf %172 : vector<2x256xf32>
    %174 = math.exp %173 : vector<2x256xf32>
    %cst_39 = arith.constant 1.000000e+00 : f32
    %175 = vector.broadcast %cst_39 : f32 to vector<2x256xf32>
    %176 = arith.addf %175, %174 : vector<2x256xf32>
    %177 = arith.divf %175, %176 : vector<2x256xf32>
    %178 = vector.extract_strided_slice %158 {offsets = [0, 512], sizes = [2, 256], strides = [1, 1]} : vector<2x768xf32> to vector<2x256xf32>
    %179 = vector.extract_strided_slice %161 {offsets = [0, 512], sizes = [2, 256], strides = [1, 1]} : vector<2x768xf32> to vector<2x256xf32>
    %180 = arith.mulf %169, %179 : vector<2x256xf32>
    %181 = arith.addf %178, %180 : vector<2x256xf32>
    %182 = math.tanh %181 : vector<2x256xf32>
    %183 = arith.subf %156, %182 : vector<2x256xf32>
    %184 = arith.mulf %177, %183 : vector<2x256xf32>
    %185 = arith.addf %182, %184 : vector<2x256xf32>
    %c10 = arith.constant 10 : index
    %c0_40 = arith.constant 0 : index
    %186 = vector.load %arg21[%c10, %c0_40] : memref<16x256xf32, #tpu.memory_space<vmem>>, vector<2x256xf32>
    tpu.vector_store %arg21[%c10, %c0_40], %185 {strides = array<i32>} : memref<16x256xf32, #tpu.memory_space<vmem>>, vector<2x256xf32>,
    %187 = vector.extract_strided_slice %9 {offsets = [12, 0], sizes = [2, 768], strides = [1, 1]} : vector<16x768xf32> to vector<2x768xf32>
    %cst_41 = arith.constant dense<0.000000e+00> : vector<2x768xf32>
    %188 = tpu.matmul %185, %10, %cst_41 {dimension_numbers = #tpu.dot_dimension_numbers<[1], [0], [0], [1], [0, 0, 1, 1], [], []>} : vector<2x256xf32>, vector<256x768xf32>, vector<2x768xf32> -> vector<2x768xf32>
    %189 = vector.broadcast %11 : vector<1x768xf32> to vector<2x768xf32>
    %190 = arith.addf %188, %189 : vector<2x768xf32>
    %191 = vector.extract_strided_slice %187 {offsets = [0, 0], sizes = [2, 256], strides = [1, 1]} : vector<2x768xf32> to vector<2x256xf32>
    %192 = vector.extract_strided_slice %190 {offsets = [0, 0], sizes = [2, 256], strides = [1, 1]} : vector<2x768xf32> to vector<2x256xf32>
    %193 = arith.addf %191, %192 : vector<2x256xf32>
    %194 = arith.negf %193 : vector<2x256xf32>
    %195 = math.exp %194 : vector<2x256xf32>
    %cst_42 = arith.constant 1.000000e+00 : f32
    %196 = vector.broadcast %cst_42 : f32 to vector<2x256xf32>
    %197 = arith.addf %196, %195 : vector<2x256xf32>
    %198 = arith.divf %196, %197 : vector<2x256xf32>
    %199 = vector.extract_strided_slice %187 {offsets = [0, 256], sizes = [2, 256], strides = [1, 1]} : vector<2x768xf32> to vector<2x256xf32>
    %200 = vector.extract_strided_slice %190 {offsets = [0, 256], sizes = [2, 256], strides = [1, 1]} : vector<2x768xf32> to vector<2x256xf32>
    %201 = arith.addf %199, %200 : vector<2x256xf32>
    %202 = arith.negf %201 : vector<2x256xf32>
    %203 = math.exp %202 : vector<2x256xf32>
    %cst_43 = arith.constant 1.000000e+00 : f32
    %204 = vector.broadcast %cst_43 : f32 to vector<2x256xf32>
    %205 = arith.addf %204, %203 : vector<2x256xf32>
    %206 = arith.divf %204, %205 : vector<2x256xf32>
    %207 = vector.extract_strided_slice %187 {offsets = [0, 512], sizes = [2, 256], strides = [1, 1]} : vector<2x768xf32> to vector<2x256xf32>
    %208 = vector.extract_strided_slice %190 {offsets = [0, 512], sizes = [2, 256], strides = [1, 1]} : vector<2x768xf32> to vector<2x256xf32>
    %209 = arith.mulf %198, %208 : vector<2x256xf32>
    %210 = arith.addf %207, %209 : vector<2x256xf32>
    %211 = math.tanh %210 : vector<2x256xf32>
    %212 = arith.subf %185, %211 : vector<2x256xf32>
    %213 = arith.mulf %206, %212 : vector<2x256xf32>
    %214 = arith.addf %211, %213 : vector<2x256xf32>
    %c12 = arith.constant 12 : index
    %c0_44 = arith.constant 0 : index
    %215 = vector.load %arg21[%c12, %c0_44] : memref<16x256xf32, #tpu.memory_space<vmem>>, vector<2x256xf32>
    tpu.vector_store %arg21[%c12, %c0_44], %214 {strides = array<i32>} : memref<16x256xf32, #tpu.memory_space<vmem>>, vector<2x256xf32>,
    %216 = vector.extract_strided_slice %9 {offsets = [14, 0], sizes = [2, 768], strides = [1, 1]} : vector<16x768xf32> to vector<2x768xf32>
    %cst_45 = arith.constant dense<0.000000e+00> : vector<2x768xf32>
    %217 = tpu.matmul %214, %10, %cst_45 {dimension_numbers = #tpu.dot_dimension_numbers<[1], [0], [0], [1], [0, 0, 1, 1], [], []>} : vector<2x256xf32>, vector<256x768xf32>, vector<2x768xf32> -> vector<2x768xf32>
    %218 = vector.broadcast %11 : vector<1x768xf32> to vector<2x768xf32>
    %219 = arith.addf %217, %218 : vector<2x768xf32>
    %220 = vector.extract_strided_slice %216 {offsets = [0, 0], sizes = [2, 256], strides = [1, 1]} : vector<2x768xf32> to vector<2x256xf32>
    %221 = vector.extract_strided_slice %219 {offsets = [0, 0], sizes = [2, 256], strides = [1, 1]} : vector<2x768xf32> to vector<2x256xf32>
    %222 = arith.addf %220, %221 : vector<2x256xf32>
    %223 = arith.negf %222 : vector<2x256xf32>
    %224 = math.exp %223 : vector<2x256xf32>
    %cst_46 = arith.constant 1.000000e+00 : f32
    %225 = vector.broadcast %cst_46 : f32 to vector<2x256xf32>
    %226 = arith.addf %225, %224 : vector<2x256xf32>
    %227 = arith.divf %225, %226 : vector<2x256xf32>
    %228 = vector.extract_strided_slice %216 {offsets = [0, 256], sizes = [2, 256], strides = [1, 1]} : vector<2x768xf32> to vector<2x256xf32>
    %229 = vector.extract_strided_slice %219 {offsets = [0, 256], sizes = [2, 256], strides = [1, 1]} : vector<2x768xf32> to vector<2x256xf32>
    %230 = arith.addf %228, %229 : vector<2x256xf32>
    %231 = arith.negf %230 : vector<2x256xf32>
    %232 = math.exp %231 : vector<2x256xf32>
    %cst_47 = arith.constant 1.000000e+00 : f32
    %233 = vector.broadcast %cst_47 : f32 to vector<2x256xf32>
    %234 = arith.addf %233, %232 : vector<2x256xf32>
    %235 = arith.divf %233, %234 : vector<2x256xf32>
    %236 = vector.extract_strided_slice %216 {offsets = [0, 512], sizes = [2, 256], strides = [1, 1]} : vector<2x768xf32> to vector<2x256xf32>
    %237 = vector.extract_strided_slice %219 {offsets = [0, 512], sizes = [2, 256], strides = [1, 1]} : vector<2x768xf32> to vector<2x256xf32>
    %238 = arith.mulf %227, %237 : vector<2x256xf32>
    %239 = arith.addf %236, %238 : vector<2x256xf32>
    %240 = math.tanh %239 : vector<2x256xf32>
    %241 = arith.subf %214, %240 : vector<2x256xf32>
    %242 = arith.mulf %235, %241 : vector<2x256xf32>
    %243 = arith.addf %240, %242 : vector<2x256xf32>
    %c14 = arith.constant 14 : index
    %c0_48 = arith.constant 0 : index
    %244 = vector.load %arg21[%c14, %c0_48] : memref<16x256xf32, #tpu.memory_space<vmem>>, vector<2x256xf32>
    tpu.vector_store %arg21[%c14, %c0_48], %243 {strides = array<i32>} : memref<16x256xf32, #tpu.memory_space<vmem>>, vector<2x256xf32>,
    %c0_49 = arith.constant 0 : index
    %c0_50 = arith.constant 0 : index
    %245 = vector.load %arg20[%c0_49, %c0_50] : memref<2x256xf32, #tpu.memory_space<vmem>>, vector<2x256xf32>
    tpu.vector_store %arg20[%c0_49, %c0_50], %243 {strides = array<i32>} : memref<2x256xf32, #tpu.memory_space<vmem>>, vector<2x256xf32>,
    %c0_51 = arith.constant 0 : index
    %c0_52 = arith.constant 0 : index
    %246 = vector.load %arg21[%c0_51, %c0_52] : memref<16x256xf32, #tpu.memory_space<vmem>>, vector<16x256xf32>
    %c0_53 = arith.constant 0 : index
    %c0_54 = arith.constant 0 : index
    %247 = vector.load %arg9[%c0_53, %c0_54] : memref<256x512xf32, #tpu.memory_space<vmem>>, vector<256x512xf32>
    %cst_55 = arith.constant dense<0.000000e+00> : vector<16x512xf32>
    %248 = tpu.matmul %246, %247, %cst_55 {dimension_numbers = #tpu.dot_dimension_numbers<[1], [0], [0], [1], [0, 0, 1, 1], [], []>} : vector<16x256xf32>, vector<256x512xf32>, vector<16x512xf32> -> vector<16x512xf32>
    %c0_56 = arith.constant 0 : index
    %c0_57 = arith.constant 0 : index
    %249 = vector.load %arg10[%c0_56, %c0_57] : memref<1x512xf32, #tpu.memory_space<vmem>>, vector<1x512xf32>
    %250 = vector.broadcast %249 : vector<1x512xf32> to vector<16x512xf32>
    %251 = arith.addf %248, %250 : vector<16x512xf32>
    %cst_58 = arith.constant 0.000000e+00 : f32
    %252 = vector.broadcast %cst_58 : f32 to vector<16x512xf32>
    %253 = arith.cmpf ogt, %251, %252 : vector<16x512xf32>
    %cst_59 = arith.constant 0.000000e+00 : f32
    %254 = vector.broadcast %cst_59 : f32 to vector<16x512xf32>
    %255 = arith.minimumf %251, %254 : vector<16x512xf32>
    %256 = math.exp %255 : vector<16x512xf32>
    %cst_60 = arith.constant 1.000000e+00 : f32
    %257 = vector.broadcast %cst_60 : f32 to vector<16x512xf32>
    %258 = arith.subf %256, %257 : vector<16x512xf32>
    %259 = arith.select %253, %251, %258 : vector<16x512xi1>, vector<16x512xf32>
    %c0_61 = arith.constant 0 : index
    %c0_62 = arith.constant 0 : index
    %260 = vector.load %arg11[%c0_61, %c0_62] : memref<512x256xf32, #tpu.memory_space<vmem>>, vector<512x256xf32>
    %cst_63 = arith.constant dense<0.000000e+00> : vector<16x256xf32>
    %261 = tpu.matmul %259, %260, %cst_63 {dimension_numbers = #tpu.dot_dimension_numbers<[1], [0], [0], [1], [0, 0, 1, 1], [], []>} : vector<16x512xf32>, vector<512x256xf32>, vector<16x256xf32> -> vector<16x256xf32>
    %c0_64 = arith.constant 0 : index
    %c0_65 = arith.constant 0 : index
    %262 = vector.load %arg12[%c0_64, %c0_65] : memref<1x256xf32, #tpu.memory_space<vmem>>, vector<1x256xf32>
    %263 = vector.broadcast %262 : vector<1x256xf32> to vector<16x256xf32>
    %264 = arith.addf %261, %263 : vector<16x256xf32>
    %cst_66 = arith.constant 0.000000e+00 : f32
    %265 = vector.broadcast %cst_66 : f32 to vector<16x256xf32>
    %266 = arith.cmpf ogt, %264, %265 : vector<16x256xf32>
    %cst_67 = arith.constant 0.000000e+00 : f32
    %267 = vector.broadcast %cst_67 : f32 to vector<16x256xf32>
    %268 = arith.minimumf %264, %267 : vector<16x256xf32>
    %269 = math.exp %268 : vector<16x256xf32>
    %cst_68 = arith.constant 1.000000e+00 : f32
    %270 = vector.broadcast %cst_68 : f32 to vector<16x256xf32>
    %271 = arith.subf %269, %270 : vector<16x256xf32>
    %272 = arith.select %266, %264, %271 : vector<16x256xi1>, vector<16x256xf32>
    %c0_69 = arith.constant 0 : index
    %c0_70 = arith.constant 0 : index
    %273 = vector.load %arg13[%c0_69, %c0_70] : memref<256x128xf32, #tpu.memory_space<vmem>>, vector<256x128xf32>
    %cst_71 = arith.constant dense<0.000000e+00> : vector<16x128xf32>
    %274 = tpu.matmul %272, %273, %cst_71 {dimension_numbers = #tpu.dot_dimension_numbers<[1], [0], [0], [1], [0, 0, 1, 1], [], []>} : vector<16x256xf32>, vector<256x128xf32>, vector<16x128xf32> -> vector<16x128xf32>
    %c0_72 = arith.constant 0 : index
    %c0_73 = arith.constant 0 : index
    %275 = vector.load %arg14[%c0_72, %c0_73] : memref<1x128xf32, #tpu.memory_space<vmem>>, vector<1x128xf32>
    %276 = vector.broadcast %275 : vector<1x128xf32> to vector<16x128xf32>
    %277 = arith.addf %274, %276 : vector<16x128xf32>
    %cst_74 = arith.constant 0.000000e+00 : f32
    %278 = vector.broadcast %cst_74 : f32 to vector<16x128xf32>
    %279 = arith.cmpf ogt, %277, %278 : vector<16x128xf32>
    %cst_75 = arith.constant 0.000000e+00 : f32
    %280 = vector.broadcast %cst_75 : f32 to vector<16x128xf32>
    %281 = arith.minimumf %277, %280 : vector<16x128xf32>
    %282 = math.exp %281 : vector<16x128xf32>
    %cst_76 = arith.constant 1.000000e+00 : f32
    %283 = vector.broadcast %cst_76 : f32 to vector<16x128xf32>
    %284 = arith.subf %282, %283 : vector<16x128xf32>
    %285 = arith.select %279, %277, %284 : vector<16x128xi1>, vector<16x128xf32>
    %c0_77 = arith.constant 0 : index
    %c0_78 = arith.constant 0 : index
    %286 = vector.load %arg15[%c0_77, %c0_78] : memref<128x128xf32, #tpu.memory_space<vmem>>, vector<128x128xf32>
    %cst_79 = arith.constant dense<0.000000e+00> : vector<16x128xf32>
    %287 = tpu.matmul %285, %286, %cst_79 {dimension_numbers = #tpu.dot_dimension_numbers<[1], [0], [0], [1], [0, 0, 1, 1], [], []>} : vector<16x128xf32>, vector<128x128xf32>, vector<16x128xf32> -> vector<16x128xf32>
    %c0_80 = arith.constant 0 : index
    %c0_81 = arith.constant 0 : index
    %288 = vector.load %arg16[%c0_80, %c0_81] : memref<1x128xf32, #tpu.memory_space<vmem>>, vector<1x128xf32>
    %289 = vector.broadcast %288 : vector<1x128xf32> to vector<16x128xf32>
    %290 = arith.addf %287, %289 : vector<16x128xf32>
    %291 = math.tanh %290 : vector<16x128xf32>
    %c0_82 = arith.constant 0 : index
    %c0_83 = arith.constant 0 : index
    %292 = vector.load %arg17[%c0_82, %c0_83] : memref<1x128xf32, #tpu.memory_space<vmem>>, vector<1x128xf32>
    %293 = vector.broadcast %292 : vector<1x128xf32> to vector<16x128xf32>
    %294 = arith.mulf %291, %293 : vector<16x128xf32>
    %c0_84 = arith.constant 0 : index
    %c0_85 = arith.constant 0 : index
    %295 = vector.load %arg18[%c0_84, %c0_85] : memref<1x128xf32, #tpu.memory_space<vmem>>, vector<1x128xf32>
    %296 = vector.broadcast %295 : vector<1x128xf32> to vector<16x128xf32>
    %297 = arith.addf %294, %296 : vector<16x128xf32>
    %c0_86 = arith.constant 0 : index
    %c0_87 = arith.constant 0 : index
    %298 = vector.load %arg19[%c0_86, %c0_87] : memref<16x128xf32, #tpu.memory_space<vmem>>, vector<16x128xf32>
    tpu.vector_store %arg19[%c0_86, %c0_87], %297 {strides = array<i32>} : memref<16x128xf32, #tpu.memory_space<vmem>>, vector<16x128xf32>,
    return
  }
  func.func @transform_0(%arg0: i32) -> (i32, i32) {
    %c0_i32 = arith.constant 0 : i32
    %c0_i32_0 = arith.constant 0 : i32
    %c0_i32_1 = arith.constant 0 : i32
    return %c0_i32, %c0_i32_0 : i32, i32
  }
  func.func @transform_1(%arg0: i32) -> (i32, i32) {
    %c0_i32 = arith.constant 0 : i32
    %c0_i32_0 = arith.constant 0 : i32
    %c0_i32_1 = arith.constant 0 : i32
    return %c0_i32, %c0_i32_0 : i32, i32
  }
  func.func @transform_2(%arg0: i32) -> (i32, i32) {
    %c0_i32 = arith.constant 0 : i32
    %c0_i32_0 = arith.constant 0 : i32
    %c0_i32_1 = arith.constant 0 : i32
    return %c0_i32, %c0_i32_0 : i32, i32
  }
  func.func @transform_3(%arg0: i32) -> (i32, i32) {
    %c0_i32 = arith.constant 0 : i32
    %c0_i32_0 = arith.constant 0 : i32
    %c0_i32_1 = arith.constant 0 : i32
    return %c0_i32, %c0_i32_0 : i32, i32
  }
  func.func @transform_4(%arg0: i32) -> (i32, i32) {
    %c0_i32 = arith.constant 0 : i32
    %c0_i32_0 = arith.constant 0 : i32
    %c0_i32_1 = arith.constant 0 : i32
    return %c0_i32, %c0_i32_0 : i32, i32
  }
  func.func @transform_5(%arg0: i32) -> (i32, i32) {
    %c0_i32 = arith.constant 0 : i32
    %c0_i32_0 = arith.constant 0 : i32
    %c0_i32_1 = arith.constant 0 : i32
    return %c0_i32, %c0_i32_0 : i32, i32
  }
  func.func @transform_6(%arg0: i32) -> (i32, i32) {
    %c0_i32 = arith.constant 0 : i32
    %c0_i32_0 = arith.constant 0 : i32
    %c0_i32_1 = arith.constant 0 : i32
    return %c0_i32, %c0_i32_0 : i32, i32
  }
  func.func @transform_7(%arg0: i32) -> (i32, i32) {
    %c0_i32 = arith.constant 0 : i32
    %c0_i32_0 = arith.constant 0 : i32
    %c0_i32_1 = arith.constant 0 : i32
    return %c0_i32, %c0_i32_0 : i32, i32
  }
  func.func @transform_8(%arg0: i32) -> (i32, i32) {
    %c0_i32 = arith.constant 0 : i32
    %c0_i32_0 = arith.constant 0 : i32
    %c0_i32_1 = arith.constant 0 : i32
    return %c0_i32, %c0_i32_0 : i32, i32
  }
  func.func @transform_9(%arg0: i32) -> (i32, i32) {
    %c0_i32 = arith.constant 0 : i32
    %c0_i32_0 = arith.constant 0 : i32
    %c0_i32_1 = arith.constant 0 : i32
    return %c0_i32, %c0_i32_0 : i32, i32
  }
  func.func @transform_10(%arg0: i32) -> (i32, i32) {
    %c0_i32 = arith.constant 0 : i32
    %c0_i32_0 = arith.constant 0 : i32
    %c0_i32_1 = arith.constant 0 : i32
    return %c0_i32, %c0_i32_0 : i32, i32
  }
  func.func @transform_11(%arg0: i32) -> (i32, i32) {
    %c0_i32 = arith.constant 0 : i32
    %c0_i32_0 = arith.constant 0 : i32
    %c0_i32_1 = arith.constant 0 : i32
    return %c0_i32, %c0_i32_0 : i32, i32
  }
  func.func @transform_12(%arg0: i32) -> (i32, i32) {
    %c0_i32 = arith.constant 0 : i32
    %c0_i32_0 = arith.constant 0 : i32
    %c0_i32_1 = arith.constant 0 : i32
    return %c0_i32, %c0_i32_0 : i32, i32
  }
  func.func @transform_13(%arg0: i32) -> (i32, i32) {
    %c0_i32 = arith.constant 0 : i32
    %c0_i32_0 = arith.constant 0 : i32
    %c0_i32_1 = arith.constant 0 : i32
    return %c0_i32, %c0_i32_0 : i32, i32
  }
  func.func @transform_14(%arg0: i32) -> (i32, i32) {
    %c0_i32 = arith.constant 0 : i32
    %c0_i32_0 = arith.constant 0 : i32
    %c0_i32_1 = arith.constant 0 : i32
    return %c0_i32, %c0_i32_0 : i32, i32
  }
  func.func @transform_15(%arg0: i32) -> (i32, i32) {
    %c0_i32 = arith.constant 0 : i32
    %c0_i32_0 = arith.constant 0 : i32
    %c0_i32_1 = arith.constant 0 : i32
    return %c0_i32, %c0_i32_0 : i32, i32
  }
  func.func @transform_16(%arg0: i32) -> (i32, i32) {
    %c0_i32 = arith.constant 0 : i32
    %c0_i32_0 = arith.constant 0 : i32
    %c0_i32_1 = arith.constant 0 : i32
    return %c0_i32, %c0_i32_0 : i32, i32
  }
  func.func @transform_17(%arg0: i32) -> (i32, i32) {
    %c0_i32 = arith.constant 0 : i32
    %c0_i32_0 = arith.constant 0 : i32
    %c0_i32_1 = arith.constant 0 : i32
    return %c0_i32, %c0_i32_0 : i32, i32
  }
  func.func @transform_18(%arg0: i32) -> (i32, i32) {
    %c0_i32 = arith.constant 0 : i32
    %c0_i32_0 = arith.constant 0 : i32
    %c0_i32_1 = arith.constant 0 : i32
    return %c0_i32, %c0_i32_0 : i32, i32
  }
  func.func @transform_19(%arg0: i32) -> (i32, i32) {
    %c0_i32 = arith.constant 0 : i32
    %c0_i32_0 = arith.constant 0 : i32
    %c0_i32_1 = arith.constant 0 : i32
    return %c0_i32, %c0_i32_0 : i32, i32
  }
}

</mosaic_0001>

<llo_original>
// kernel: actor_forward.1
$region0: #{actor_forward.1}
  #allocation0 [shape = 'u32[]', space=smem, size = 0x4, offset = 0x4, fixed_abs, tag = 'smem constant byte address 0x4 - core index']
  #allocation1 [shape = 'u32[144,128]{1,0:T(1,128)}', space=vmem, size = 0x12000, scoped, tag = 'internal scratch']
  #allocation2 [shape = 'f32[16,256]{1,0:T(8,128)}', space=vmem, size = 0x4000, scoped, tag = 'scratch operand']
  %s0 = inlined_call_operand.vmem [shape: f32[16,45], index: 0, kind: input, shape index: {}]
  %s1 = inlined_call_operand.vmem [shape: f32[16,128], index: 1, kind: input, shape index: {}]
  %s2 = inlined_call_operand.vmem [shape: f32[2,256], index: 2, kind: input, shape index: {}]
  %s3 = inlined_call_operand.vmem [shape: f32[45,768], index: 3, kind: input, shape index: {}]
  %s4 = inlined_call_operand.hbm [shape: f32[128,768], index: 4, kind: input, shape index: {}]
  %s5 = inlined_call_operand.hbm [shape: f32[256,768], index: 5, kind: input, shape index: {}]
  %s6 = inlined_call_operand.vmem [shape: f32[1,768], index: 6, kind: input, shape index: {}]
  %s7 = inlined_call_operand.vmem [shape: f32[1,768], index: 7, kind: input, shape index: {}]
  %s8 = inlined_call_operand.hbm [shape: f32[256,512], index: 8, kind: input, shape index: {}]
  %s9 = inlined_call_operand.vmem [shape: f32[1,512], index: 9, kind: input, shape index: {}]
  %s10 = inlined_call_operand.hbm [shape: f32[512,256], index: 10, kind: input, shape index: {}]
  %s11 = inlined_call_operand.vmem [shape: f32[1,256], index: 11, kind: input, shape index: {}]
  %s12 = inlined_call_operand.hbm [shape: f32[256,128], index: 12, kind: input, shape index: {}]
  %s13 = inlined_call_operand.vmem [shape: f32[1,128], index: 13, kind: input, shape index: {}]
  %s14 = inlined_call_operand.vmem [shape: f32[128,128], index: 14, kind: input, shape index: {}]
  %s15 = inlined_call_operand.vmem [shape: f32[1,128], index: 15, kind: input, shape index: {}]
  %s16 = inlined_call_operand.vmem [shape: f32[1,128], index: 16, kind: input, shape index: {}]
  %s17 = inlined_call_operand.vmem [shape: f32[1,128], index: 17, kind: input, shape index: {}]
  %s18 = inlined_call_operand.vmem [shape: f32[16,128], index: 18, kind: output, shape index: {0}]
  %s19 = inlined_call_operand.hbm [shape: f32[2,256], index: 19, kind: output, shape index: {1}]
  %20 = xla_tuple %s18, %s19
  %s21 = sld [smem:[#allocation0]]
  $region110: #{actor_forward.1} parent=0
    _
  %s23 = ssub.s32 1, %s21
  %s24 = scalar_select 0, %s23, %s21
  $region1: #{actor_forward.1} parent=0
    #allocation3 [shape = 'u8[393216]{0}', space=vmem, size = 0x60000, scoped, tag = 'input window, operand 4, single buffered']
    #allocation4 [shape = 's32[1]{0}', space=sflag, size = 0x4, scoped, tag = 'scoped memory for actor_forward.1']
    #allocation5 [shape = 's32[1]{0}', space=sflag, size = 0x4, scoped, tag = 'scoped memory for actor_forward.1']
    #allocation6 [shape = 'u8[786432]{0}', space=vmem, size = 0xc0000, scoped, tag = 'input window, operand 5, single buffered']
    #allocation7 [shape = 's32[1]{0}', space=sflag, size = 0x4, scoped, tag = 'scoped memory for actor_forward.1']
    #allocation8 [shape = 'u8[524288]{0}', space=vmem, size = 0x80000, scoped, tag = 'input window, operand 8, single buffered']
    #allocation9 [shape = 'u8[524288]{0}', space=vmem, size = 0x80000, scoped, tag = 'input window, operand 10, single buffered']
    #allocation10 [shape = 's32[1]{0}', space=sflag, size = 0x4, scoped, tag = 'scoped memory for actor_forward.1']
    #allocation11 [shape = 'u8[131072]{0}', space=vmem, size = 0x20000, scoped, tag = 'input window, operand 12, single buffered']
    #allocation12 [shape = 'u8[2048]{0}', space=vmem, size = 0x800, scoped, tag = 'output window, operand 1, single buffered']
    %25 = vsyncpa [#allocation4], 0
    %26 = vsyncpa [#allocation7], 0
    %27 = vsyncpa [#allocation10], 0
    %28 = vsyncpa [#allocation5], 0
    // Predicated region
    $region2: #{actor_forward.1} parent=1 // pred_check
      _
    $region3: #{actor_forward.1} parent=1 // pred_check_branch
      %30 = sbr.rel (0) target = $region5
    $region4: #{actor_forward.1} parent=1 // pred_region
      _
    $region5: #{actor_forward.1} parent=1 // pred_fallthru
      _
    // Predicated region
    $region6: #{actor_forward.1} parent=1 // pred_check
      _
    $region7: #{actor_forward.1} parent=1 // pred_check_branch
      %32 = sbr.rel (0) target = $region9
    $region8: #{actor_forward.1} parent=1 // pred_region
      _
    $region9: #{actor_forward.1} parent=1 // pred_fallthru
      _
    // Predicated region
    $region10: #{actor_forward.1} parent=1 // pred_check
      _
    $region11: #{actor_forward.1} parent=1 // pred_check_branch
      %34 = sbr.rel (0) target = $region13
    $region12: #{actor_forward.1} parent=1 // pred_region
      _
    $region13: #{actor_forward.1} parent=1 // pred_fallthru
      _
    // Predicated region
    $region14: #{actor_forward.1} parent=1 // pred_check
      _
    $region15: #{actor_forward.1} parent=1 // pred_check_branch
      %36 = sbr.rel (0) target = $region17
    $region16: #{actor_forward.1} parent=1 // pred_region
      _
    $region17: #{actor_forward.1} parent=1 // pred_fallthru
      _
    // Predicated region
    $region18: #{actor_forward.1} parent=1 // pred_check
      _
    $region19: #{actor_forward.1} parent=1 // pred_check_branch
      %38 = sbr.rel (0) target = $region21
    $region20: #{actor_forward.1} parent=1 // pred_region
      %s40 = ssub.s32 12288, 12288
      %41 = vsyncadd [#allocation4], %s40
      %s42 = sshll.u32 [#allocation3], 4
      %s43 = int_to_ptr.vmem [resolvable:$true] %s42
      %48 = dma.hbm_to_vmem [thread:$0]  %s4, 12288, %s43, [#allocation4], 768, 768, 48
    $region21: #{actor_forward.1} parent=1 // pred_fallthru
      _
    // Predicated region
    $region22: #{actor_forward.1} parent=1 // pred_check
      _
    $region23: #{actor_forward.1} parent=1 // pred_check_branch
      %50 = sbr.rel (0) target = $region25
    $region24: #{actor_forward.1} parent=1 // pred_region
      %s52 = ssub.s32 24576, 24576
      %53 = vsyncadd [#allocation7], %s52
      %s54 = sshll.u32 [#allocation6], 4
      %s55 = int_to_ptr.vmem [resolvable:$true] %s54
      %60 = dma.hbm_to_vmem [thread:$0]  %s5, 24576, %s55, [#allocation7], 768, 768, 48
    $region25: #{actor_forward.1} parent=1 // pred_fallthru
      _
    // Predicated region
    $region26: #{actor_forward.1} parent=1 // pred_check
      _
    $region27: #{actor_forward.1} parent=1 // pred_check_branch
      %62 = sbr.rel (0) target = $region29
    $region28: #{actor_forward.1} parent=1 // pred_region
      _
    $region29: #{actor_forward.1} parent=1 // pred_fallthru
      _
    // Predicated region
    $region30: #{actor_forward.1} parent=1 // pred_check
      _
    $region31: #{actor_forward.1} parent=1 // pred_check_branch
      %64 = sbr.rel (0) target = $region33
    $region32: #{actor_forward.1} parent=1 // pred_region
      _
    $region33: #{actor_forward.1} parent=1 // pred_fallthru
      _
    // Predicated region
    $region34: #{actor_forward.1} parent=1 // pred_check
      _
    $region35: #{actor_forward.1} parent=1 // pred_check_branch
      %66 = sbr.rel (0) target = $region37
    $region36: #{actor_forward.1} parent=1 // pred_region
      %s68 = ssub.s32 16384, 16384
      %69 = vsyncadd [#allocation7], %s68
      %s70 = sshll.u32 [#allocation8], 4
      %s71 = int_to_ptr.vmem [resolvable:$true] %s70
      %76 = dma.hbm_to_vmem [thread:$0]  %s8, 16384, %s71, [#allocation7], 512, 512, 32
    $region37: #{actor_forward.1} parent=1 // pred_fallthru
      _
    // Predicated region
    $region38: #{actor_forward.1} parent=1 // pred_check
      _
    $region39: #{actor_forward.1} parent=1 // pred_check_branch
      %78 = sbr.rel (0) target = $region41
    $region40: #{actor_forward.1} parent=1 // pred_region
      _
    $region41: #{actor_forward.1} parent=1 // pred_fallthru
      _
    // Predicated region
    $region42: #{actor_forward.1} parent=1 // pred_check
      _
    $region43: #{actor_forward.1} parent=1 // pred_check_branch
      %80 = sbr.rel (0) target = $region45
    $region44: #{actor_forward.1} parent=1 // pred_region
      %s82 = ssub.s32 16384, 16384
      %83 = vsyncadd [#allocation10], %s82
      %s84 = sshll.u32 [#allocation9], 4
      %s85 = int_to_ptr.vmem [resolvable:$true] %s84
      %90 = dma.hbm_to_vmem [thread:$0]  %s10, 16384, %s85, [#allocation10], 256, 256, 16
    $region45: #{actor_forward.1} parent=1 // pred_fallthru
      _
    // Predicated region
    $region46: #{actor_forward.1} parent=1 // pred_check
      _
    $region47: #{actor_forward.1} parent=1 // pred_check_branch
      %92 = sbr.rel (0) target = $region49
    $region48: #{actor_forward.1} parent=1 // pred_region
      _
    $region49: #{actor_forward.1} parent=1 // pred_fallthru
      _
    // Predicated region
    $region50: #{actor_forward.1} parent=1 // pred_check
      _
    $region51: #{actor_forward.1} parent=1 // pred_check_branch
      %94 = sbr.rel (0) target = $region53
    $region52: #{actor_forward.1} parent=1 // pred_region
      %s96 = ssub.s32 4096, 4096
      %97 = vsyncadd [#allocation10], %s96
      %s98 = sshll.u32 [#allocation11], 4
      %s99 = int_to_ptr.vmem [resolvable:$true] %s98
      %104 = dma.hbm_to_vmem [thread:$0]  %s12, 4096, %s99, [#allocation10], 128, 128, 8
    $region53: #{actor_forward.1} parent=1 // pred_fallthru
      _
    // Predicated region
    $region54: #{actor_forward.1} parent=1 // pred_check
      _
    $region55: #{actor_forward.1} parent=1 // pred_check_branch
      %106 = sbr.rel (0) target = $region57
    $region56: #{actor_forward.1} parent=1 // pred_region
      _
    $region57: #{actor_forward.1} parent=1 // pred_fallthru
      _
    // Predicated region
    $region58: #{actor_forward.1} parent=1 // pred_check
      _
    $region59: #{actor_forward.1} parent=1 // pred_check_branch
      %108 = sbr.rel (0) target = $region61
    $region60: #{actor_forward.1} parent=1 // pred_region
      _
    $region61: #{actor_forward.1} parent=1 // pred_fallthru
      _
    // Predicated region
    $region62: #{actor_forward.1} parent=1 // pred_check
      _
    $region63: #{actor_forward.1} parent=1 // pred_check_branch
      %110 = sbr.rel (0) target = $region65
    $region64: #{actor_forward.1} parent=1 // pred_region
      _
    $region65: #{actor_forward.1} parent=1 // pred_fallthru
      _
    // Predicated region
    $region66: #{actor_forward.1} parent=1 // pred_check
      _
    $region67: #{actor_forward.1} parent=1 // pred_check_branch
      %112 = sbr.rel (0) target = $region69
    $region68: #{actor_forward.1} parent=1 // pred_region
      _
    $region69: #{actor_forward.1} parent=1 // pred_fallthru
      _
    // Predicated region
    $region70: #{actor_forward.1} parent=1 // pred_check
      _
    $region71: #{actor_forward.1} parent=1 // pred_check_branch
      %114 = sbr.rel (0) target = $region73
    $region72: #{actor_forward.1} parent=1 // pred_region
      _
    $region73: #{actor_forward.1} parent=1 // pred_fallthru
      _
    // Predicated region
    $region74: #{actor_forward.1} parent=1 // pred_check
      _
    $region75: #{actor_forward.1} parent=1 // pred_check_branch
      %116 = sbr.rel (0) target = $region77
    $region76: #{actor_forward.1} parent=1 // pred_region
      %117 = dma.done [#allocation4], 12288
    $region77: #{actor_forward.1} parent=1 // pred_fallthru
      _
    // Predicated region
    $region78: #{actor_forward.1} parent=1 // pred_check
      _
    $region79: #{actor_forward.1} parent=1 // pred_check_branch
      %119 = sbr.rel (0) target = $region81
    $region80: #{actor_forward.1} parent=1 // pred_region
      %120 = dma.done [#allocation7], 24576
    $region81: #{actor_forward.1} parent=1 // pred_fallthru
      _
    // Predicated region
    $region82: #{actor_forward.1} parent=1 // pred_check
      _
    $region83: #{actor_forward.1} parent=1 // pred_check_branch
      %122 = sbr.rel (0) target = $region85
    $region84: #{actor_forward.1} parent=1 // pred_region
      %123 = dma.done [#allocation7], 16384
    $region85: #{actor_forward.1} parent=1 // pred_fallthru
      _
    // Predicated region
    $region86: #{actor_forward.1} parent=1 // pred_check
      _
    $region87: #{actor_forward.1} parent=1 // pred_check_branch
      %125 = sbr.rel (0) target = $region89
    $region88: #{actor_forward.1} parent=1 // pred_region
      %126 = dma.done [#allocation10], 16384
    $region89: #{actor_forward.1} parent=1 // pred_fallthru
      _
    // Predicated region
    $region90: #{actor_forward.1} parent=1 // pred_check
      _
    $region91: #{actor_forward.1} parent=1 // pred_check_branch
      %128 = sbr.rel (0) target = $region93
    $region92: #{actor_forward.1} parent=1 // pred_region
      %129 = dma.done [#allocation10], 4096
    $region93: #{actor_forward.1} parent=1 // pred_fallthru
      _
    %v130 = vld [vmem:[%s0] sm:$0xff]
    %v131 = vld [vmem:[%s0 + $0x8] sm:$0xff]
    %v132 = vld [vmem:[%s3] sm:$0xff]
    %v133 = vld [vmem:[%s3 + $0x8] sm:$0xff]
    %v134 = vld [vmem:[%s3 + $0x10] sm:$0xff]
    %v135 = vld [vmem:[%s3 + $0x18] sm:$0xff]
    %v136 = vld [vmem:[%s3 + $0x20] sm:$0xff]
    %v137 = vld [vmem:[%s3 + $0x28] sm:$0xff]
    %v138 = vld [vmem:[%s3 + $0x30] sm:$0xff]
    %v139 = vld [vmem:[%s3 + $0x38] sm:$0xff]
    %v140 = vld [vmem:[%s3 + $0x40] sm:$0xff]
    %v141 = vld [vmem:[%s3 + $0x48] sm:$0xff]
    %v142 = vld [vmem:[%s3 + $0x50] sm:$0xff]
    %v143 = vld [vmem:[%s3 + $0x58] sm:$0xff]
    %v144 = vld [vmem:[%s3 + $0x60] sm:$0xff]
    %v145 = vld [vmem:[%s3 + $0x68] sm:$0xff]
    %v146 = vld [vmem:[%s3 + $0x70] sm:$0xff]
    %v147 = vld [vmem:[%s3 + $0x78] sm:$0xff]
    %v148 = vld [vmem:[%s3 + $0x80] sm:$0xff]
    %v149 = vld [vmem:[%s3 + $0x88] sm:$0xff]
    %v150 = vld [vmem:[%s3 + $0x90] sm:$0xff]
    %v151 = vld [vmem:[%s3 + $0x98] sm:$0xff]
    %v152 = vld [vmem:[%s3 + $0xa0] sm:$0xff]
    %v153 = vld [vmem:[%s3 + $0xa8] sm:$0xff]
    %v154 = vld [vmem:[%s3 + $0xb0] sm:$0xff]
    %v155 = vld [vmem:[%s3 + $0xb8] sm:$0xff]
    %v156 = vld [vmem:[%s3 + $0xc0] sm:$0xff]
    %v157 = vld [vmem:[%s3 + $0xc8] sm:$0xff]
    %v158 = vld [vmem:[%s3 + $0xd0] sm:$0xff]
    %v159 = vld [vmem:[%s3 + $0xd8] sm:$0xff]
    %v160 = vld [vmem:[%s3 + $0xe0] sm:$0xff]
    %v161 = vld [vmem:[%s3 + $0xe8] sm:$0xff]
    %v162 = vld [vmem:[%s3 + $0xf0] sm:$0x1f]
    %v163 = vld [vmem:[%s3 + $0xf8] sm:$0x1f]
    %v164 = vld [vmem:[%s3 + $0x100] sm:$0x1f]
    %v165 = vld [vmem:[%s3 + $0x108] sm:$0x1f]
    %v166 = vld [vmem:[%s3 + $0x110] sm:$0x1f]
    %v167 = vld [vmem:[%s3 + $0x118] sm:$0x1f]
    %v168 = vld [vmem:[%s1] sm:$0xff]
    %v169 = vld [vmem:[%s1 + $0x8] sm:$0xff]
    %v170 = vld [vmem:[#allocation3] sm:$0xff]
    %v171 = vld [vmem:[#allocation3 + $0x8] sm:$0xff]
    %v172 = vld [vmem:[#allocation3 + $0x10] sm:$0xff]
    %v173 = vld [vmem:[#allocation3 + $0x18] sm:$0xff]
    %v174 = vld [vmem:[#allocation3 + $0x20] sm:$0xff]
    %v175 = vld [vmem:[#allocation3 + $0x28] sm:$0xff]
    %v176 = vld [vmem:[#allocation3 + $0x30] sm:$0xff]
    %v177 = vld [vmem:[#allocation3 + $0x38] sm:$0xff]
    %v178 = vld [vmem:[#allocation3 + $0x40] sm:$0xff]
    %v179 = vld [vmem:[#allocation3 + $0x48] sm:$0xff]
    %v180 = vld [vmem:[#allocation3 + $0x50] sm:$0xff]
    %v181 = vld [vmem:[#allocation3 + $0x58] sm:$0xff]
    %v182 = vld [vmem:[#allocation3 + $0x60] sm:$0xff]
    %v183 = vld [vmem:[#allocation3 + $0x68] sm:$0xff]
    %v184 = vld [vmem:[#allocation3 + $0x70] sm:$0xff]
    %v185 = vld [vmem:[#allocation3 + $0x78] sm:$0xff]
    %v186 = vld [vmem:[#allocation3 + $0x80] sm:$0xff]
    %v187 = vld [vmem:[#allocation3 + $0x88] sm:$0xff]
    %v188 = vld [vmem:[#allocation3 + $0x90] sm:$0xff]
    %v189 = vld [vmem:[#allocation3 + $0x98] sm:$0xff]
    %v190 = vld [vmem:[#allocation3 + $0xa0] sm:$0xff]
    %v191 = vld [vmem:[#allocation3 + $0xa8] sm:$0xff]
    %v192 = vld [vmem:[#allocation3 + $0xb0] sm:$0xff]
    %v193 = vld [vmem:[#allocation3 + $0xb8] sm:$0xff]
    %v194 = vld [vmem:[#allocation3 + $0xc0] sm:$0xff]
    %v195 = vld [vmem:[#allocation3 + $0xc8] sm:$0xff]
    %v196 = vld [vmem:[#allocation3 + $0xd0] sm:$0xff]
    %v197 = vld [vmem:[#allocation3 + $0xd8] sm:$0xff]
    %v198 = vld [vmem:[#allocation3 + $0xe0] sm:$0xff]
    %v199 = vld [vmem:[#allocation3 + $0xe8] sm:$0xff]
    %v200 = vld [vmem:[#allocation3 + $0xf0] sm:$0xff]
    %v201 = vld [vmem:[#allocation3 + $0xf8] sm:$0xff]
    %v202 = vld [vmem:[#allocation3 + $0x100] sm:$0xff]
    %v203 = vld [vmem:[#allocation3 + $0x108] sm:$0xff]
    %v204 = vld [vmem:[#allocation3 + $0x110] sm:$0xff]
    %v205 = vld [vmem:[#allocation3 + $0x118] sm:$0xff]
    %v206 = vld [vmem:[#allocation3 + $0x120] sm:$0xff]
    %v207 = vld [vmem:[#allocation3 + $0x128] sm:$0xff]
    %v208 = vld [vmem:[#allocation3 + $0x130] sm:$0xff]
    %v209 = vld [vmem:[#allocation3 + $0x138] sm:$0xff]
    %v210 = vld [vmem:[#allocation3 + $0x140] sm:$0xff]
    %v211 = vld [vmem:[#allocation3 + $0x148] sm:$0xff]
    %v212 = vld [vmem:[#allocation3 + $0x150] sm:$0xff]
    %v213 = vld [vmem:[#allocation3 + $0x158] sm:$0xff]
    %v214 = vld [vmem:[#allocation3 + $0x160] sm:$0xff]
    %v215 = vld [vmem:[#allocation3 + $0x168] sm:$0xff]
    %v216 = vld [vmem:[#allocation3 + $0x170] sm:$0xff]
    %v217 = vld [vmem:[#allocation3 + $0x178] sm:$0xff]
    %v218 = vld [vmem:[#allocation3 + $0x180] sm:$0xff]
    %v219 = vld [vmem:[#allocation3 + $0x188] sm:$0xff]
    %v220 = vld [vmem:[#allocation3 + $0x190] sm:$0xff]
    %v221 = vld [vmem:[#allocation3 + $0x198] sm:$0xff]
    %v222 = vld [vmem:[#allocation3 + $0x1a0] sm:$0xff]
    %v223 = vld [vmem:[#allocation3 + $0x1a8] sm:$0xff]
    %v224 = vld [vmem:[#allocation3 + $0x1b0] sm:$0xff]
    %v225 = vld [vmem:[#allocation3 + $0x1b8] sm:$0xff]
    %v226 = vld [vmem:[#allocation3 + $0x1c0] sm:$0xff]
    %v227 = vld [vmem:[#allocation3 + $0x1c8] sm:$0xff]
    %v228 = vld [vmem:[#allocation3 + $0x1d0] sm:$0xff]
    %v229 = vld [vmem:[#allocation3 + $0x1d8] sm:$0xff]
    %v230 = vld [vmem:[#allocation3 + $0x1e0] sm:$0xff]
    %v231 = vld [vmem:[#allocation3 + $0x1e8] sm:$0xff]
    %v232 = vld [vmem:[#allocation3 + $0x1f0] sm:$0xff]
    %v233 = vld [vmem:[#allocation3 + $0x1f8] sm:$0xff]
    %v234 = vld [vmem:[#allocation3 + $0x200] sm:$0xff]
    %v235 = vld [vmem:[#allocation3 + $0x208] sm:$0xff]
    %v236 = vld [vmem:[#allocation3 + $0x210] sm:$0xff]
    %v237 = vld [vmem:[#allocation3 + $0x218] sm:$0xff]
    %v238 = vld [vmem:[#allocation3 + $0x220] sm:$0xff]
    %v239 = vld [vmem:[#allocation3 + $0x228] sm:$0xff]
    %v240 = vld [vmem:[#allocation3 + $0x230] sm:$0xff]
    %v241 = vld [vmem:[#allocation3 + $0x238] sm:$0xff]
    %v242 = vld [vmem:[#allocation3 + $0x240] sm:$0xff]
    %v243 = vld [vmem:[#allocation3 + $0x248] sm:$0xff]
    %v244 = vld [vmem:[#allocation3 + $0x250] sm:$0xff]
    %v245 = vld [vmem:[#allocation3 + $0x258] sm:$0xff]
    %v246 = vld [vmem:[#allocation3 + $0x260] sm:$0xff]
    %v247 = vld [vmem:[#allocation3 + $0x268] sm:$0xff]
    %v248 = vld [vmem:[#allocation3 + $0x270] sm:$0xff]
    %v249 = vld [vmem:[#allocation3 + $0x278] sm:$0xff]
    %v250 = vld [vmem:[#allocation3 + $0x280] sm:$0xff]
    %v251 = vld [vmem:[#allocation3 + $0x288] sm:$0xff]
    %v252 = vld [vmem:[#allocation3 + $0x290] sm:$0xff]
    %v253 = vld [vmem:[#allocation3 + $0x298] sm:$0xff]
    %v254 = vld [vmem:[#allocation3 + $0x2a0] sm:$0xff]
    %v255 = vld [vmem:[#allocation3 + $0x2a8] sm:$0xff]
    %v256 = vld [vmem:[#allocation3 + $0x2b0] sm:$0xff]
    %v257 = vld [vmem:[#allocation3 + $0x2b8] sm:$0xff]
    %v258 = vld [vmem:[#allocation3 + $0x2c0] sm:$0xff]
    %v259 = vld [vmem:[#allocation3 + $0x2c8] sm:$0xff]
    %v260 = vld [vmem:[#allocation3 + $0x2d0] sm:$0xff]
    %v261 = vld [vmem:[#allocation3 + $0x2d8] sm:$0xff]
    %v262 = vld [vmem:[#allocation3 + $0x2e0] sm:$0xff]
    %v263 = vld [vmem:[#allocation3 + $0x2e8] sm:$0xff]
    %v264 = vld [vmem:[#allocation3 + $0x2f0] sm:$0xff]
    %v265 = vld [vmem:[#allocation3 + $0x2f8] sm:$0xff]
    %266 = vmatprep.subr.mxu0 %v171
    %267 = vmatpush1.msra.mxu0 %v170
    %268 = vmatprep.subr.mxu0 %v177
    %269 = vmatpush1.msra.mxu0 %v176
    %270 = vmatprep.subr.mxu0 %v183
    %271 = vmatpush1.msra.mxu0 %v182
    %272 = vmatprep.subr.mxu0 %v189
    %273 = vmatpush1.msra.mxu0 %v188
    %274 = vmatprep.subr.mxu0 %v195
    %275 = vmatpush1.msra.mxu0 %v194
    %276 = vmatprep.subr.mxu0 %v201
    %277 = vmatpush1.msra.mxu0 %v200
    %278 = vmatprep.subr.mxu0 %v207
    %279 = vmatpush1.msra.mxu0 %v206
    %280 = vmatprep.subr.mxu0 %v213
    %281 = vmatpush1.msra.mxu0 %v212
    %282 = vmatprep.subr.mxu0 %v219
    %283 = vmatpush1.msra.mxu0 %v218
    %284 = vmatprep.subr.mxu0 %v225
    %285 = vmatpush1.msra.mxu0 %v224
    %286 = vmatprep.subr.mxu0 %v231
    %287 = vmatpush1.msra.mxu0 %v230
    %288 = vmatprep.subr.mxu0 %v237
    %289 = vmatpush1.msra.mxu0 %v236
    %290 = vmatprep.subr.mxu0 %v243
    %291 = vmatpush1.msra.mxu0 %v242
    %292 = vmatprep.subr.mxu0 %v249
    %293 = vmatpush1.msra.mxu0 %v248
    %294 = vmatprep.subr.mxu0 %v255
    %295 = vmatpush1.msra.mxu0 %v254
    %296 = vmatprep.subr.mxu0 %v261
    %297 = vmatpush1.msra.mxu0 %v260
    %298 = vmatprep.subr.mxu0 0.0
    %299 = vmatpush1.msra.mxu0 0.0
    %300 = vmatprep.subr.mxu0 0.0
    %301 = vmatpush1.msra.mxu0 0.0
    %302 = vmatprep.subr.mxu0 0.0
    %303 = vmatpush1.msra.mxu0 0.0
    %304 = vmatprep.subr.mxu0 0.0
    %305 = vmatpush1.msra.mxu0 0.0
    %306 = vmatprep.subr.mxu0 0.0
    %307 = vmatpush1.msra.mxu0 0.0
    %308 = vmatprep.subr.mxu0 0.0
    %309 = vmatpush1.msra.mxu0 0.0
    %310 = vmatprep.subr.mxu0 0.0
    %311 = vmatpush1.msra.mxu0 0.0
    %312 = vmatprep.subr.mxu0 0.0
    %313 = vmatpush1.msra.mxu0 0.0
    %314 = vmatprep.subr.mxu0 0.0
    %315 = vmatpush1.msra.mxu0 0.0
    %316 = vmatprep.subr.mxu0 0.0
    %317 = vmatpush1.msra.mxu0 0.0
    %318 = vmatprep.subr.mxu0 0.0
    %319 = vmatpush1.msra.mxu0 0.0
    %320 = vmatprep.subr.mxu0 0.0
    %321 = vmatpush1.msra.mxu0 0.0
    %322 = vmatprep.subr.mxu0 0.0
    %323 = vmatpush1.msra.mxu0 0.0
    %324 = vmatprep.subr.mxu0 0.0
    %325 = vmatpush1.msra.mxu0 0.0
    %326 = vmatprep.subr.mxu0 0.0
    %327 = vmatpush1.msra.mxu0 0.0
    %328 = vmatprep.subr.mxu0 0.0
    %329 = vmatpush1.msra.mxu0 0.0
    %330 = vmatprep.mubr.f32.mxu0 0.0
    %331 = vmatmul.mubr.f32.gmra.mrb[0].mxu0 %v168
    %v332 = vpop.f32.mrb[0].mxu0
    %v333 = vadd.f32 0.0, %v332
    %v334 = vpop.f32.mrb[0].mxu0
    %v335 = vadd.f32 0.0, %v334
    %336 = vmatprep.mubr.f32.mxu0 0.0
    %337 = vmatmul.mubr.f32.gmra.mrb[0].mxu0 %v169
    %v338 = vpop.f32.mrb[0].mxu0
    %v339 = vadd.f32 0.0, %v338
    %v340 = vpop.f32.mrb[0].mxu0
    %v341 = vadd.f32 0.0, %v340
    %342 = vdwg.mxu0
    %343 = vmatprep.subr.mxu0 %v173
    %344 = vmatpush1.msra.mxu0 %v172
    %345 = vmatprep.subr.mxu0 %v179
    %346 = vmatpush1.msra.mxu0 %v178
    %347 = vmatprep.subr.mxu0 %v185
    %348 = vmatpush1.msra.mxu0 %v184
    %349 = vmatprep.subr.mxu0 %v191
    %350 = vmatpush1.msra.mxu0 %v190
    %351 = vmatprep.subr.mxu0 %v197
    %352 = vmatpush1.msra.mxu0 %v196
    %353 = vmatprep.subr.mxu0 %v203
    %354 = vmatpush1.msra.mxu0 %v202
    %355 = vmatprep.subr.mxu0 %v209
    %356 = vmatpush1.msra.mxu0 %v208
    %357 = vmatprep.subr.mxu0 %v215
    %358 = vmatpush1.msra.mxu0 %v214
    %359 = vmatprep.subr.mxu0 %v221
    %360 = vmatpush1.msra.mxu0 %v220
    %361 = vmatprep.subr.mxu0 %v227
    %362 = vmatpush1.msra.mxu0 %v226
    %363 = vmatprep.subr.mxu0 %v233
    %364 = vmatpush1.msra.mxu0 %v232
    %365 = vmatprep.subr.mxu0 %v239
    %366 = vmatpush1.msra.mxu0 %v238
    %367 = vmatprep.subr.mxu0 %v245
    %368 = vmatpush1.msra.mxu0 %v244
    %369 = vmatprep.subr.mxu0 %v251
    %370 = vmatpush1.msra.mxu0 %v250
    %371 = vmatprep.subr.mxu0 %v257
    %372 = vmatpush1.msra.mxu0 %v256
    %373 = vmatprep.subr.mxu0 %v263
    %374 = vmatpush1.msra.mxu0 %v262
    %375 = vmatprep.subr.mxu0 0.0
    %376 = vmatpush1.msra.mxu0 0.0
    %377 = vmatprep.subr.mxu0 0.0
    %378 = vmatpush1.msra.mxu0 0.0
    %379 = vmatprep.subr.mxu0 0.0
    %380 = vmatpush1.msra.mxu0 0.0
    %381 = vmatprep.subr.mxu0 0.0
    %382 = vmatpush1.msra.mxu0 0.0
    %383 = vmatprep.subr.mxu0 0.0
    %384 = vmatpush1.msra.mxu0 0.0
    %385 = vmatprep.subr.mxu0 0.0
    %386 = vmatpush1.msra.mxu0 0.0
    %387 = vmatprep.subr.mxu0 0.0
    %388 = vmatpush1.msra.mxu0 0.0
    %389 = vmatprep.subr.mxu0 0.0
    %390 = vmatpush1.msra.mxu0 0.0
    %391 = vmatprep.subr.mxu0 0.0
    %392 = vmatpush1.msra.mxu0 0.0
    %393 = vmatprep.subr.mxu0 0.0
    %394 = vmatpush1.msra.mxu0 0.0
    %395 = vmatprep.subr.mxu0 0.0
    %396 = vmatpush1.msra.mxu0 0.0
    %397 = vmatprep.subr.mxu0 0.0
    %398 = vmatpush1.msra.mxu0 0.0
    %399 = vmatprep.subr.mxu0 0.0
    %400 = vmatpush1.msra.mxu0 0.0
    %401 = vmatprep.subr.mxu0 0.0
    %402 = vmatpush1.msra.mxu0 0.0
    %403 = vmatprep.subr.mxu0 0.0
    %404 = vmatpush1.msra.mxu0 0.0
    %405 = vmatprep.subr.mxu0 0.0
    %406 = vmatpush1.msra.mxu0 0.0
    %407 = vmatprep.mubr.f32.mxu0 0.0
    %408 = vmatmul.mubr.f32.gmra.mrb[0].mxu0 %v168
    %v409 = vpop.f32.mrb[0].mxu0
    %v410 = vadd.f32 0.0, %v409
    %v411 = vpop.f32.mrb[0].mxu0
    %v412 = vadd.f32 0.0, %v411
    %413 = vmatprep.mubr.f32.mxu0 0.0
    %414 = vmatmul.mubr.f32.gmra.mrb[0].mxu0 %v169
    %v415 = vpop.f32.mrb[0].mxu0
    %v416 = vadd.f32 0.0, %v415
    %v417 = vpop.f32.mrb[0].mxu0
    %v418 = vadd.f32 0.0, %v417
    %419 = vdwg.mxu0
    %420 = vmatprep.subr.mxu0 %v175
    %421 = vmatpush1.msra.mxu0 %v174
    %422 = vmatprep.subr.mxu0 %v181
    %423 = vmatpush1.msra.mxu0 %v180
    %424 = vmatprep.subr.mxu0 %v187
    %425 = vmatpush1.msra.mxu0 %v186
    %426 = vmatprep.subr.mxu0 %v193
    %427 = vmatpush1.msra.mxu0 %v192
    %428 = vmatprep.subr.mxu0 %v199
    %429 = vmatpush1.msra.mxu0 %v198
    %430 = vmatprep.subr.mxu0 %v205
    %431 = vmatpush1.msra.mxu0 %v204
    %432 = vmatprep.subr.mxu0 %v211
    %433 = vmatpush1.msra.mxu0 %v210
    %434 = vmatprep.subr.mxu0 %v217
    %435 = vmatpush1.msra.mxu0 %v216
    %436 = vmatprep.subr.mxu0 %v223
    %437 = vmatpush1.msra.mxu0 %v222
    %438 = vmatprep.subr.mxu0 %v229
    %439 = vmatpush1.msra.mxu0 %v228
    %440 = vmatprep.subr.mxu0 %v235
    %441 = vmatpush1.msra.mxu0 %v234
    %442 = vmatprep.subr.mxu0 %v241
    %443 = vmatpush1.msra.mxu0 %v240
    %444 = vmatprep.subr.mxu0 %v247
    %445 = vmatpush1.msra.mxu0 %v246
    %446 = vmatprep.subr.mxu0 %v253
    %447 = vmatpush1.msra.mxu0 %v252
    %448 = vmatprep.subr.mxu0 %v259
    %449 = vmatpush1.msra.mxu0 %v258
    %450 = vmatprep.subr.mxu0 %v265
    %451 = vmatpush1.msra.mxu0 %v264
    %452 = vmatprep.subr.mxu0 0.0
    %453 = vmatpush1.msra.mxu0 0.0
    %454 = vmatprep.subr.mxu0 0.0
    %455 = vmatpush1.msra.mxu0 0.0
    %456 = vmatprep.subr.mxu0 0.0
    %457 = vmatpush1.msra.mxu0 0.0
    %458 = vmatprep.subr.mxu0 0.0
    %459 = vmatpush1.msra.mxu0 0.0
    %460 = vmatprep.subr.mxu0 0.0
    %461 = vmatpush1.msra.mxu0 0.0
    %462 = vmatprep.subr.mxu0 0.0
    %463 = vmatpush1.msra.mxu0 0.0
    %464 = vmatprep.subr.mxu0 0.0
    %465 = vmatpush1.msra.mxu0 0.0
    %466 = vmatprep.subr.mxu0 0.0
    %467 = vmatpush1.msra.mxu0 0.0
    %468 = vmatprep.subr.mxu0 0.0
    %469 = vmatpush1.msra.mxu0 0.0
    %470 = vmatprep.subr.mxu0 0.0
    %471 = vmatpush1.msra.mxu0 0.0
    %472 = vmatprep.subr.mxu0 0.0
    %473 = vmatpush1.msra.mxu0 0.0
    %474 = vmatprep.subr.mxu0 0.0
    %475 = vmatpush1.msra.mxu0 0.0
    %476 = vmatprep.subr.mxu0 0.0
    %477 = vmatpush1.msra.mxu0 0.0
    %478 = vmatprep.subr.mxu0 0.0
    %479 = vmatpush1.msra.mxu0 0.0
    %480 = vmatprep.subr.mxu0 0.0
    %481 = vmatpush1.msra.mxu0 0.0
    %482 = vmatprep.subr.mxu0 0.0
    %483 = vmatpush1.msra.mxu0 0.0
    %484 = vmatprep.mubr.f32.mxu0 0.0
    %485 = vmatmul.mubr.f32.gmra.mrb[0].mxu0 %v168
    %v486 = vpop.f32.mrb[0].mxu0
    %v487 = vadd.f32 0.0, %v486
    %v488 = vpop.f32.mrb[0].mxu0
    %v489 = vadd.f32 0.0, %v488
    %490 = vmatprep.mubr.f32.mxu0 0.0
    %491 = vmatmul.mubr.f32.gmra.mrb[0].mxu0 %v169
    %v492 = vpop.f32.mrb[0].mxu0
    %v493 = vadd.f32 0.0, %v492
    %v494 = vpop.f32.mrb[0].mxu0
    %v495 = vadd.f32 0.0, %v494
    %496 = vdwg.mxu0
    %vm497 = vcmask 367616
    %v499 = vsel %vm497, %v130, 0
    %v502 = vsel %vm497, %v131, 0
    %vm504 = vcmask 1044480
    %v506 = vsel %vm504, %v162, 0
    %v509 = vsel %vm504, %v163, 0
    %v512 = vsel %vm504, %v164, 0
    %v515 = vsel %vm504, %v165, 0
    %v518 = vsel %vm504, %v166, 0
    %v521 = vsel %vm504, %v167, 0
    %523 = vmatprep.subr.mxu0 %v133
    %524 = vmatpush1.msra.mxu0 %v132
    %525 = vmatprep.subr.mxu0 %v139
    %526 = vmatpush1.msra.mxu0 %v138
    %527 = vmatprep.subr.mxu0 %v145
    %528 = vmatpush1.msra.mxu0 %v144
    %529 = vmatprep.subr.mxu0 %v151
    %530 = vmatpush1.msra.mxu0 %v150
    %531 = vmatprep.subr.mxu0 %v157
    %532 = vmatpush1.msra.mxu0 %v156
    %533 = vmatprep.subr.mxu0 %v509
    %534 = vmatpush1.msra.mxu0 %v506
    %535 = vmatprep.subr.mxu0 0.0
    %536 = vmatpush1.msra.mxu0 0.0
    %537 = vmatprep.subr.mxu0 0.0
    %538 = vmatpush1.msra.mxu0 0.0
    %539 = vmatprep.subr.mxu0 0.0
    %540 = vmatpush1.msra.mxu0 0.0
    %541 = vmatprep.subr.mxu0 0.0
    %542 = vmatpush1.msra.mxu0 0.0
    %543 = vmatprep.subr.mxu0 0.0
    %544 = vmatpush1.msra.mxu0 0.0
    %545 = vmatprep.subr.mxu0 0.0
    %546 = vmatpush1.msra.mxu0 0.0
    %547 = vmatprep.subr.mxu0 0.0
    %548 = vmatpush1.msra.mxu0 0.0
    %549 = vmatprep.subr.mxu0 0.0
    %550 = vmatpush1.msra.mxu0 0.0
    %551 = vmatprep.subr.mxu0 0.0
    %552 = vmatpush1.msra.mxu0 0.0
    %553 = vmatprep.subr.mxu0 0.0
    %554 = vmatpush1.msra.mxu0 0.0
    %555 = vmatprep.subr.mxu0 0.0
    %556 = vmatpush1.msra.mxu0 0.0
    %557 = vmatprep.subr.mxu0 0.0
    %558 = vmatpush1.msra.mxu0 0.0
    %559 = vmatprep.subr.mxu0 0.0
    %560 = vmatpush1.msra.mxu0 0.0
    %561 = vmatprep.subr.mxu0 0.0
    %562 = vmatpush1.msra.mxu0 0.0
    %563 = vmatprep.subr.mxu0 0.0
    %564 = vmatpush1.msra.mxu0 0.0
    %565 = vmatprep.subr.mxu0 0.0
    %566 = vmatpush1.msra.mxu0 0.0
    %567 = vmatprep.subr.mxu0 0.0
    %568 = vmatpush1.msra.mxu0 0.0
    %569 = vmatprep.subr.mxu0 0.0
    %570 = vmatpush1.msra.mxu0 0.0
    %571 = vmatprep.subr.mxu0 0.0
    %572 = vmatpush1.msra.mxu0 0.0
    %573 = vmatprep.subr.mxu0 0.0
    %574 = vmatpush1.msra.mxu0 0.0
    %575 = vmatprep.subr.mxu0 0.0
    %576 = vmatpush1.msra.mxu0 0.0
    %577 = vmatprep.subr.mxu0 0.0
    %578 = vmatpush1.msra.mxu0 0.0
    %579 = vmatprep.subr.mxu0 0.0
    %580 = vmatpush1.msra.mxu0 0.0
    %581 = vmatprep.subr.mxu0 0.0
    %582 = vmatpush1.msra.mxu0 0.0
    %583 = vmatprep.subr.mxu0 0.0
    %584 = vmatpush1.msra.mxu0 0.0
    %585 = vmatprep.subr.mxu0 0.0
    %586 = vmatpush1.msra.mxu0 0.0
    %587 = vmatprep.mubr.f32.mxu0 0.0
    %588 = vmatmul.mubr.f32.gmra.mrb[0].mxu0 %v499
    %v589 = vpop.f32.mrb[0].mxu0
    %v590 = vadd.f32 %v333, %v589
    %v591 = vpop.f32.mrb[0].mxu0
    %v592 = vadd.f32 %v335, %v591
    %593 = vmatprep.mubr.f32.mxu0 0.0
    %594 = vmatmul.mubr.f32.gmra.mrb[0].mxu0 %v502
    %v595 = vpop.f32.mrb[0].mxu0
    %v596 = vadd.f32 %v339, %v595
    %v597 = vpop.f32.mrb[0].mxu0
    %v598 = vadd.f32 %v341, %v597
    %599 = vdwg.mxu0
    %600 = vmatprep.subr.mxu0 %v135
    %601 = vmatpush1.msra.mxu0 %v134
    %602 = vmatprep.subr.mxu0 %v141
    %603 = vmatpush1.msra.mxu0 %v140
    %604 = vmatprep.subr.mxu0 %v147
    %605 = vmatpush1.msra.mxu0 %v146
    %606 = vmatprep.subr.mxu0 %v153
    %607 = vmatpush1.msra.mxu0 %v152
    %608 = vmatprep.subr.mxu0 %v159
    %609 = vmatpush1.msra.mxu0 %v158
    %610 = vmatprep.subr.mxu0 %v515
    %611 = vmatpush1.msra.mxu0 %v512
    %612 = vmatprep.subr.mxu0 0.0
    %613 = vmatpush1.msra.mxu0 0.0
    %614 = vmatprep.subr.mxu0 0.0
    %615 = vmatpush1.msra.mxu0 0.0
    %616 = vmatprep.subr.mxu0 0.0
    %617 = vmatpush1.msra.mxu0 0.0
    %618 = vmatprep.subr.mxu0 0.0
    %619 = vmatpush1.msra.mxu0 0.0
    %620 = vmatprep.subr.mxu0 0.0
    %621 = vmatpush1.msra.mxu0 0.0
    %622 = vmatprep.subr.mxu0 0.0
    %623 = vmatpush1.msra.mxu0 0.0
    %624 = vmatprep.subr.mxu0 0.0
    %625 = vmatpush1.msra.mxu0 0.0
    %626 = vmatprep.subr.mxu0 0.0
    %627 = vmatpush1.msra.mxu0 0.0
    %628 = vmatprep.subr.mxu0 0.0
    %629 = vmatpush1.msra.mxu0 0.0
    %630 = vmatprep.subr.mxu0 0.0
    %631 = vmatpush1.msra.mxu0 0.0
    %632 = vmatprep.subr.mxu0 0.0
    %633 = vmatpush1.msra.mxu0 0.0
    %634 = vmatprep.subr.mxu0 0.0
    %635 = vmatpush1.msra.mxu0 0.0
    %636 = vmatprep.subr.mxu0 0.0
    %637 = vmatpush1.msra.mxu0 0.0
    %638 = vmatprep.subr.mxu0 0.0
    %639 = vmatpush1.msra.mxu0 0.0
    %640 = vmatprep.subr.mxu0 0.0
    %641 = vmatpush1.msra.mxu0 0.0
    %642 = vmatprep.subr.mxu0 0.0
    %643 = vmatpush1.msra.mxu0 0.0
    %644 = vmatprep.subr.mxu0 0.0
    %645 = vmatpush1.msra.mxu0 0.0
    %646 = vmatprep.subr.mxu0 0.0
    %647 = vmatpush1.msra.mxu0 0.0
    %648 = vmatprep.subr.mxu0 0.0
    %649 = vmatpush1.msra.mxu0 0.0
    %650 = vmatprep.subr.mxu0 0.0
    %651 = vmatpush1.msra.mxu0 0.0
    %652 = vmatprep.subr.mxu0 0.0
    %653 = vmatpush1.msra.mxu0 0.0
    %654 = vmatprep.subr.mxu0 0.0
    %655 = vmatpush1.msra.mxu0 0.0
    %656 = vmatprep.subr.mxu0 0.0
    %657 = vmatpush1.msra.mxu0 0.0
    %658 = vmatprep.subr.mxu0 0.0
    %659 = vmatpush1.msra.mxu0 0.0
    %660 = vmatprep.subr.mxu0 0.0
    %661 = vmatpush1.msra.mxu0 0.0
    %662 = vmatprep.subr.mxu0 0.0
    %663 = vmatpush1.msra.mxu0 0.0
    %664 = vmatprep.mubr.f32.mxu0 0.0
    %665 = vmatmul.mubr.f32.gmra.mrb[0].mxu0 %v499
    %v666 = vpop.f32.mrb[0].mxu0
    %v667 = vadd.f32 %v410, %v666
    %v668 = vpop.f32.mrb[0].mxu0
    %v669 = vadd.f32 %v412, %v668
    %670 = vmatprep.mubr.f32.mxu0 0.0
    %671 = vmatmul.mubr.f32.gmra.mrb[0].mxu0 %v502
    %v672 = vpop.f32.mrb[0].mxu0
    %v673 = vadd.f32 %v416, %v672
    %v674 = vpop.f32.mrb[0].mxu0
    %v675 = vadd.f32 %v418, %v674
    %676 = vdwg.mxu0
    %677 = vmatprep.subr.mxu0 %v137
    %678 = vmatpush1.msra.mxu0 %v136
    %679 = vmatprep.subr.mxu0 %v143
    %680 = vmatpush1.msra.mxu0 %v142
    %681 = vmatprep.subr.mxu0 %v149
    %682 = vmatpush1.msra.mxu0 %v148
    %683 = vmatprep.subr.mxu0 %v155
    %684 = vmatpush1.msra.mxu0 %v154
    %685 = vmatprep.subr.mxu0 %v161
    %686 = vmatpush1.msra.mxu0 %v160
    %687 = vmatprep.subr.mxu0 %v521
    %688 = vmatpush1.msra.mxu0 %v518
    %689 = vmatprep.subr.mxu0 0.0
    %690 = vmatpush1.msra.mxu0 0.0
    %691 = vmatprep.subr.mxu0 0.0
    %692 = vmatpush1.msra.mxu0 0.0
    %693 = vmatprep.subr.mxu0 0.0
    %694 = vmatpush1.msra.mxu0 0.0
    %695 = vmatprep.subr.mxu0 0.0
    %696 = vmatpush1.msra.mxu0 0.0
    %697 = vmatprep.subr.mxu0 0.0
    %698 = vmatpush1.msra.mxu0 0.0
    %699 = vmatprep.subr.mxu0 0.0
    %700 = vmatpush1.msra.mxu0 0.0
    %701 = vmatprep.subr.mxu0 0.0
    %702 = vmatpush1.msra.mxu0 0.0
    %703 = vmatprep.subr.mxu0 0.0
    %704 = vmatpush1.msra.mxu0 0.0
    %705 = vmatprep.subr.mxu0 0.0
    %706 = vmatpush1.msra.mxu0 0.0
    %707 = vmatprep.subr.mxu0 0.0
    %708 = vmatpush1.msra.mxu0 0.0
    %709 = vmatprep.subr.mxu0 0.0
    %710 = vmatpush1.msra.mxu0 0.0
    %711 = vmatprep.subr.mxu0 0.0
    %712 = vmatpush1.msra.mxu0 0.0
    %713 = vmatprep.subr.mxu0 0.0
    %714 = vmatpush1.msra.mxu0 0.0
    %715 = vmatprep.subr.mxu0 0.0
    %716 = vmatpush1.msra.mxu0 0.0
    %717 = vmatprep.subr.mxu0 0.0
    %718 = vmatpush1.msra.mxu0 0.0
    %719 = vmatprep.subr.mxu0 0.0
    %720 = vmatpush1.msra.mxu0 0.0
    %721 = vmatprep.subr.mxu0 0.0
    %722 = vmatpush1.msra.mxu0 0.0
    %723 = vmatprep.subr.mxu0 0.0
    %724 = vmatpush1.msra.mxu0 0.0
    %725 = vmatprep.subr.mxu0 0.0
    %726 = vmatpush1.msra.mxu0 0.0
    %727 = vmatprep.subr.mxu0 0.0
    %728 = vmatpush1.msra.mxu0 0.0
    %729 = vmatprep.subr.mxu0 0.0
    %730 = vmatpush1.msra.mxu0 0.0
    %731 = vmatprep.subr.mxu0 0.0
    %732 = vmatpush1.msra.mxu0 0.0
    %733 = vmatprep.subr.mxu0 0.0
    %734 = vmatpush1.msra.mxu0 0.0
    %735 = vmatprep.subr.mxu0 0.0
    %736 = vmatpush1.msra.mxu0 0.0
    %737 = vmatprep.subr.mxu0 0.0
    %738 = vmatpush1.msra.mxu0 0.0
    %739 = vmatprep.subr.mxu0 0.0
    %740 = vmatpush1.msra.mxu0 0.0
    %741 = vmatprep.mubr.f32.mxu0 0.0
    %742 = vmatmul.mubr.f32.gmra.mrb[0].mxu0 %v499
    %v743 = vpop.f32.mrb[0].mxu0
    %v744 = vadd.f32 %v487, %v743
    %v745 = vpop.f32.mrb[0].mxu0
    %v746 = vadd.f32 %v489, %v745
    %747 = vmatprep.mubr.f32.mxu0 0.0
    %748 = vmatmul.mubr.f32.gmra.mrb[0].mxu0 %v502
    %v749 = vpop.f32.mrb[0].mxu0
    %v750 = vadd.f32 %v493, %v749
    %v751 = vpop.f32.mrb[0].mxu0
    %v752 = vadd.f32 %v495, %v751
    %753 = vdwg.mxu0
    %v754 = vld [vmem:[%s6] sm:$0x3f]
    %v756 = vlaneseq
    %v757 = vshrl.u32 %v756, 7
    %v758 = vsub.s32 0, %v757
    %v759 = vrot.slane %v754, %v758
    %v760 = vlaneseq
    %v761 = vshrl.u32 %v760, 7
    %v762 = vsub.s32 1, %v761
    %v763 = vrot.slane %v754, %v762
    %v764 = vlaneseq
    %v765 = vshrl.u32 %v764, 7
    %v766 = vsub.s32 2, %v765
    %v767 = vrot.slane %v754, %v766
    %v768 = vlaneseq
    %v769 = vshrl.u32 %v768, 7
    %v770 = vsub.s32 3, %v769
    %v771 = vrot.slane %v754, %v770
    %v772 = vlaneseq
    %v773 = vshrl.u32 %v772, 7
    %v774 = vsub.s32 4, %v773
    %v775 = vrot.slane %v754, %v774
    %v776 = vlaneseq
    %v777 = vshrl.u32 %v776, 7
    %v778 = vsub.s32 5, %v777
    %v779 = vrot.slane %v754, %v778
    %v786 = vadd.f32 %v590, %v759
    %v787 = vadd.f32 %v592, %v763
    %v788 = vadd.f32 %v667, %v767
    %v789 = vadd.f32 %v669, %v771
    %v790 = vadd.f32 %v744, %v775
    %v791 = vadd.f32 %v746, %v779
    %v792 = vadd.f32 %v596, %v759
    %v793 = vadd.f32 %v598, %v763
    %v794 = vadd.f32 %v673, %v767
    %v795 = vadd.f32 %v675, %v771
    %v796 = vadd.f32 %v750, %v775
    %v797 = vadd.f32 %v752, %v779
    %v798 = vld [vmem:[#allocation6] sm:$0xff]
    %v799 = vld [vmem:[#allocation6 + $0x8] sm:$0xff]
    %v800 = vld [vmem:[#allocation6 + $0x10] sm:$0xff]
    %v801 = vld [vmem:[#allocation6 + $0x18] sm:$0xff]
    %v802 = vld [vmem:[#allocation6 + $0x20] sm:$0xff]
    %v803 = vld [vmem:[#allocation6 + $0x28] sm:$0xff]
    %v804 = vld [vmem:[#allocation6 + $0x30] sm:$0xff]
    %v805 = vld [vmem:[#allocation6 + $0x38] sm:$0xff]
    %v806 = vld [vmem:[#allocation6 + $0x40] sm:$0xff]
    %v807 = vld [vmem:[#allocation6 + $0x48] sm:$0xff]
    %v808 = vld [vmem:[#allocation6 + $0x50] sm:$0xff]
    %v809 = vld [vmem:[#allocation6 + $0x58] sm:$0xff]
    %v810 = vld [vmem:[#allocation6 + $0x60] sm:$0xff]
    %v811 = vld [vmem:[#allocation6 + $0x68] sm:$0xff]
    %v812 = vld [vmem:[#allocation6 + $0x70] sm:$0xff]
    %v813 = vld [vmem:[#allocation6 + $0x78] sm:$0xff]
    %v814 = vld [vmem:[#allocation6 + $0x80] sm:$0xff]
    %v815 = vld [vmem:[#allocation6 + $0x88] sm:$0xff]
    %v816 = vld [vmem:[#allocation6 + $0x90] sm:$0xff]
    %v817 = vld [vmem:[#allocation6 + $0x98] sm:$0xff]
    %v818 = vld [vmem:[#allocation6 + $0xa0] sm:$0xff]
    %v819 = vld [vmem:[#allocation6 + $0xa8] sm:$0xff]
    %v820 = vld [vmem:[#allocation6 + $0xb0] sm:$0xff]
    %v821 = vld [vmem:[#allocation6 + $0xb8] sm:$0xff]
    %v822 = vld [vmem:[#allocation6 + $0xc0] sm:$0xff]
    %v823 = vld [vmem:[#allocation6 + $0xc8] sm:$0xff]
    %v824 = vld [vmem:[#allocation6 + $0xd0] sm:$0xff]
    %v825 = vld [vmem:[#allocation6 + $0xd8] sm:$0xff]
    %v826 = vld [vmem:[#allocation6 + $0xe0] sm:$0xff]
    %v827 = vld [vmem:[#allocation6 + $0xe8] sm:$0xff]
    %v828 = vld [vmem:[#allocation6 + $0xf0] sm:$0xff]
    %v829 = vld [vmem:[#allocation6 + $0xf8] sm:$0xff]
    %v830 = vld [vmem:[#allocation6 + $0x100] sm:$0xff]
    %v831 = vld [vmem:[#allocation6 + $0x108] sm:$0xff]
    %v832 = vld [vmem:[#allocation6 + $0x110] sm:$0xff]
    %v833 = vld [vmem:[#allocation6 + $0x118] sm:$0xff]
    %v834 = vld [vmem:[#allocation6 + $0x120] sm:$0xff]
    %v835 = vld [vmem:[#allocation6 + $0x128] sm:$0xff]
    %v836 = vld [vmem:[#allocation6 + $0x130] sm:$0xff]
    %v837 = vld [vmem:[#allocation6 + $0x138] sm:$0xff]
    %v838 = vld [vmem:[#allocation6 + $0x140] sm:$0xff]
    %v839 = vld [vmem:[#allocation6 + $0x148] sm:$0xff]
    %v840 = vld [vmem:[#allocation6 + $0x150] sm:$0xff]
    %v841 = vld [vmem:[#allocation6 + $0x158] sm:$0xff]
    %v842 = vld [vmem:[#allocation6 + $0x160] sm:$0xff]
    %v843 = vld [vmem:[#allocation6 + $0x168] sm:$0xff]
    %v844 = vld [vmem:[#allocation6 + $0x170] sm:$0xff]
    %v845 = vld [vmem:[#allocation6 + $0x178] sm:$0xff]
    %v846 = vld [vmem:[#allocation6 + $0x180] sm:$0xff]
    %v847 = vld [vmem:[#allocation6 + $0x188] sm:$0xff]
    %v848 = vld [vmem:[#allocation6 + $0x190] sm:$0xff]
    %v849 = vld [vmem:[#allocation6 + $0x198] sm:$0xff]
    %v850 = vld [vmem:[#allocation6 + $0x1a0] sm:$0xff]
    %v851 = vld [vmem:[#allocation6 + $0x1a8] sm:$0xff]
    %v852 = vld [vmem:[#allocation6 + $0x1b0] sm:$0xff]
    %v853 = vld [vmem:[#allocation6 + $0x1b8] sm:$0xff]
    %v854 = vld [vmem:[#allocation6 + $0x1c0] sm:$0xff]
    %v855 = vld [vmem:[#allocation6 + $0x1c8] sm:$0xff]
    %v856 = vld [vmem:[#allocation6 + $0x1d0] sm:$0xff]
    %v857 = vld [vmem:[#allocation6 + $0x1d8] sm:$0xff]
    %v858 = vld [vmem:[#allocation6 + $0x1e0] sm:$0xff]
    %v859 = vld [vmem:[#allocation6 + $0x1e8] sm:$0xff]
    %v860 = vld [vmem:[#allocation6 + $0x1f0] sm:$0xff]
    %v861 = vld [vmem:[#allocation6 + $0x1f8] sm:$0xff]
    %v862 = vld [vmem:[#allocation6 + $0x200] sm:$0xff]
    %v863 = vld [vmem:[#allocation6 + $0x208] sm:$0xff]
    %v864 = vld [vmem:[#allocation6 + $0x210] sm:$0xff]
    %v865 = vld [vmem:[#allocation6 + $0x218] sm:$0xff]
    %v866 = vld [vmem:[#allocation6 + $0x220] sm:$0xff]
    %v867 = vld [vmem:[#allocation6 + $0x228] sm:$0xff]
    %v868 = vld [vmem:[#allocation6 + $0x230] sm:$0xff]
    %v869 = vld [vmem:[#allocation6 + $0x238] sm:$0xff]
    %v870 = vld [vmem:[#allocation6 + $0x240] sm:$0xff]
    %v871 = vld [vmem:[#allocation6 + $0x248] sm:$0xff]
    %v872 = vld [vmem:[#allocation6 + $0x250] sm:$0xff]
    %v873 = vld [vmem:[#allocation6 + $0x258] sm:$0xff]
    %v874 = vld [vmem:[#allocation6 + $0x260] sm:$0xff]
    %v875 = vld [vmem:[#allocation6 + $0x268] sm:$0xff]
    %v876 = vld [vmem:[#allocation6 + $0x270] sm:$0xff]
    %v877 = vld [vmem:[#allocation6 + $0x278] sm:$0xff]
    %v878 = vld [vmem:[#allocation6 + $0x280] sm:$0xff]
    %v879 = vld [vmem:[#allocation6 + $0x288] sm:$0xff]
    %v880 = vld [vmem:[#allocation6 + $0x290] sm:$0xff]
    %v881 = vld [vmem:[#allocation6 + $0x298] sm:$0xff]
    %v882 = vld [vmem:[#allocation6 + $0x2a0] sm:$0xff]
    %v883 = vld [vmem:[#allocation6 + $0x2a8] sm:$0xff]
    %v884 = vld [vmem:[#allocation6 + $0x2b0] sm:$0xff]
    %v885 = vld [vmem:[#allocation6 + $0x2b8] sm:$0xff]
    %v886 = vld [vmem:[#allocation6 + $0x2c0] sm:$0xff]
    %v887 = vld [vmem:[#allocation6 + $0x2c8] sm:$0xff]
    %v888 = vld [vmem:[#allocation6 + $0x2d0] sm:$0xff]
    %v889 = vld [vmem:[#allocation6 + $0x2d8] sm:$0xff]
    %v890 = vld [vmem:[#allocation6 + $0x2e0] sm:$0xff]
    %v891 = vld [vmem:[#allocation6 + $0x2e8] sm:$0xff]
    %v892 = vld [vmem:[#allocation6 + $0x2f0] sm:$0xff]
    %v893 = vld [vmem:[#allocation6 + $0x2f8] sm:$0xff]
    %v894 = vld [vmem:[#allocation6 + $0x300] sm:$0xff]
    %v895 = vld [vmem:[#allocation6 + $0x308] sm:$0xff]
    %v896 = vld [vmem:[#allocation6 + $0x310] sm:$0xff]
    %v897 = vld [vmem:[#allocation6 + $0x318] sm:$0xff]
    %v898 = vld [vmem:[#allocation6 + $0x320] sm:$0xff]
    %v899 = vld [vmem:[#allocation6 + $0x328] sm:$0xff]
    %v900 = vld [vmem:[#allocation6 + $0x330] sm:$0xff]
    %v901 = vld [vmem:[#allocation6 + $0x338] sm:$0xff]
    %v902 = vld [vmem:[#allocation6 + $0x340] sm:$0xff]
    %v903 = vld [vmem:[#allocation6 + $0x348] sm:$0xff]
    %v904 = vld [vmem:[#allocation6 + $0x350] sm:$0xff]
    %v905 = vld [vmem:[#allocation6 + $0x358] sm:$0xff]
    %v906 = vld [vmem:[#allocation6 + $0x360] sm:$0xff]
    %v907 = vld [vmem:[#allocation6 + $0x368] sm:$0xff]
    %v908 = vld [vmem:[#allocation6 + $0x370] sm:$0xff]
    %v909 = vld [vmem:[#allocation6 + $0x378] sm:$0xff]
    %v910 = vld [vmem:[#allocation6 + $0x380] sm:$0xff]
    %v911 = vld [vmem:[#allocation6 + $0x388] sm:$0xff]
    %v912 = vld [vmem:[#allocation6 + $0x390] sm:$0xff]
    %v913 = vld [vmem:[#allocation6 + $0x398] sm:$0xff]
    %v914 = vld [vmem:[#allocation6 + $0x3a0] sm:$0xff]
    %v915 = vld [vmem:[#allocation6 + $0x3a8] sm:$0xff]
    %v916 = vld [vmem:[#allocation6 + $0x3b0] sm:$0xff]
    %v917 = vld [vmem:[#allocation6 + $0x3b8] sm:$0xff]
    %v918 = vld [vmem:[#allocation6 + $0x3c0] sm:$0xff]
    %v919 = vld [vmem:[#allocation6 + $0x3c8] sm:$0xff]
    %v920 = vld [vmem:[#allocation6 + $0x3d0] sm:$0xff]
    %v921 = vld [vmem:[#allocation6 + $0x3d8] sm:$0xff]
    %v922 = vld [vmem:[#allocation6 + $0x3e0] sm:$0xff]
    %v923 = vld [vmem:[#allocation6 + $0x3e8] sm:$0xff]
    %v924 = vld [vmem:[#allocation6 + $0x3f0] sm:$0xff]
    %v925 = vld [vmem:[#allocation6 + $0x3f8] sm:$0xff]
    %v926 = vld [vmem:[#allocation6 + $0x400] sm:$0xff]
    %v927 = vld [vmem:[#allocation6 + $0x408] sm:$0xff]
    %v928 = vld [vmem:[#allocation6 + $0x410] sm:$0xff]
    %v929 = vld [vmem:[#allocation6 + $0x418] sm:$0xff]
    %v930 = vld [vmem:[#allocation6 + $0x420] sm:$0xff]
    %v931 = vld [vmem:[#allocation6 + $0x428] sm:$0xff]
    %v932 = vld [vmem:[#allocation6 + $0x430] sm:$0xff]
    %v933 = vld [vmem:[#allocation6 + $0x438] sm:$0xff]
    %v934 = vld [vmem:[#allocation6 + $0x440] sm:$0xff]
    %v935 = vld [vmem:[#allocation6 + $0x448] sm:$0xff]
    %v936 = vld [vmem:[#allocation6 + $0x450] sm:$0xff]
    %v937 = vld [vmem:[#allocation6 + $0x458] sm:$0xff]
    %v938 = vld [vmem:[#allocation6 + $0x460] sm:$0xff]
    %v939 = vld [vmem:[#allocation6 + $0x468] sm:$0xff]
    %v940 = vld [vmem:[#allocation6 + $0x470] sm:$0xff]
    %v941 = vld [vmem:[#allocation6 + $0x478] sm:$0xff]
    %v942 = vld [vmem:[#allocation6 + $0x480] sm:$0xff]
    %v943 = vld [vmem:[#allocation6 + $0x488] sm:$0xff]
    %v944 = vld [vmem:[#allocation6 + $0x490] sm:$0xff]
    %v945 = vld [vmem:[#allocation6 + $0x498] sm:$0xff]
    %v946 = vld [vmem:[#allocation6 + $0x4a0] sm:$0xff]
    %v947 = vld [vmem:[#allocation6 + $0x4a8] sm:$0xff]
    %v948 = vld [vmem:[#allocation6 + $0x4b0] sm:$0xff]
    %v949 = vld [vmem:[#allocation6 + $0x4b8] sm:$0xff]
    %v950 = vld [vmem:[#allocation6 + $0x4c0] sm:$0xff]
    %v951 = vld [vmem:[#allocation6 + $0x4c8] sm:$0xff]
    %v952 = vld [vmem:[#allocation6 + $0x4d0] sm:$0xff]
    %v953 = vld [vmem:[#allocation6 + $0x4d8] sm:$0xff]
    %v954 = vld [vmem:[#allocation6 + $0x4e0] sm:$0xff]
    %v955 = vld [vmem:[#allocation6 + $0x4e8] sm:$0xff]
    %v956 = vld [vmem:[#allocation6 + $0x4f0] sm:$0xff]
    %v957 = vld [vmem:[#allocation6 + $0x4f8] sm:$0xff]
    %v958 = vld [vmem:[#allocation6 + $0x500] sm:$0xff]
    %v959 = vld [vmem:[#allocation6 + $0x508] sm:$0xff]
    %v960 = vld [vmem:[#allocation6 + $0x510] sm:$0xff]
    %v961 = vld [vmem:[#allocation6 + $0x518] sm:$0xff]
    %v962 = vld [vmem:[#allocation6 + $0x520] sm:$0xff]
    %v963 = vld [vmem:[#allocation6 + $0x528] sm:$0xff]
    %v964 = vld [vmem:[#allocation6 + $0x530] sm:$0xff]
    %v965 = vld [vmem:[#allocation6 + $0x538] sm:$0xff]
    %v966 = vld [vmem:[#allocation6 + $0x540] sm:$0xff]
    %v967 = vld [vmem:[#allocation6 + $0x548] sm:$0xff]
    %v968 = vld [vmem:[#allocation6 + $0x550] sm:$0xff]
    %v969 = vld [vmem:[#allocation6 + $0x558] sm:$0xff]
    %v970 = vld [vmem:[#allocation6 + $0x560] sm:$0xff]
    %v971 = vld [vmem:[#allocation6 + $0x568] sm:$0xff]
    %v972 = vld [vmem:[#allocation6 + $0x570] sm:$0xff]
    %v973 = vld [vmem:[#allocation6 + $0x578] sm:$0xff]
    %v974 = vld [vmem:[#allocation6 + $0x580] sm:$0xff]
    %v975 = vld [vmem:[#allocation6 + $0x588] sm:$0xff]
    %v976 = vld [vmem:[#allocation6 + $0x590] sm:$0xff]
    %v977 = vld [vmem:[#allocation6 + $0x598] sm:$0xff]
    %v978 = vld [vmem:[#allocation6 + $0x5a0] sm:$0xff]
    %v979 = vld [vmem:[#allocation6 + $0x5a8] sm:$0xff]
    %v980 = vld [vmem:[#allocation6 + $0x5b0] sm:$0xff]
    %v981 = vld [vmem:[#allocation6 + $0x5b8] sm:$0xff]
    %v982 = vld [vmem:[#allocation6 + $0x5c0] sm:$0xff]
    %v983 = vld [vmem:[#allocation6 + $0x5c8] sm:$0xff]
    %v984 = vld [vmem:[#allocation6 + $0x5d0] sm:$0xff]
    %v985 = vld [vmem:[#allocation6 + $0x5d8] sm:$0xff]
    %v986 = vld [vmem:[#allocation6 + $0x5e0] sm:$0xff]
    %v987 = vld [vmem:[#allocation6 + $0x5e8] sm:$0xff]
    %v988 = vld [vmem:[#allocation6 + $0x5f0] sm:$0xff]
    %v989 = vld [vmem:[#allocation6 + $0x5f8] sm:$0xff]
    %v990 = vld [vmem:[%s7] sm:$0x3f]
    %v991 = vld [vmem:[%s2] sm:$0xf]
    %v993 = vlaneseq
    %v994 = vshrl.u32 %v993, 7
    %v995 = vsub.s32 0, %v994
    %v996 = vrot.slane %v990, %v995
    %v997 = vlaneseq
    %v998 = vshrl.u32 %v997, 7
    %v999 = vsub.s32 1, %v998
    %v1000 = vrot.slane %v990, %v999
    %v1001 = vlaneseq
    %v1002 = vshrl.u32 %v1001, 7
    %v1003 = vsub.s32 2, %v1002
    %v1004 = vrot.slane %v990, %v1003
    %v1005 = vlaneseq
    %v1006 = vshrl.u32 %v1005, 7
    %v1007 = vsub.s32 3, %v1006
    %v1008 = vrot.slane %v990, %v1007
    %v1009 = vlaneseq
    %v1010 = vshrl.u32 %v1009, 7
    %v1011 = vsub.s32 4, %v1010
    %v1012 = vrot.slane %v990, %v1011
    %v1013 = vlaneseq
    %v1014 = vshrl.u32 %v1013, 7
    %v1015 = vsub.s32 5, %v1014
    %v1016 = vrot.slane %v990, %v1015
    %v1025 = vunpack.c.l.s4 1983009808
    %v1026 = vunpack.c.0.s8 %v1025
    %v1027 = vlaneseq
    %v1028 = vshrl.u32 %v1027, 7
    %v1029 = vsub.s32 %v1026, %v1028
    %v1030 = vrot.slane %v991, %v1029
    %v1031 = vcombine.high %v1030, %v1030
    %1034 = vmatprep.subr.mxu0 %v799
    %1035 = vmatpush1.msra.mxu0 %v798
    %1036 = vmatprep.subr.mxu0 %v805
    %1037 = vmatpush1.msra.mxu0 %v804
    %1038 = vmatprep.subr.mxu0 %v811
    %1039 = vmatpush1.msra.mxu0 %v810
    %1040 = vmatprep.subr.mxu0 %v817
    %1041 = vmatpush1.msra.mxu0 %v816
    %1042 = vmatprep.subr.mxu0 %v823
    %1043 = vmatpush1.msra.mxu0 %v822
    %1044 = vmatprep.subr.mxu0 %v829
    %1045 = vmatpush1.msra.mxu0 %v828
    %1046 = vmatprep.subr.mxu0 %v835
    %1047 = vmatpush1.msra.mxu0 %v834
    %1048 = vmatprep.subr.mxu0 %v841
    %1049 = vmatpush1.msra.mxu0 %v840
    %1050 = vmatprep.subr.mxu0 %v847
    %1051 = vmatpush1.msra.mxu0 %v846
    %1052 = vmatprep.subr.mxu0 %v853
    %1053 = vmatpush1.msra.mxu0 %v852
    %1054 = vmatprep.subr.mxu0 %v859
    %1055 = vmatpush1.msra.mxu0 %v858
    %1056 = vmatprep.subr.mxu0 %v865
    %1057 = vmatpush1.msra.mxu0 %v864
    %1058 = vmatprep.subr.mxu0 %v871
    %1059 = vmatpush1.msra.mxu0 %v870
    %1060 = vmatprep.subr.mxu0 %v877
    %1061 = vmatpush1.msra.mxu0 %v876
    %1062 = vmatprep.subr.mxu0 %v883
    %1063 = vmatpush1.msra.mxu0 %v882
    %1064 = vmatprep.subr.mxu0 %v889
    %1065 = vmatpush1.msra.mxu0 %v888
    %1066 = vmatprep.subr.mxu0 %v895
    %1067 = vmatpush1.msra.mxu0 %v894
    %1068 = vmatprep.subr.mxu0 %v901
    %1069 = vmatpush1.msra.mxu0 %v900
    %1070 = vmatprep.subr.mxu0 %v907
    %1071 = vmatpush1.msra.mxu0 %v906
    %1072 = vmatprep.subr.mxu0 %v913
    %1073 = vmatpush1.msra.mxu0 %v912
    %1074 = vmatprep.subr.mxu0 %v919
    %1075 = vmatpush1.msra.mxu0 %v918
    %1076 = vmatprep.subr.mxu0 %v925
    %1077 = vmatpush1.msra.mxu0 %v924
    %1078 = vmatprep.subr.mxu0 %v931
    %1079 = vmatpush1.msra.mxu0 %v930
    %1080 = vmatprep.subr.mxu0 %v937
    %1081 = vmatpush1.msra.mxu0 %v936
    %1082 = vmatprep.subr.mxu0 %v943
    %1083 = vmatpush1.msra.mxu0 %v942
    %1084 = vmatprep.subr.mxu0 %v949
    %1085 = vmatpush1.msra.mxu0 %v948
    %1086 = vmatprep.subr.mxu0 %v955
    %1087 = vmatpush1.msra.mxu0 %v954
    %1088 = vmatprep.subr.mxu0 %v961
    %1089 = vmatpush1.msra.mxu0 %v960
    %1090 = vmatprep.subr.mxu0 %v967
    %1091 = vmatpush1.msra.mxu0 %v966
    %1092 = vmatprep.subr.mxu0 %v973
    %1093 = vmatpush1.msra.mxu0 %v972
    %1094 = vmatprep.subr.mxu0 %v979
    %1095 = vmatpush1.msra.mxu0 %v978
    %1096 = vmatprep.subr.mxu0 %v985
    %1097 = vmatpush1.msra.mxu0 %v984
    %1098 = vmatprep.mubr.f32.mxu0 %v1031
    %1099 = vmatmul.mubr.f32.gmra.mrb[0].mxu0 %v1030
    %v1100 = vpop.f32.mrb[0].mxu0
    %v1101 = vadd.f32 %v996, %v1100
    %v1102 = vpop.f32.mrb[0].mxu0
    %v1103 = vadd.f32 %v1000, %v1102
    %1104 = vdwg.mxu0
    %1105 = vmatprep.subr.mxu0 %v801
    %1106 = vmatpush1.msra.mxu0 %v800
    %1107 = vmatprep.subr.mxu0 %v807
    %1108 = vmatpush1.msra.mxu0 %v806
    %1109 = vmatprep.subr.mxu0 %v813
    %1110 = vmatpush1.msra.mxu0 %v812
    %1111 = vmatprep.subr.mxu0 %v819
    %1112 = vmatpush1.msra.mxu0 %v818
    %1113 = vmatprep.subr.mxu0 %v825
    %1114 = vmatpush1.msra.mxu0 %v824
    %1115 = vmatprep.subr.mxu0 %v831
    %1116 = vmatpush1.msra.mxu0 %v830
    %1117 = vmatprep.subr.mxu0 %v837
    %1118 = vmatpush1.msra.mxu0 %v836
    %1119 = vmatprep.subr.mxu0 %v843
    %1120 = vmatpush1.msra.mxu0 %v842
    %1121 = vmatprep.subr.mxu0 %v849
    %1122 = vmatpush1.msra.mxu0 %v848
    %1123 = vmatprep.subr.mxu0 %v855
    %1124 = vmatpush1.msra.mxu0 %v854
    %1125 = vmatprep.subr.mxu0 %v861
    %1126 = vmatpush1.msra.mxu0 %v860
    %1127 = vmatprep.subr.mxu0 %v867
    %1128 = vmatpush1.msra.mxu0 %v866
    %1129 = vmatprep.subr.mxu0 %v873
    %1130 = vmatpush1.msra.mxu0 %v872
    %1131 = vmatprep.subr.mxu0 %v879
    %1132 = vmatpush1.msra.mxu0 %v878
    %1133 = vmatprep.subr.mxu0 %v885
    %1134 = vmatpush1.msra.mxu0 %v884
    %1135 = vmatprep.subr.mxu0 %v891
    %1136 = vmatpush1.msra.mxu0 %v890
    %1137 = vmatprep.subr.mxu0 %v897
    %1138 = vmatpush1.msra.mxu0 %v896
    %1139 = vmatprep.subr.mxu0 %v903
    %1140 = vmatpush1.msra.mxu0 %v902
    %1141 = vmatprep.subr.mxu0 %v909
    %1142 = vmatpush1.msra.mxu0 %v908
    %1143 = vmatprep.subr.mxu0 %v915
    %1144 = vmatpush1.msra.mxu0 %v914
    %1145 = vmatprep.subr.mxu0 %v921
    %1146 = vmatpush1.msra.mxu0 %v920
    %1147 = vmatprep.subr.mxu0 %v927
    %1148 = vmatpush1.msra.mxu0 %v926
    %1149 = vmatprep.subr.mxu0 %v933
    %1150 = vmatpush1.msra.mxu0 %v932
    %1151 = vmatprep.subr.mxu0 %v939
    %1152 = vmatpush1.msra.mxu0 %v938
    %1153 = vmatprep.subr.mxu0 %v945
    %1154 = vmatpush1.msra.mxu0 %v944
    %1155 = vmatprep.subr.mxu0 %v951
    %1156 = vmatpush1.msra.mxu0 %v950
    %1157 = vmatprep.subr.mxu0 %v957
    %1158 = vmatpush1.msra.mxu0 %v956
    %1159 = vmatprep.subr.mxu0 %v963
    %1160 = vmatpush1.msra.mxu0 %v962
    %1161 = vmatprep.subr.mxu0 %v969
    %1162 = vmatpush1.msra.mxu0 %v968
    %1163 = vmatprep.subr.mxu0 %v975
    %1164 = vmatpush1.msra.mxu0 %v974
    %1165 = vmatprep.subr.mxu0 %v981
    %1166 = vmatpush1.msra.mxu0 %v980
    %1167 = vmatprep.subr.mxu0 %v987
    %1168 = vmatpush1.msra.mxu0 %v986
    %1169 = vmatprep.mubr.f32.mxu0 %v1031
    %1170 = vmatmul.mubr.f32.gmra.mrb[0].mxu0 %v1030
    %v1171 = vpop.f32.mrb[0].mxu0
    %v1172 = vadd.f32 %v1004, %v1171
    %v1173 = vpop.f32.mrb[0].mxu0
    %v1174 = vadd.f32 %v1008, %v1173
    %1175 = vdwg.mxu0
    %1176 = vmatprep.subr.mxu0 %v803
    %1177 = vmatpush1.msra.mxu0 %v802
    %1178 = vmatprep.subr.mxu0 %v809
    %1179 = vmatpush1.msra.mxu0 %v808
    %1180 = vmatprep.subr.mxu0 %v815
    %1181 = vmatpush1.msra.mxu0 %v814
    %1182 = vmatprep.subr.mxu0 %v821
    %1183 = vmatpush1.msra.mxu0 %v820
    %1184 = vmatprep.subr.mxu0 %v827
    %1185 = vmatpush1.msra.mxu0 %v826
    %1186 = vmatprep.subr.mxu0 %v833
    %1187 = vmatpush1.msra.mxu0 %v832
    %1188 = vmatprep.subr.mxu0 %v839
    %1189 = vmatpush1.msra.mxu0 %v838
    %1190 = vmatprep.subr.mxu0 %v845
    %1191 = vmatpush1.msra.mxu0 %v844
    %1192 = vmatprep.subr.mxu0 %v851
    %1193 = vmatpush1.msra.mxu0 %v850
    %1194 = vmatprep.subr.mxu0 %v857
    %1195 = vmatpush1.msra.mxu0 %v856
    %1196 = vmatprep.subr.mxu0 %v863
    %1197 = vmatpush1.msra.mxu0 %v862
    %1198 = vmatprep.subr.mxu0 %v869
    %1199 = vmatpush1.msra.mxu0 %v868
    %1200 = vmatprep.subr.mxu0 %v875
    %1201 = vmatpush1.msra.mxu0 %v874
    %1202 = vmatprep.subr.mxu0 %v881
    %1203 = vmatpush1.msra.mxu0 %v880
    %1204 = vmatprep.subr.mxu0 %v887
    %1205 = vmatpush1.msra.mxu0 %v886
    %1206 = vmatprep.subr.mxu0 %v893
    %1207 = vmatpush1.msra.mxu0 %v892
    %1208 = vmatprep.subr.mxu0 %v899
    %1209 = vmatpush1.msra.mxu0 %v898
    %1210 = vmatprep.subr.mxu0 %v905
    %1211 = vmatpush1.msra.mxu0 %v904
    %1212 = vmatprep.subr.mxu0 %v911
    %1213 = vmatpush1.msra.mxu0 %v910
    %1214 = vmatprep.subr.mxu0 %v917
    %1215 = vmatpush1.msra.mxu0 %v916
    %1216 = vmatprep.subr.mxu0 %v923
    %1217 = vmatpush1.msra.mxu0 %v922
    %1218 = vmatprep.subr.mxu0 %v929
    %1219 = vmatpush1.msra.mxu0 %v928
    %1220 = vmatprep.subr.mxu0 %v935
    %1221 = vmatpush1.msra.mxu0 %v934
    %1222 = vmatprep.subr.mxu0 %v941
    %1223 = vmatpush1.msra.mxu0 %v940
    %1224 = vmatprep.subr.mxu0 %v947
    %1225 = vmatpush1.msra.mxu0 %v946
    %1226 = vmatprep.subr.mxu0 %v953
    %1227 = vmatpush1.msra.mxu0 %v952
    %1228 = vmatprep.subr.mxu0 %v959
    %1229 = vmatpush1.msra.mxu0 %v958
    %1230 = vmatprep.subr.mxu0 %v965
    %1231 = vmatpush1.msra.mxu0 %v964
    %1232 = vmatprep.subr.mxu0 %v971
    %1233 = vmatpush1.msra.mxu0 %v970
    %1234 = vmatprep.subr.mxu0 %v977
    %1235 = vmatpush1.msra.mxu0 %v976
    %1236 = vmatprep.subr.mxu0 %v983
    %1237 = vmatpush1.msra.mxu0 %v982
    %1238 = vmatprep.subr.mxu0 %v989
    %1239 = vmatpush1.msra.mxu0 %v988
    %1240 = vmatprep.mubr.f32.mxu0 %v1031
    %1241 = vmatmul.mubr.f32.gmra.mrb[0].mxu0 %v1030
    %v1242 = vpop.f32.mrb[0].mxu0
    %v1243 = vadd.f32 %v1012, %v1242
    %v1244 = vpop.f32.mrb[0].mxu0
    %v1245 = vadd.f32 %v1016, %v1244
    %1246 = vdwg.mxu0
    %v1247 = vadd.f32 %v786, %v1101
    %v1248 = vadd.f32 %v787, %v1103
    %v1249 = vxor.u32 %v1247, 2147483648
    %v1250 = vxor.u32 %v1248, 2147483648
    %v1251 = vmul.f32 %v1249, 1.442695
    %v1252 = vpow.pop %v1251
    %v1253 = vmul.f32 %v1250, 1.442695
    %v1254 = vpow.pop %v1253
    %v1255 = vadd.f32 %v1252, 1.0
    %v1256 = vadd.f32 %v1254, 1.0
    %v1257 = vrcp.pop %v1255
    %v1258 = vmul.f32 1.0, %v1257
    %v1259 = vrcp.pop %v1256
    %v1260 = vmul.f32 1.0, %v1259
    %v1261 = vadd.f32 %v788, %v1172
    %v1262 = vadd.f32 %v789, %v1174
    %v1263 = vxor.u32 %v1261, 2147483648
    %v1264 = vxor.u32 %v1262, 2147483648
    %v1265 = vmul.f32 %v1263, 1.442695
    %v1266 = vpow.pop %v1265
    %v1267 = vmul.f32 %v1264, 1.442695
    %v1268 = vpow.pop %v1267
    %v1269 = vadd.f32 %v1266, 1.0
    %v1270 = vadd.f32 %v1268, 1.0
    %v1271 = vrcp.pop %v1269
    %v1272 = vmul.f32 1.0, %v1271
    %v1273 = vrcp.pop %v1270
    %v1274 = vmul.f32 1.0, %v1273
    %v1275 = vmul.f32 %v1258, %v1243
    %v1276 = vmul.f32 %v1260, %v1245
    %v1277 = vadd.f32 %v790, %v1275
    %v1278 = vadd.f32 %v791, %v1276
    %v1279 = vtanh.pop %v1277
    %v1280 = vtanh.pop %v1278
    %v1283 = vcombine.low %v1279, %v1280
    %v1285 = vunpack.c.l.s4 1983009808
    %v1286 = vunpack.c.0.s8 %v1285
    %v1287 = vlaneseq
    %v1288 = vshrl.u32 %v1287, 7
    %v1289 = vsub.s32 %v1286, %v1288
    %v1290 = vrot.slane %v1283, %v1289
    %v1292 = vsub.f32 %v991, %v1290
    %v1295 = vunpack.c.l.s4 1983009808
    %v1296 = vunpack.c.0.s8 %v1295
    %v1297 = vlaneseq
    %v1298 = vshrl.u32 %v1297, 7
    %v1299 = vsub.s32 %v1296, %v1298
    %v1300 = vrot.slane %v1292, %v1299
    %v1301 = vcombine.high %v1300, %v1300
    %v1304 = vmul.f32 %v1272, %v1300
    %v1305 = vmul.f32 %v1274, %v1301
    %v1306 = vadd.f32 %v1279, %v1304
    %v1307 = vadd.f32 %v1280, %v1305
    %1308 = vst [vmem:[#allocation2] sm:$0x3] %v1306
    %1309 = vst [vmem:[#allocation2 + $0x8] sm:$0x3] %v1307
    %1310 = vmatprep.subr.mxu0 %v799
    %1311 = vmatpush1.msra.mxu0 %v798
    %1312 = vmatprep.subr.mxu0 %v805
    %1313 = vmatpush1.msra.mxu0 %v804
    %1314 = vmatprep.subr.mxu0 %v811
    %1315 = vmatpush1.msra.mxu0 %v810
    %1316 = vmatprep.subr.mxu0 %v817
    %1317 = vmatpush1.msra.mxu0 %v816
    %1318 = vmatprep.subr.mxu0 %v823
    %1319 = vmatpush1.msra.mxu0 %v822
    %1320 = vmatprep.subr.mxu0 %v829
    %1321 = vmatpush1.msra.mxu0 %v828
    %1322 = vmatprep.subr.mxu0 %v835
    %1323 = vmatpush1.msra.mxu0 %v834
    %1324 = vmatprep.subr.mxu0 %v841
    %1325 = vmatpush1.msra.mxu0 %v840
    %1326 = vmatprep.subr.mxu0 %v847
    %1327 = vmatpush1.msra.mxu0 %v846
    %1328 = vmatprep.subr.mxu0 %v853
    %1329 = vmatpush1.msra.mxu0 %v852
    %1330 = vmatprep.subr.mxu0 %v859
    %1331 = vmatpush1.msra.mxu0 %v858
    %1332 = vmatprep.subr.mxu0 %v865
    %1333 = vmatpush1.msra.mxu0 %v864
    %1334 = vmatprep.subr.mxu0 %v871
    %1335 = vmatpush1.msra.mxu0 %v870
    %1336 = vmatprep.subr.mxu0 %v877
    %1337 = vmatpush1.msra.mxu0 %v876
    %1338 = vmatprep.subr.mxu0 %v883
    %1339 = vmatpush1.msra.mxu0 %v882
    %1340 = vmatprep.subr.mxu0 %v889
    %1341 = vmatpush1.msra.mxu0 %v888
    %1342 = vmatprep.subr.mxu0 %v895
    %1343 = vmatpush1.msra.mxu0 %v894
    %1344 = vmatprep.subr.mxu0 %v901
    %1345 = vmatpush1.msra.mxu0 %v900
    %1346 = vmatprep.subr.mxu0 %v907
    %1347 = vmatpush1.msra.mxu0 %v906
    %1348 = vmatprep.subr.mxu0 %v913
    %1349 = vmatpush1.msra.mxu0 %v912
    %1350 = vmatprep.subr.mxu0 %v919
    %1351 = vmatpush1.msra.mxu0 %v918
    %1352 = vmatprep.subr.mxu0 %v925
    %1353 = vmatpush1.msra.mxu0 %v924
    %1354 = vmatprep.subr.mxu0 %v931
    %1355 = vmatpush1.msra.mxu0 %v930
    %1356 = vmatprep.subr.mxu0 %v937
    %1357 = vmatpush1.msra.mxu0 %v936
    %1358 = vmatprep.subr.mxu0 %v943
    %1359 = vmatpush1.msra.mxu0 %v942
    %1360 = vmatprep.subr.mxu0 %v949
    %1361 = vmatpush1.msra.mxu0 %v948
    %1362 = vmatprep.subr.mxu0 %v955
    %1363 = vmatpush1.msra.mxu0 %v954
    %1364 = vmatprep.subr.mxu0 %v961
    %1365 = vmatpush1.msra.mxu0 %v960
    %1366 = vmatprep.subr.mxu0 %v967
    %1367 = vmatpush1.msra.mxu0 %v966
    %1368 = vmatprep.subr.mxu0 %v973
    %1369 = vmatpush1.msra.mxu0 %v972
    %1370 = vmatprep.subr.mxu0 %v979
    %1371 = vmatpush1.msra.mxu0 %v978
    %1372 = vmatprep.subr.mxu0 %v985
    %1373 = vmatpush1.msra.mxu0 %v984
    %1374 = vmatprep.mubr.f32.mxu0 %v1307
    %1375 = vmatmul.mubr.f32.gmra.mrb[0].mxu0 %v1306
    %v1376 = vpop.f32.mrb[0].mxu0
    %v1377 = vadd.f32 %v996, %v1376
    %v1378 = vpop.f32.mrb[0].mxu0
    %v1379 = vadd.f32 %v1000, %v1378
    %1380 = vdwg.mxu0
    %1381 = vmatprep.subr.mxu0 %v801
    %1382 = vmatpush1.msra.mxu0 %v800
    %1383 = vmatprep.subr.mxu0 %v807
    %1384 = vmatpush1.msra.mxu0 %v806
    %1385 = vmatprep.subr.mxu0 %v813
    %1386 = vmatpush1.msra.mxu0 %v812
    %1387 = vmatprep.subr.mxu0 %v819
    %1388 = vmatpush1.msra.mxu0 %v818
    %1389 = vmatprep.subr.mxu0 %v825
    %1390 = vmatpush1.msra.mxu0 %v824
    %1391 = vmatprep.subr.mxu0 %v831
    %1392 = vmatpush1.msra.mxu0 %v830
    %1393 = vmatprep.subr.mxu0 %v837
    %1394 = vmatpush1.msra.mxu0 %v836
    %1395 = vmatprep.subr.mxu0 %v843
    %1396 = vmatpush1.msra.mxu0 %v842
    %1397 = vmatprep.subr.mxu0 %v849
    %1398 = vmatpush1.msra.mxu0 %v848
    %1399 = vmatprep.subr.mxu0 %v855
    %1400 = vmatpush1.msra.mxu0 %v854
    %1401 = vmatprep.subr.mxu0 %v861
    %1402 = vmatpush1.msra.mxu0 %v860
    %1403 = vmatprep.subr.mxu0 %v867
    %1404 = vmatpush1.msra.mxu0 %v866
    %1405 = vmatprep.subr.mxu0 %v873
    %1406 = vmatpush1.msra.mxu0 %v872
    %1407 = vmatprep.subr.mxu0 %v879
    %1408 = vmatpush1.msra.mxu0 %v878
    %1409 = vmatprep.subr.mxu0 %v885
    %1410 = vmatpush1.msra.mxu0 %v884
    %1411 = vmatprep.subr.mxu0 %v891
    %1412 = vmatpush1.msra.mxu0 %v890
    %1413 = vmatprep.subr.mxu0 %v897
    %1414 = vmatpush1.msra.mxu0 %v896
    %1415 = vmatprep.subr.mxu0 %v903
    %1416 = vmatpush1.msra.mxu0 %v902
    %1417 = vmatprep.subr.mxu0 %v909
    %1418 = vmatpush1.msra.mxu0 %v908
    %1419 = vmatprep.subr.mxu0 %v915
    %1420 = vmatpush1.msra.mxu0 %v914
    %1421 = vmatprep.subr.mxu0 %v921
    %1422 = vmatpush1.msra.mxu0 %v920
    %1423 = vmatprep.subr.mxu0 %v927
    %1424 = vmatpush1.msra.mxu0 %v926
    %1425 = vmatprep.subr.mxu0 %v933
    %1426 = vmatpush1.msra.mxu0 %v932
    %1427 = vmatprep.subr.mxu0 %v939
    %1428 = vmatpush1.msra.mxu0 %v938
    %1429 = vmatprep.subr.mxu0 %v945
    %1430 = vmatpush1.msra.mxu0 %v944
    %1431 = vmatprep.subr.mxu0 %v951
    %1432 = vmatpush1.msra.mxu0 %v950
    %1433 = vmatprep.subr.mxu0 %v957
    %1434 = vmatpush1.msra.mxu0 %v956
    %1435 = vmatprep.subr.mxu0 %v963
    %1436 = vmatpush1.msra.mxu0 %v962
    %1437 = vmatprep.subr.mxu0 %v969
    %1438 = vmatpush1.msra.mxu0 %v968
    %1439 = vmatprep.subr.mxu0 %v975
    %1440 = vmatpush1.msra.mxu0 %v974
    %1441 = vmatprep.subr.mxu0 %v981
    %1442 = vmatpush1.msra.mxu0 %v980
    %1443 = vmatprep.subr.mxu0 %v987
    %1444 = vmatpush1.msra.mxu0 %v986
    %1445 = vmatprep.mubr.f32.mxu0 %v1307
    %1446 = vmatmul.mubr.f32.gmra.mrb[0].mxu0 %v1306
    %v1447 = vpop.f32.mrb[0].mxu0
    %v1448 = vadd.f32 %v1004, %v1447
    %v1449 = vpop.f32.mrb[0].mxu0
    %v1450 = vadd.f32 %v1008, %v1449
    %1451 = vdwg.mxu0
    %1452 = vmatprep.subr.mxu0 %v803
    %1453 = vmatpush1.msra.mxu0 %v802
    %1454 = vmatprep.subr.mxu0 %v809
    %1455 = vmatpush1.msra.mxu0 %v808
    %1456 = vmatprep.subr.mxu0 %v815
    %1457 = vmatpush1.msra.mxu0 %v814
    %1458 = vmatprep.subr.mxu0 %v821
    %1459 = vmatpush1.msra.mxu0 %v820
    %1460 = vmatprep.subr.mxu0 %v827
    %1461 = vmatpush1.msra.mxu0 %v826
    %1462 = vmatprep.subr.mxu0 %v833
    %1463 = vmatpush1.msra.mxu0 %v832
    %1464 = vmatprep.subr.mxu0 %v839
    %1465 = vmatpush1.msra.mxu0 %v838
    %1466 = vmatprep.subr.mxu0 %v845
    %1467 = vmatpush1.msra.mxu0 %v844
    %1468 = vmatprep.subr.mxu0 %v851
    %1469 = vmatpush1.msra.mxu0 %v850
    %1470 = vmatprep.subr.mxu0 %v857
    %1471 = vmatpush1.msra.mxu0 %v856
    %1472 = vmatprep.subr.mxu0 %v863
    %1473 = vmatpush1.msra.mxu0 %v862
    %1474 = vmatprep.subr.mxu0 %v869
    %1475 = vmatpush1.msra.mxu0 %v868
    %1476 = vmatprep.subr.mxu0 %v875
    %1477 = vmatpush1.msra.mxu0 %v874
    %1478 = vmatprep.subr.mxu0 %v881
    %1479 = vmatpush1.msra.mxu0 %v880
    %1480 = vmatprep.subr.mxu0 %v887
    %1481 = vmatpush1.msra.mxu0 %v886
    %1482 = vmatprep.subr.mxu0 %v893
    %1483 = vmatpush1.msra.mxu0 %v892
    %1484 = vmatprep.subr.mxu0 %v899
    %1485 = vmatpush1.msra.mxu0 %v898
    %1486 = vmatprep.subr.mxu0 %v905
    %1487 = vmatpush1.msra.mxu0 %v904
    %1488 = vmatprep.subr.mxu0 %v911
    %1489 = vmatpush1.msra.mxu0 %v910
    %1490 = vmatprep.subr.mxu0 %v917
    %1491 = vmatpush1.msra.mxu0 %v916
    %1492 = vmatprep.subr.mxu0 %v923
    %1493 = vmatpush1.msra.mxu0 %v922
    %1494 = vmatprep.subr.mxu0 %v929
    %1495 = vmatpush1.msra.mxu0 %v928
    %1496 = vmatprep.subr.mxu0 %v935
    %1497 = vmatpush1.msra.mxu0 %v934
    %1498 = vmatprep.subr.mxu0 %v941
    %1499 = vmatpush1.msra.mxu0 %v940
    %1500 = vmatprep.subr.mxu0 %v947
    %1501 = vmatpush1.msra.mxu0 %v946
    %1502 = vmatprep.subr.mxu0 %v953
    %1503 = vmatpush1.msra.mxu0 %v952
    %1504 = vmatprep.subr.mxu0 %v959
    %1505 = vmatpush1.msra.mxu0 %v958
    %1506 = vmatprep.subr.mxu0 %v965
    %1507 = vmatpush1.msra.mxu0 %v964
    %1508 = vmatprep.subr.mxu0 %v971
    %1509 = vmatpush1.msra.mxu0 %v970
    %1510 = vmatprep.subr.mxu0 %v977
    %1511 = vmatpush1.msra.mxu0 %v976
    %1512 = vmatprep.subr.mxu0 %v983
    %1513 = vmatpush1.msra.mxu0 %v982
    %1514 = vmatprep.subr.mxu0 %v989
    %1515 = vmatpush1.msra.mxu0 %v988
    %1516 = vmatprep.mubr.f32.mxu0 %v1307
    %1517 = vmatmul.mubr.f32.gmra.mrb[0].mxu0 %v1306
    %v1518 = vpop.f32.mrb[0].mxu0
    %v1519 = vadd.f32 %v1012, %v1518
    %v1520 = vpop.f32.mrb[0].mxu0
    %v1521 = vadd.f32 %v1016, %v1520
    %1522 = vdwg.mxu0
    %v1525 = vrot.slane %v1377, 6
    %v1526 = vrot.slane %v1379, 6
    %v1529 = vadd.f32 %v786, %v1525
    %v1530 = vadd.f32 %v787, %v1526
    %v1531 = vxor.u32 %v1529, 2147483648
    %v1532 = vxor.u32 %v1530, 2147483648
    %v1533 = vmul.f32 %v1531, 1.442695
    %v1534 = vpow.pop %v1533
    %v1535 = vmul.f32 %v1532, 1.442695
    %v1536 = vpow.pop %v1535
    %v1537 = vadd.f32 %v1534, 1.0
    %v1538 = vadd.f32 %v1536, 1.0
    %v1539 = vrcp.pop %v1537
    %v1540 = vmul.f32 1.0, %v1539
    %v1541 = vrcp.pop %v1538
    %v1542 = vmul.f32 1.0, %v1541
    %v1545 = vrot.slane %v1448, 6
    %v1546 = vrot.slane %v1450, 6
    %v1549 = vadd.f32 %v788, %v1545
    %v1550 = vadd.f32 %v789, %v1546
    %v1551 = vxor.u32 %v1549, 2147483648
    %v1552 = vxor.u32 %v1550, 2147483648
    %v1553 = vmul.f32 %v1551, 1.442695
    %v1554 = vpow.pop %v1553
    %v1555 = vmul.f32 %v1552, 1.442695
    %v1556 = vpow.pop %v1555
    %v1557 = vadd.f32 %v1554, 1.0
    %v1558 = vadd.f32 %v1556, 1.0
    %v1559 = vrcp.pop %v1557
    %v1560 = vmul.f32 1.0, %v1559
    %v1561 = vrcp.pop %v1558
    %v1562 = vmul.f32 1.0, %v1561
    %v1565 = vrot.slane %v1519, 6
    %v1566 = vrot.slane %v1521, 6
    %v1569 = vmul.f32 %v1540, %v1565
    %v1570 = vmul.f32 %v1542, %v1566
    %v1571 = vadd.f32 %v790, %v1569
    %v1572 = vadd.f32 %v791, %v1570
    %v1573 = vtanh.pop %v1571
    %v1574 = vtanh.pop %v1572
    %v1577 = vrot.slane %v1573, 2
    %v1578 = vrot.slane %v1574, 2
    %v1581 = vsub.f32 %v1306, %v1577
    %v1582 = vsub.f32 %v1307, %v1578
    %v1585 = vrot.slane %v1581, 6
    %v1586 = vrot.slane %v1582, 6
    %v1589 = vmul.f32 %v1560, %v1585
    %v1590 = vmul.f32 %v1562, %v1586
    %v1591 = vadd.f32 %v1573, %v1589
    %v1592 = vadd.f32 %v1574, %v1590
    %1593 = vst [vmem:[#allocation2] sm:$0xc] %v1591
    %1594 = vst [vmem:[#allocation2 + $0x8] sm:$0xc] %v1592
    %v1597 = vrot.slane %v1591, 2
    %v1598 = vrot.slane %v1592, 2
    %1601 = vmatprep.subr.mxu0 %v799
    %1602 = vmatpush1.msra.mxu0 %v798
    %1603 = vmatprep.subr.mxu0 %v805
    %1604 = vmatpush1.msra.mxu0 %v804
    %1605 = vmatprep.subr.mxu0 %v811
    %1606 = vmatpush1.msra.mxu0 %v810
    %1607 = vmatprep.subr.mxu0 %v817
    %1608 = vmatpush1.msra.mxu0 %v816
    %1609 = vmatprep.subr.mxu0 %v823
    %1610 = vmatpush1.msra.mxu0 %v822
    %1611 = vmatprep.subr.mxu0 %v829
    %1612 = vmatpush1.msra.mxu0 %v828
    %1613 = vmatprep.subr.mxu0 %v835
    %1614 = vmatpush1.msra.mxu0 %v834
    %1615 = vmatprep.subr.mxu0 %v841
    %1616 = vmatpush1.msra.mxu0 %v840
    %1617 = vmatprep.subr.mxu0 %v847
    %1618 = vmatpush1.msra.mxu0 %v846
    %1619 = vmatprep.subr.mxu0 %v853
    %1620 = vmatpush1.msra.mxu0 %v852
    %1621 = vmatprep.subr.mxu0 %v859
    %1622 = vmatpush1.msra.mxu0 %v858
    %1623 = vmatprep.subr.mxu0 %v865
    %1624 = vmatpush1.msra.mxu0 %v864
    %1625 = vmatprep.subr.mxu0 %v871
    %1626 = vmatpush1.msra.mxu0 %v870
    %1627 = vmatprep.subr.mxu0 %v877
    %1628 = vmatpush1.msra.mxu0 %v876
    %1629 = vmatprep.subr.mxu0 %v883
    %1630 = vmatpush1.msra.mxu0 %v882
    %1631 = vmatprep.subr.mxu0 %v889
    %1632 = vmatpush1.msra.mxu0 %v888
    %1633 = vmatprep.subr.mxu0 %v895
    %1634 = vmatpush1.msra.mxu0 %v894
    %1635 = vmatprep.subr.mxu0 %v901
    %1636 = vmatpush1.msra.mxu0 %v900
    %1637 = vmatprep.subr.mxu0 %v907
    %1638 = vmatpush1.msra.mxu0 %v906
    %1639 = vmatprep.subr.mxu0 %v913
    %1640 = vmatpush1.msra.mxu0 %v912
    %1641 = vmatprep.subr.mxu0 %v919
    %1642 = vmatpush1.msra.mxu0 %v918
    %1643 = vmatprep.subr.mxu0 %v925
    %1644 = vmatpush1.msra.mxu0 %v924
    %1645 = vmatprep.subr.mxu0 %v931
    %1646 = vmatpush1.msra.mxu0 %v930
    %1647 = vmatprep.subr.mxu0 %v937
    %1648 = vmatpush1.msra.mxu0 %v936
    %1649 = vmatprep.subr.mxu0 %v943
    %1650 = vmatpush1.msra.mxu0 %v942
    %1651 = vmatprep.subr.mxu0 %v949
    %1652 = vmatpush1.msra.mxu0 %v948
    %1653 = vmatprep.subr.mxu0 %v955
    %1654 = vmatpush1.msra.mxu0 %v954
    %1655 = vmatprep.subr.mxu0 %v961
    %1656 = vmatpush1.msra.mxu0 %v960
    %1657 = vmatprep.subr.mxu0 %v967
    %1658 = vmatpush1.msra.mxu0 %v966
    %1659 = vmatprep.subr.mxu0 %v973
    %1660 = vmatpush1.msra.mxu0 %v972
    %1661 = vmatprep.subr.mxu0 %v979
    %1662 = vmatpush1.msra.mxu0 %v978
    %1663 = vmatprep.subr.mxu0 %v985
    %1664 = vmatpush1.msra.mxu0 %v984
    %1665 = vmatprep.mubr.f32.mxu0 %v1598
    %1666 = vmatmul.mubr.f32.gmra.mrb[0].mxu0 %v1597
    %v1667 = vpop.f32.mrb[0].mxu0
    %v1668 = vadd.f32 %v996, %v1667
    %v1669 = vpop.f32.mrb[0].mxu0
    %v1670 = vadd.f32 %v1000, %v1669
    %1671 = vdwg.mxu0
    %1672 = vmatprep.subr.mxu0 %v801
    %1673 = vmatpush1.msra.mxu0 %v800
    %1674 = vmatprep.subr.mxu0 %v807
    %1675 = vmatpush1.msra.mxu0 %v806
    %1676 = vmatprep.subr.mxu0 %v813
    %1677 = vmatpush1.msra.mxu0 %v812
    %1678 = vmatprep.subr.mxu0 %v819
    %1679 = vmatpush1.msra.mxu0 %v818
    %1680 = vmatprep.subr.mxu0 %v825
    %1681 = vmatpush1.msra.mxu0 %v824
    %1682 = vmatprep.subr.mxu0 %v831
    %1683 = vmatpush1.msra.mxu0 %v830
    %1684 = vmatprep.subr.mxu0 %v837
    %1685 = vmatpush1.msra.mxu0 %v836
    %1686 = vmatprep.subr.mxu0 %v843
    %1687 = vmatpush1.msra.mxu0 %v842
    %1688 = vmatprep.subr.mxu0 %v849
    %1689 = vmatpush1.msra.mxu0 %v848
    %1690 = vmatprep.subr.mxu0 %v855
    %1691 = vmatpush1.msra.mxu0 %v854
    %1692 = vmatprep.subr.mxu0 %v861
    %1693 = vmatpush1.msra.mxu0 %v860
    %1694 = vmatprep.subr.mxu0 %v867
    %1695 = vmatpush1.msra.mxu0 %v866
    %1696 = vmatprep.subr.mxu0 %v873
    %1697 = vmatpush1.msra.mxu0 %v872
    %1698 = vmatprep.subr.mxu0 %v879
    %1699 = vmatpush1.msra.mxu0 %v878
    %1700 = vmatprep.subr.mxu0 %v885
    %1701 = vmatpush1.msra.mxu0 %v884
    %1702 = vmatprep.subr.mxu0 %v891
    %1703 = vmatpush1.msra.mxu0 %v890
    %1704 = vmatprep.subr.mxu0 %v897
    %1705 = vmatpush1.msra.mxu0 %v896
    %1706 = vmatprep.subr.mxu0 %v903
    %1707 = vmatpush1.msra.mxu0 %v902
    %1708 = vmatprep.subr.mxu0 %v909
    %1709 = vmatpush1.msra.mxu0 %v908
    %1710 = vmatprep.subr.mxu0 %v915
    %1711 = vmatpush1.msra.mxu0 %v914
    %1712 = vmatprep.subr.mxu0 %v921
    %1713 = vmatpush1.msra.mxu0 %v920
    %1714 = vmatprep.subr.mxu0 %v927
    %1715 = vmatpush1.msra.mxu0 %v926
    %1716 = vmatprep.subr.mxu0 %v933
    %1717 = vmatpush1.msra.mxu0 %v932
    %1718 = vmatprep.subr.mxu0 %v939
    %1719 = vmatpush1.msra.mxu0 %v938
    %1720 = vmatprep.subr.mxu0 %v945
    %1721 = vmatpush1.msra.mxu0 %v944
    %1722 = vmatprep.subr.mxu0 %v951
    %1723 = vmatpush1.msra.mxu0 %v950
    %1724 = vmatprep.subr.mxu0 %v957
    %1725 = vmatpush1.msra.mxu0 %v956
    %1726 = vmatprep.subr.mxu0 %v963
    %1727 = vmatpush1.msra.mxu0 %v962
    %1728 = vmatprep.subr.mxu0 %v969
    %1729 = vmatpush1.msra.mxu0 %v968
    %1730 = vmatprep.subr.mxu0 %v975
    %1731 = vmatpush1.msra.mxu0 %v974
    %1732 = vmatprep.subr.mxu0 %v981
    %1733 = vmatpush1.msra.mxu0 %v980
    %1734 = vmatprep.subr.mxu0 %v987
    %1735 = vmatpush1.msra.mxu0 %v986
    %1736 = vmatprep.mubr.f32.mxu0 %v1598
    %1737 = vmatmul.mubr.f32.gmra.mrb[0].mxu0 %v1597
    %v1738 = vpop.f32.mrb[0].mxu0
    %v1739 = vadd.f32 %v1004, %v1738
    %v1740 = vpop.f32.mrb[0].mxu0
    %v1741 = vadd.f32 %v1008, %v1740
    %1742 = vdwg.mxu0
    %1743 = vmatprep.subr.mxu0 %v803
    %1744 = vmatpush1.msra.mxu0 %v802
    %1745 = vmatprep.subr.mxu0 %v809
    %1746 = vmatpush1.msra.mxu0 %v808
    %1747 = vmatprep.subr.mxu0 %v815
    %1748 = vmatpush1.msra.mxu0 %v814
    %1749 = vmatprep.subr.mxu0 %v821
    %1750 = vmatpush1.msra.mxu0 %v820
    %1751 = vmatprep.subr.mxu0 %v827
    %1752 = vmatpush1.msra.mxu0 %v826
    %1753 = vmatprep.subr.mxu0 %v833
    %1754 = vmatpush1.msra.mxu0 %v832
    %1755 = vmatprep.subr.mxu0 %v839
    %1756 = vmatpush1.msra.mxu0 %v838
    %1757 = vmatprep.subr.mxu0 %v845
    %1758 = vmatpush1.msra.mxu0 %v844
    %1759 = vmatprep.subr.mxu0 %v851
    %1760 = vmatpush1.msra.mxu0 %v850
    %1761 = vmatprep.subr.mxu0 %v857
    %1762 = vmatpush1.msra.mxu0 %v856
    %1763 = vmatprep.subr.mxu0 %v863
    %1764 = vmatpush1.msra.mxu0 %v862
    %1765 = vmatprep.subr.mxu0 %v869
    %1766 = vmatpush1.msra.mxu0 %v868
    %1767 = vmatprep.subr.mxu0 %v875
    %1768 = vmatpush1.msra.mxu0 %v874
    %1769 = vmatprep.subr.mxu0 %v881
    %1770 = vmatpush1.msra.mxu0 %v880
    %1771 = vmatprep.subr.mxu0 %v887
    %1772 = vmatpush1.msra.mxu0 %v886
    %1773 = vmatprep.subr.mxu0 %v893
    %1774 = vmatpush1.msra.mxu0 %v892
    %1775 = vmatprep.subr.mxu0 %v899
    %1776 = vmatpush1.msra.mxu0 %v898
    %1777 = vmatprep.subr.mxu0 %v905
    %1778 = vmatpush1.msra.mxu0 %v904
    %1779 = vmatprep.subr.mxu0 %v911
    %1780 = vmatpush1.msra.mxu0 %v910
    %1781 = vmatprep.subr.mxu0 %v917
    %1782 = vmatpush1.msra.mxu0 %v916
    %1783 = vmatprep.subr.mxu0 %v923
    %1784 = vmatpush1.msra.mxu0 %v922
    %1785 = vmatprep.subr.mxu0 %v929
    %1786 = vmatpush1.msra.mxu0 %v928
    %1787 = vmatprep.subr.mxu0 %v935
    %1788 = vmatpush1.msra.mxu0 %v934
    %1789 = vmatprep.subr.mxu0 %v941
    %1790 = vmatpush1.msra.mxu0 %v940
    %1791 = vmatprep.subr.mxu0 %v947
    %1792 = vmatpush1.msra.mxu0 %v946
    %1793 = vmatprep.subr.mxu0 %v953
    %1794 = vmatpush1.msra.mxu0 %v952
    %1795 = vmatprep.subr.mxu0 %v959
    %1796 = vmatpush1.msra.mxu0 %v958
    %1797 = vmatprep.subr.mxu0 %v965
    %1798 = vmatpush1.msra.mxu0 %v964
    %1799 = vmatprep.subr.mxu0 %v971
    %1800 = vmatpush1.msra.mxu0 %v970
    %1801 = vmatprep.subr.mxu0 %v977
    %1802 = vmatpush1.msra.mxu0 %v976
    %1803 = vmatprep.subr.mxu0 %v983
    %1804 = vmatpush1.msra.mxu0 %v982
    %1805 = vmatprep.subr.mxu0 %v989
    %1806 = vmatpush1.msra.mxu0 %v988
    %1807 = vmatprep.mubr.f32.mxu0 %v1598
    %1808 = vmatmul.mubr.f32.gmra.mrb[0].mxu0 %v1597
    %v1809 = vpop.f32.mrb[0].mxu0
    %v1810 = vadd.f32 %v1012, %v1809
    %v1811 = vpop.f32.mrb[0].mxu0
    %v1812 = vadd.f32 %v1016, %v1811
    %1813 = vdwg.mxu0
    %v1816 = vrot.slane %v1668, 4
    %v1817 = vrot.slane %v1670, 4
    %v1820 = vadd.f32 %v786, %v1816
    %v1821 = vadd.f32 %v787, %v1817
    %v1822 = vxor.u32 %v1820, 2147483648
    %v1823 = vxor.u32 %v1821, 2147483648
    %v1824 = vmul.f32 %v1822, 1.442695
    %v1825 = vpow.pop %v1824
    %v1826 = vmul.f32 %v1823, 1.442695
    %v1827 = vpow.pop %v1826
    %v1828 = vadd.f32 %v1825, 1.0
    %v1829 = vadd.f32 %v1827, 1.0
    %v1830 = vrcp.pop %v1828
    %v1831 = vmul.f32 1.0, %v1830
    %v1832 = vrcp.pop %v1829
    %v1833 = vmul.f32 1.0, %v1832
    %v1836 = vrot.slane %v1739, 4
    %v1837 = vrot.slane %v1741, 4
    %v1840 = vadd.f32 %v788, %v1836
    %v1841 = vadd.f32 %v789, %v1837
    %v1842 = vxor.u32 %v1840, 2147483648
    %v1843 = vxor.u32 %v1841, 2147483648
    %v1844 = vmul.f32 %v1842, 1.442695
    %v1845 = vpow.pop %v1844
    %v1846 = vmul.f32 %v1843, 1.442695
    %v1847 = vpow.pop %v1846
    %v1848 = vadd.f32 %v1845, 1.0
    %v1849 = vadd.f32 %v1847, 1.0
    %v1850 = vrcp.pop %v1848
    %v1851 = vmul.f32 1.0, %v1850
    %v1852 = vrcp.pop %v1849
    %v1853 = vmul.f32 1.0, %v1852
    %v1856 = vrot.slane %v1810, 4
    %v1857 = vrot.slane %v1812, 4
    %v1860 = vmul.f32 %v1831, %v1856
    %v1861 = vmul.f32 %v1833, %v1857
    %v1862 = vadd.f32 %v790, %v1860
    %v1863 = vadd.f32 %v791, %v1861
    %v1864 = vtanh.pop %v1862
    %v1865 = vtanh.pop %v1863
    %v1868 = vrot.slane %v1864, 2
    %v1869 = vrot.slane %v1865, 2
    %v1872 = vsub.f32 %v1591, %v1868
    %v1873 = vsub.f32 %v1592, %v1869
    %v1876 = vrot.slane %v1872, 6
    %v1877 = vrot.slane %v1873, 6
    %v1880 = vmul.f32 %v1851, %v1876
    %v1881 = vmul.f32 %v1853, %v1877
    %v1882 = vadd.f32 %v1864, %v1880
    %v1883 = vadd.f32 %v1865, %v1881
    %1884 = vst [vmem:[#allocation2] sm:$0x30] %v1882
    %1885 = vst [vmem:[#allocation2 + $0x8] sm:$0x30] %v1883
    %v1888 = vrot.slane %v1882, 4
    %v1889 = vrot.slane %v1883, 4
    %1892 = vmatprep.subr.mxu0 %v799
    %1893 = vmatpush1.msra.mxu0 %v798
    %1894 = vmatprep.subr.mxu0 %v805
    %1895 = vmatpush1.msra.mxu0 %v804
    %1896 = vmatprep.subr.mxu0 %v811
    %1897 = vmatpush1.msra.mxu0 %v810
    %1898 = vmatprep.subr.mxu0 %v817
    %1899 = vmatpush1.msra.mxu0 %v816
    %1900 = vmatprep.subr.mxu0 %v823
    %1901 = vmatpush1.msra.mxu0 %v822
    %1902 = vmatprep.subr.mxu0 %v829
    %1903 = vmatpush1.msra.mxu0 %v828
    %1904 = vmatprep.subr.mxu0 %v835
    %1905 = vmatpush1.msra.mxu0 %v834
    %1906 = vmatprep.subr.mxu0 %v841
    %1907 = vmatpush1.msra.mxu0 %v840
    %1908 = vmatprep.subr.mxu0 %v847
    %1909 = vmatpush1.msra.mxu0 %v846
    %1910 = vmatprep.subr.mxu0 %v853
    %1911 = vmatpush1.msra.mxu0 %v852
    %1912 = vmatprep.subr.mxu0 %v859
    %1913 = vmatpush1.msra.mxu0 %v858
    %1914 = vmatprep.subr.mxu0 %v865
    %1915 = vmatpush1.msra.mxu0 %v864
    %1916 = vmatprep.subr.mxu0 %v871
    %1917 = vmatpush1.msra.mxu0 %v870
    %1918 = vmatprep.subr.mxu0 %v877
    %1919 = vmatpush1.msra.mxu0 %v876
    %1920 = vmatprep.subr.mxu0 %v883
    %1921 = vmatpush1.msra.mxu0 %v882
    %1922 = vmatprep.subr.mxu0 %v889
    %1923 = vmatpush1.msra.mxu0 %v888
    %1924 = vmatprep.subr.mxu0 %v895
    %1925 = vmatpush1.msra.mxu0 %v894
    %1926 = vmatprep.subr.mxu0 %v901
    %1927 = vmatpush1.msra.mxu0 %v900
    %1928 = vmatprep.subr.mxu0 %v907
    %1929 = vmatpush1.msra.mxu0 %v906
    %1930 = vmatprep.subr.mxu0 %v913
    %1931 = vmatpush1.msra.mxu0 %v912
    %1932 = vmatprep.subr.mxu0 %v919
    %1933 = vmatpush1.msra.mxu0 %v918
    %1934 = vmatprep.subr.mxu0 %v925
    %1935 = vmatpush1.msra.mxu0 %v924
    %1936 = vmatprep.subr.mxu0 %v931
    %1937 = vmatpush1.msra.mxu0 %v930
    %1938 = vmatprep.subr.mxu0 %v937
    %1939 = vmatpush1.msra.mxu0 %v936
    %1940 = vmatprep.subr.mxu0 %v943
    %1941 = vmatpush1.msra.mxu0 %v942
    %1942 = vmatprep.subr.mxu0 %v949
    %1943 = vmatpush1.msra.mxu0 %v948
    %1944 = vmatprep.subr.mxu0 %v955
    %1945 = vmatpush1.msra.mxu0 %v954
    %1946 = vmatprep.subr.mxu0 %v961
    %1947 = vmatpush1.msra.mxu0 %v960
    %1948 = vmatprep.subr.mxu0 %v967
    %1949 = vmatpush1.msra.mxu0 %v966
    %1950 = vmatprep.subr.mxu0 %v973
    %1951 = vmatpush1.msra.mxu0 %v972
    %1952 = vmatprep.subr.mxu0 %v979
    %1953 = vmatpush1.msra.mxu0 %v978
    %1954 = vmatprep.subr.mxu0 %v985
    %1955 = vmatpush1.msra.mxu0 %v984
    %1956 = vmatprep.mubr.f32.mxu0 %v1889
    %1957 = vmatmul.mubr.f32.gmra.mrb[0].mxu0 %v1888
    %v1958 = vpop.f32.mrb[0].mxu0
    %v1959 = vadd.f32 %v996, %v1958
    %v1960 = vpop.f32.mrb[0].mxu0
    %v1961 = vadd.f32 %v1000, %v1960
    %1962 = vdwg.mxu0
    %1963 = vmatprep.subr.mxu0 %v801
    %1964 = vmatpush1.msra.mxu0 %v800
    %1965 = vmatprep.subr.mxu0 %v807
    %1966 = vmatpush1.msra.mxu0 %v806
    %1967 = vmatprep.subr.mxu0 %v813
    %1968 = vmatpush1.msra.mxu0 %v812
    %1969 = vmatprep.subr.mxu0 %v819
    %1970 = vmatpush1.msra.mxu0 %v818
    %1971 = vmatprep.subr.mxu0 %v825
    %1972 = vmatpush1.msra.mxu0 %v824
    %1973 = vmatprep.subr.mxu0 %v831
    %1974 = vmatpush1.msra.mxu0 %v830
    %1975 = vmatprep.subr.mxu0 %v837
    %1976 = vmatpush1.msra.mxu0 %v836
    %1977 = vmatprep.subr.mxu0 %v843
    %1978 = vmatpush1.msra.mxu0 %v842
    %1979 = vmatprep.subr.mxu0 %v849
    %1980 = vmatpush1.msra.mxu0 %v848
    %1981 = vmatprep.subr.mxu0 %v855
    %1982 = vmatpush1.msra.mxu0 %v854
    %1983 = vmatprep.subr.mxu0 %v861
    %1984 = vmatpush1.msra.mxu0 %v860
    %1985 = vmatprep.subr.mxu0 %v867
    %1986 = vmatpush1.msra.mxu0 %v866
    %1987 = vmatprep.subr.mxu0 %v873
    %1988 = vmatpush1.msra.mxu0 %v872
    %1989 = vmatprep.subr.mxu0 %v879
    %1990 = vmatpush1.msra.mxu0 %v878
    %1991 = vmatprep.subr.mxu0 %v885
    %1992 = vmatpush1.msra.mxu0 %v884
    %1993 = vmatprep.subr.mxu0 %v891
    %1994 = vmatpush1.msra.mxu0 %v890
    %1995 = vmatprep.subr.mxu0 %v897
    %1996 = vmatpush1.msra.mxu0 %v896
    %1997 = vmatprep.subr.mxu0 %v903
    %1998 = vmatpush1.msra.mxu0 %v902
    %1999 = vmatprep.subr.mxu0 %v909
    %2000 = vmatpush1.msra.mxu0 %v908
    %2001 = vmatprep.subr.mxu0 %v915
    %2002 = vmatpush1.msra.mxu0 %v914
    %2003 = vmatprep.subr.mxu0 %v921
    %2004 = vmatpush1.msra.mxu0 %v920
    %2005 = vmatprep.subr.mxu0 %v927
    %2006 = vmatpush1.msra.mxu0 %v926
    %2007 = vmatprep.subr.mxu0 %v933
    %2008 = vmatpush1.msra.mxu0 %v932
    %2009 = vmatprep.subr.mxu0 %v939
    %2010 = vmatpush1.msra.mxu0 %v938
    %2011 = vmatprep.subr.mxu0 %v945
    %2012 = vmatpush1.msra.mxu0 %v944
    %2013 = vmatprep.subr.mxu0 %v951
    %2014 = vmatpush1.msra.mxu0 %v950
    %2015 = vmatprep.subr.mxu0 %v957
    %2016 = vmatpush1.msra.mxu0 %v956
    %2017 = vmatprep.subr.mxu0 %v963
    %2018 = vmatpush1.msra.mxu0 %v962
    %2019 = vmatprep.subr.mxu0 %v969
    %2020 = vmatpush1.msra.mxu0 %v968
    %2021 = vmatprep.subr.mxu0 %v975
    %2022 = vmatpush1.msra.mxu0 %v974
    %2023 = vmatprep.subr.mxu0 %v981
    %2024 = vmatpush1.msra.mxu0 %v980
    %2025 = vmatprep.subr.mxu0 %v987
    %2026 = vmatpush1.msra.mxu0 %v986
    %2027 = vmatprep.mubr.f32.mxu0 %v1889
    %2028 = vmatmul.mubr.f32.gmra.mrb[0].mxu0 %v1888
    %v2029 = vpop.f32.mrb[0].mxu0
    %v2030 = vadd.f32 %v1004, %v2029
    %v2031 = vpop.f32.mrb[0].mxu0
    %v2032 = vadd.f32 %v1008, %v2031
    %2033 = vdwg.mxu0
    %2034 = vmatprep.subr.mxu0 %v803
    %2035 = vmatpush1.msra.mxu0 %v802
    %2036 = vmatprep.subr.mxu0 %v809
    %2037 = vmatpush1.msra.mxu0 %v808
    %2038 = vmatprep.subr.mxu0 %v815
    %2039 = vmatpush1.msra.mxu0 %v814
    %2040 = vmatprep.subr.mxu0 %v821
    %2041 = vmatpush1.msra.mxu0 %v820
    %2042 = vmatprep.subr.mxu0 %v827
    %2043 = vmatpush1.msra.mxu0 %v826
    %2044 = vmatprep.subr.mxu0 %v833
    %2045 = vmatpush1.msra.mxu0 %v832
    %2046 = vmatprep.subr.mxu0 %v839
    %2047 = vmatpush1.msra.mxu0 %v838
    %2048 = vmatprep.subr.mxu0 %v845
    %2049 = vmatpush1.msra.mxu0 %v844
    %2050 = vmatprep.subr.mxu0 %v851
    %2051 = vmatpush1.msra.mxu0 %v850
    %2052 = vmatprep.subr.mxu0 %v857
    %2053 = vmatpush1.msra.mxu0 %v856
    %2054 = vmatprep.subr.mxu0 %v863
    %2055 = vmatpush1.msra.mxu0 %v862
    %2056 = vmatprep.subr.mxu0 %v869
    %2057 = vmatpush1.msra.mxu0 %v868
    %2058 = vmatprep.subr.mxu0 %v875
    %2059 = vmatpush1.msra.mxu0 %v874
    %2060 = vmatprep.subr.mxu0 %v881
    %2061 = vmatpush1.msra.mxu0 %v880
    %2062 = vmatprep.subr.mxu0 %v887
    %2063 = vmatpush1.msra.mxu0 %v886
    %2064 = vmatprep.subr.mxu0 %v893
    %2065 = vmatpush1.msra.mxu0 %v892
    %2066 = vmatprep.subr.mxu0 %v899
    %2067 = vmatpush1.msra.mxu0 %v898
    %2068 = vmatprep.subr.mxu0 %v905
    %2069 = vmatpush1.msra.mxu0 %v904
    %2070 = vmatprep.subr.mxu0 %v911
    %2071 = vmatpush1.msra.mxu0 %v910
    %2072 = vmatprep.subr.mxu0 %v917
    %2073 = vmatpush1.msra.mxu0 %v916
    %2074 = vmatprep.subr.mxu0 %v923
    %2075 = vmatpush1.msra.mxu0 %v922
    %2076 = vmatprep.subr.mxu0 %v929
    %2077 = vmatpush1.msra.mxu0 %v928
    %2078 = vmatprep.subr.mxu0 %v935
    %2079 = vmatpush1.msra.mxu0 %v934
    %2080 = vmatprep.subr.mxu0 %v941
    %2081 = vmatpush1.msra.mxu0 %v940
    %2082 = vmatprep.subr.mxu0 %v947
    %2083 = vmatpush1.msra.mxu0 %v946
    %2084 = vmatprep.subr.mxu0 %v953
    %2085 = vmatpush1.msra.mxu0 %v952
    %2086 = vmatprep.subr.mxu0 %v959
    %2087 = vmatpush1.msra.mxu0 %v958
    %2088 = vmatprep.subr.mxu0 %v965
    %2089 = vmatpush1.msra.mxu0 %v964
    %2090 = vmatprep.subr.mxu0 %v971
    %2091 = vmatpush1.msra.mxu0 %v970
    %2092 = vmatprep.subr.mxu0 %v977
    %2093 = vmatpush1.msra.mxu0 %v976
    %2094 = vmatprep.subr.mxu0 %v983
    %2095 = vmatpush1.msra.mxu0 %v982
    %2096 = vmatprep.subr.mxu0 %v989
    %2097 = vmatpush1.msra.mxu0 %v988
    %2098 = vmatprep.mubr.f32.mxu0 %v1889
    %2099 = vmatmul.mubr.f32.gmra.mrb[0].mxu0 %v1888
    %v2100 = vpop.f32.mrb[0].mxu0
    %v2101 = vadd.f32 %v1012, %v2100
    %v2102 = vpop.f32.mrb[0].mxu0
    %v2103 = vadd.f32 %v1016, %v2102
    %2104 = vdwg.mxu0
    %v2107 = vrot.slane %v1959, 2
    %v2108 = vrot.slane %v1961, 2
    %v2111 = vadd.f32 %v786, %v2107
    %v2112 = vadd.f32 %v787, %v2108
    %v2113 = vxor.u32 %v2111, 2147483648
    %v2114 = vxor.u32 %v2112, 2147483648
    %v2115 = vmul.f32 %v2113, 1.442695
    %v2116 = vpow.pop %v2115
    %v2117 = vmul.f32 %v2114, 1.442695
    %v2118 = vpow.pop %v2117
    %v2119 = vadd.f32 %v2116, 1.0
    %v2120 = vadd.f32 %v2118, 1.0
    %v2121 = vrcp.pop %v2119
    %v2122 = vmul.f32 1.0, %v2121
    %v2123 = vrcp.pop %v2120
    %v2124 = vmul.f32 1.0, %v2123
    %v2127 = vrot.slane %v2030, 2
    %v2128 = vrot.slane %v2032, 2
    %v2131 = vadd.f32 %v788, %v2127
    %v2132 = vadd.f32 %v789, %v2128
    %v2133 = vxor.u32 %v2131, 2147483648
    %v2134 = vxor.u32 %v2132, 2147483648
    %v2135 = vmul.f32 %v2133, 1.442695
    %v2136 = vpow.pop %v2135
    %v2137 = vmul.f32 %v2134, 1.442695
    %v2138 = vpow.pop %v2137
    %v2139 = vadd.f32 %v2136, 1.0
    %v2140 = vadd.f32 %v2138, 1.0
    %v2141 = vrcp.pop %v2139
    %v2142 = vmul.f32 1.0, %v2141
    %v2143 = vrcp.pop %v2140
    %v2144 = vmul.f32 1.0, %v2143
    %v2147 = vrot.slane %v2101, 2
    %v2148 = vrot.slane %v2103, 2
    %v2151 = vmul.f32 %v2122, %v2147
    %v2152 = vmul.f32 %v2124, %v2148
    %v2153 = vadd.f32 %v790, %v2151
    %v2154 = vadd.f32 %v791, %v2152
    %v2155 = vtanh.pop %v2153
    %v2156 = vtanh.pop %v2154
    %v2159 = vrot.slane %v2155, 2
    %v2160 = vrot.slane %v2156, 2
    %v2163 = vsub.f32 %v1882, %v2159
    %v2164 = vsub.f32 %v1883, %v2160
    %v2167 = vrot.slane %v2163, 6
    %v2168 = vrot.slane %v2164, 6
    %v2171 = vmul.f32 %v2142, %v2167
    %v2172 = vmul.f32 %v2144, %v2168
    %v2173 = vadd.f32 %v2155, %v2171
    %v2174 = vadd.f32 %v2156, %v2172
    %2175 = vst [vmem:[#allocation2] sm:$0xc0] %v2173
    %2176 = vst [vmem:[#allocation2 + $0x8] sm:$0xc0] %v2174
    %v2179 = vrot.slane %v2173, 6
    %v2180 = vrot.slane %v2174, 6
    %2183 = vmatprep.subr.mxu0 %v799
    %2184 = vmatpush1.msra.mxu0 %v798
    %2185 = vmatprep.subr.mxu0 %v805
    %2186 = vmatpush1.msra.mxu0 %v804
    %2187 = vmatprep.subr.mxu0 %v811
    %2188 = vmatpush1.msra.mxu0 %v810
    %2189 = vmatprep.subr.mxu0 %v817
    %2190 = vmatpush1.msra.mxu0 %v816
    %2191 = vmatprep.subr.mxu0 %v823
    %2192 = vmatpush1.msra.mxu0 %v822
    %2193 = vmatprep.subr.mxu0 %v829
    %2194 = vmatpush1.msra.mxu0 %v828
    %2195 = vmatprep.subr.mxu0 %v835
    %2196 = vmatpush1.msra.mxu0 %v834
    %2197 = vmatprep.subr.mxu0 %v841
    %2198 = vmatpush1.msra.mxu0 %v840
    %2199 = vmatprep.subr.mxu0 %v847
    %2200 = vmatpush1.msra.mxu0 %v846
    %2201 = vmatprep.subr.mxu0 %v853
    %2202 = vmatpush1.msra.mxu0 %v852
    %2203 = vmatprep.subr.mxu0 %v859
    %2204 = vmatpush1.msra.mxu0 %v858
    %2205 = vmatprep.subr.mxu0 %v865
    %2206 = vmatpush1.msra.mxu0 %v864
    %2207 = vmatprep.subr.mxu0 %v871
    %2208 = vmatpush1.msra.mxu0 %v870
    %2209 = vmatprep.subr.mxu0 %v877
    %2210 = vmatpush1.msra.mxu0 %v876
    %2211 = vmatprep.subr.mxu0 %v883
    %2212 = vmatpush1.msra.mxu0 %v882
    %2213 = vmatprep.subr.mxu0 %v889
    %2214 = vmatpush1.msra.mxu0 %v888
    %2215 = vmatprep.subr.mxu0 %v895
    %2216 = vmatpush1.msra.mxu0 %v894
    %2217 = vmatprep.subr.mxu0 %v901
    %2218 = vmatpush1.msra.mxu0 %v900
    %2219 = vmatprep.subr.mxu0 %v907
    %2220 = vmatpush1.msra.mxu0 %v906
    %2221 = vmatprep.subr.mxu0 %v913
    %2222 = vmatpush1.msra.mxu0 %v912
    %2223 = vmatprep.subr.mxu0 %v919
    %2224 = vmatpush1.msra.mxu0 %v918
    %2225 = vmatprep.subr.mxu0 %v925
    %2226 = vmatpush1.msra.mxu0 %v924
    %2227 = vmatprep.subr.mxu0 %v931
    %2228 = vmatpush1.msra.mxu0 %v930
    %2229 = vmatprep.subr.mxu0 %v937
    %2230 = vmatpush1.msra.mxu0 %v936
    %2231 = vmatprep.subr.mxu0 %v943
    %2232 = vmatpush1.msra.mxu0 %v942
    %2233 = vmatprep.subr.mxu0 %v949
    %2234 = vmatpush1.msra.mxu0 %v948
    %2235 = vmatprep.subr.mxu0 %v955
    %2236 = vmatpush1.msra.mxu0 %v954
    %2237 = vmatprep.subr.mxu0 %v961
    %2238 = vmatpush1.msra.mxu0 %v960
    %2239 = vmatprep.subr.mxu0 %v967
    %2240 = vmatpush1.msra.mxu0 %v966
    %2241 = vmatprep.subr.mxu0 %v973
    %2242 = vmatpush1.msra.mxu0 %v972
    %2243 = vmatprep.subr.mxu0 %v979
    %2244 = vmatpush1.msra.mxu0 %v978
    %2245 = vmatprep.subr.mxu0 %v985
    %2246 = vmatpush1.msra.mxu0 %v984
    %2247 = vmatprep.mubr.f32.mxu0 %v2180
    %2248 = vmatmul.mubr.f32.gmra.mrb[0].mxu0 %v2179
    %v2249 = vpop.f32.mrb[0].mxu0
    %v2250 = vadd.f32 %v996, %v2249
    %v2251 = vpop.f32.mrb[0].mxu0
    %v2252 = vadd.f32 %v1000, %v2251
    %2253 = vdwg.mxu0
    %2254 = vmatprep.subr.mxu0 %v801
    %2255 = vmatpush1.msra.mxu0 %v800
    %2256 = vmatprep.subr.mxu0 %v807
    %2257 = vmatpush1.msra.mxu0 %v806
    %2258 = vmatprep.subr.mxu0 %v813
    %2259 = vmatpush1.msra.mxu0 %v812
    %2260 = vmatprep.subr.mxu0 %v819
    %2261 = vmatpush1.msra.mxu0 %v818
    %2262 = vmatprep.subr.mxu0 %v825
    %2263 = vmatpush1.msra.mxu0 %v824
    %2264 = vmatprep.subr.mxu0 %v831
    %2265 = vmatpush1.msra.mxu0 %v830
    %2266 = vmatprep.subr.mxu0 %v837
    %2267 = vmatpush1.msra.mxu0 %v836
    %2268 = vmatprep.subr.mxu0 %v843
    %2269 = vmatpush1.msra.mxu0 %v842
    %2270 = vmatprep.subr.mxu0 %v849
    %2271 = vmatpush1.msra.mxu0 %v848
    %2272 = vmatprep.subr.mxu0 %v855
    %2273 = vmatpush1.msra.mxu0 %v854
    %2274 = vmatprep.subr.mxu0 %v861
    %2275 = vmatpush1.msra.mxu0 %v860
    %2276 = vmatprep.subr.mxu0 %v867
    %2277 = vmatpush1.msra.mxu0 %v866
    %2278 = vmatprep.subr.mxu0 %v873
    %2279 = vmatpush1.msra.mxu0 %v872
    %2280 = vmatprep.subr.mxu0 %v879
    %2281 = vmatpush1.msra.mxu0 %v878
    %2282 = vmatprep.subr.mxu0 %v885
    %2283 = vmatpush1.msra.mxu0 %v884
    %2284 = vmatprep.subr.mxu0 %v891
    %2285 = vmatpush1.msra.mxu0 %v890
    %2286 = vmatprep.subr.mxu0 %v897
    %2287 = vmatpush1.msra.mxu0 %v896
    %2288 = vmatprep.subr.mxu0 %v903
    %2289 = vmatpush1.msra.mxu0 %v902
    %2290 = vmatprep.subr.mxu0 %v909
    %2291 = vmatpush1.msra.mxu0 %v908
    %2292 = vmatprep.subr.mxu0 %v915
    %2293 = vmatpush1.msra.mxu0 %v914
    %2294 = vmatprep.subr.mxu0 %v921
    %2295 = vmatpush1.msra.mxu0 %v920
    %2296 = vmatprep.subr.mxu0 %v927
    %2297 = vmatpush1.msra.mxu0 %v926
    %2298 = vmatprep.subr.mxu0 %v933
    %2299 = vmatpush1.msra.mxu0 %v932
    %2300 = vmatprep.subr.mxu0 %v939
    %2301 = vmatpush1.msra.mxu0 %v938
    %2302 = vmatprep.subr.mxu0 %v945
    %2303 = vmatpush1.msra.mxu0 %v944
    %2304 = vmatprep.subr.mxu0 %v951
    %2305 = vmatpush1.msra.mxu0 %v950
    %2306 = vmatprep.subr.mxu0 %v957
    %2307 = vmatpush1.msra.mxu0 %v956
    %2308 = vmatprep.subr.mxu0 %v963
    %2309 = vmatpush1.msra.mxu0 %v962
    %2310 = vmatprep.subr.mxu0 %v969
    %2311 = vmatpush1.msra.mxu0 %v968
    %2312 = vmatprep.subr.mxu0 %v975
    %2313 = vmatpush1.msra.mxu0 %v974
    %2314 = vmatprep.subr.mxu0 %v981
    %2315 = vmatpush1.msra.mxu0 %v980
    %2316 = vmatprep.subr.mxu0 %v987
    %2317 = vmatpush1.msra.mxu0 %v986
    %2318 = vmatprep.mubr.f32.mxu0 %v2180
    %2319 = vmatmul.mubr.f32.gmra.mrb[0].mxu0 %v2179
    %v2320 = vpop.f32.mrb[0].mxu0
    %v2321 = vadd.f32 %v1004, %v2320
    %v2322 = vpop.f32.mrb[0].mxu0
    %v2323 = vadd.f32 %v1008, %v2322
    %2324 = vdwg.mxu0
    %2325 = vmatprep.subr.mxu0 %v803
    %2326 = vmatpush1.msra.mxu0 %v802
    %2327 = vmatprep.subr.mxu0 %v809
    %2328 = vmatpush1.msra.mxu0 %v808
    %2329 = vmatprep.subr.mxu0 %v815
    %2330 = vmatpush1.msra.mxu0 %v814
    %2331 = vmatprep.subr.mxu0 %v821
    %2332 = vmatpush1.msra.mxu0 %v820
    %2333 = vmatprep.subr.mxu0 %v827
    %2334 = vmatpush1.msra.mxu0 %v826
    %2335 = vmatprep.subr.mxu0 %v833
    %2336 = vmatpush1.msra.mxu0 %v832
    %2337 = vmatprep.subr.mxu0 %v839
    %2338 = vmatpush1.msra.mxu0 %v838
    %2339 = vmatprep.subr.mxu0 %v845
    %2340 = vmatpush1.msra.mxu0 %v844
    %2341 = vmatprep.subr.mxu0 %v851
    %2342 = vmatpush1.msra.mxu0 %v850
    %2343 = vmatprep.subr.mxu0 %v857
    %2344 = vmatpush1.msra.mxu0 %v856
    %2345 = vmatprep.subr.mxu0 %v863
    %2346 = vmatpush1.msra.mxu0 %v862
    %2347 = vmatprep.subr.mxu0 %v869
    %2348 = vmatpush1.msra.mxu0 %v868
    %2349 = vmatprep.subr.mxu0 %v875
    %2350 = vmatpush1.msra.mxu0 %v874
    %2351 = vmatprep.subr.mxu0 %v881
    %2352 = vmatpush1.msra.mxu0 %v880
    %2353 = vmatprep.subr.mxu0 %v887
    %2354 = vmatpush1.msra.mxu0 %v886
    %2355 = vmatprep.subr.mxu0 %v893
    %2356 = vmatpush1.msra.mxu0 %v892
    %2357 = vmatprep.subr.mxu0 %v899
    %2358 = vmatpush1.msra.mxu0 %v898
    %2359 = vmatprep.subr.mxu0 %v905
    %2360 = vmatpush1.msra.mxu0 %v904
    %2361 = vmatprep.subr.mxu0 %v911
    %2362 = vmatpush1.msra.mxu0 %v910
    %2363 = vmatprep.subr.mxu0 %v917
    %2364 = vmatpush1.msra.mxu0 %v916
    %2365 = vmatprep.subr.mxu0 %v923
    %2366 = vmatpush1.msra.mxu0 %v922
    %2367 = vmatprep.subr.mxu0 %v929
    %2368 = vmatpush1.msra.mxu0 %v928
    %2369 = vmatprep.subr.mxu0 %v935
    %2370 = vmatpush1.msra.mxu0 %v934
    %2371 = vmatprep.subr.mxu0 %v941
    %2372 = vmatpush1.msra.mxu0 %v940
    %2373 = vmatprep.subr.mxu0 %v947
    %2374 = vmatpush1.msra.mxu0 %v946
    %2375 = vmatprep.subr.mxu0 %v953
    %2376 = vmatpush1.msra.mxu0 %v952
    %2377 = vmatprep.subr.mxu0 %v959
    %2378 = vmatpush1.msra.mxu0 %v958
    %2379 = vmatprep.subr.mxu0 %v965
    %2380 = vmatpush1.msra.mxu0 %v964
    %2381 = vmatprep.subr.mxu0 %v971
    %2382 = vmatpush1.msra.mxu0 %v970
    %2383 = vmatprep.subr.mxu0 %v977
    %2384 = vmatpush1.msra.mxu0 %v976
    %2385 = vmatprep.subr.mxu0 %v983
    %2386 = vmatpush1.msra.mxu0 %v982
    %2387 = vmatprep.subr.mxu0 %v989
    %2388 = vmatpush1.msra.mxu0 %v988
    %2389 = vmatprep.mubr.f32.mxu0 %v2180
    %2390 = vmatmul.mubr.f32.gmra.mrb[0].mxu0 %v2179
    %v2391 = vpop.f32.mrb[0].mxu0
    %v2392 = vadd.f32 %v1012, %v2391
    %v2393 = vpop.f32.mrb[0].mxu0
    %v2394 = vadd.f32 %v1016, %v2393
    %2395 = vdwg.mxu0
    %v2396 = vadd.f32 %v792, %v2250
    %v2397 = vadd.f32 %v793, %v2252
    %v2398 = vxor.u32 %v2396, 2147483648
    %v2399 = vxor.u32 %v2397, 2147483648
    %v2400 = vmul.f32 %v2398, 1.442695
    %v2401 = vpow.pop %v2400
    %v2402 = vmul.f32 %v2399, 1.442695
    %v2403 = vpow.pop %v2402
    %v2404 = vadd.f32 %v2401, 1.0
    %v2405 = vadd.f32 %v2403, 1.0
    %v2406 = vrcp.pop %v2404
    %v2407 = vmul.f32 1.0, %v2406
    %v2408 = vrcp.pop %v2405
    %v2409 = vmul.f32 1.0, %v2408
    %v2410 = vadd.f32 %v794, %v2321
    %v2411 = vadd.f32 %v795, %v2323
    %v2412 = vxor.u32 %v2410, 2147483648
    %v2413 = vxor.u32 %v2411, 2147483648
    %v2414 = vmul.f32 %v2412, 1.442695
    %v2415 = vpow.pop %v2414
    %v2416 = vmul.f32 %v2413, 1.442695
    %v2417 = vpow.pop %v2416
    %v2418 = vadd.f32 %v2415, 1.0
    %v2419 = vadd.f32 %v2417, 1.0
    %v2420 = vrcp.pop %v2418
    %v2421 = vmul.f32 1.0, %v2420
    %v2422 = vrcp.pop %v2419
    %v2423 = vmul.f32 1.0, %v2422
    %v2424 = vmul.f32 %v2407, %v2392
    %v2425 = vmul.f32 %v2409, %v2394
    %v2426 = vadd.f32 %v796, %v2424
    %v2427 = vadd.f32 %v797, %v2425
    %v2428 = vtanh.pop %v2426
    %v2429 = vtanh.pop %v2427
    %v2432 = vrot.slane %v2428, 2
    %v2433 = vrot.slane %v2429, 2
    %v2436 = vsub.f32 %v2173, %v2432
    %v2437 = vsub.f32 %v2174, %v2433
    %v2440 = vrot.slane %v2436, 6
    %v2441 = vrot.slane %v2437, 6
    %v2444 = vmul.f32 %v2421, %v2440
    %v2445 = vmul.f32 %v2423, %v2441
    %v2446 = vadd.f32 %v2428, %v2444
    %v2447 = vadd.f32 %v2429, %v2445
    %2448 = vst [vmem:[#allocation2 + $0x10] sm:$0x3] %v2446
    %2449 = vst [vmem:[#allocation2 + $0x18] sm:$0x3] %v2447
    %2450 = vmatprep.subr.mxu0 %v799
    %2451 = vmatpush1.msra.mxu0 %v798
    %2452 = vmatprep.subr.mxu0 %v805
    %2453 = vmatpush1.msra.mxu0 %v804
    %2454 = vmatprep.subr.mxu0 %v811
    %2455 = vmatpush1.msra.mxu0 %v810
    %2456 = vmatprep.subr.mxu0 %v817
    %2457 = vmatpush1.msra.mxu0 %v816
    %2458 = vmatprep.subr.mxu0 %v823
    %2459 = vmatpush1.msra.mxu0 %v822
    %2460 = vmatprep.subr.mxu0 %v829
    %2461 = vmatpush1.msra.mxu0 %v828
    %2462 = vmatprep.subr.mxu0 %v835
    %2463 = vmatpush1.msra.mxu0 %v834
    %2464 = vmatprep.subr.mxu0 %v841
    %2465 = vmatpush1.msra.mxu0 %v840
    %2466 = vmatprep.subr.mxu0 %v847
    %2467 = vmatpush1.msra.mxu0 %v846
    %2468 = vmatprep.subr.mxu0 %v853
    %2469 = vmatpush1.msra.mxu0 %v852
    %2470 = vmatprep.subr.mxu0 %v859
    %2471 = vmatpush1.msra.mxu0 %v858
    %2472 = vmatprep.subr.mxu0 %v865
    %2473 = vmatpush1.msra.mxu0 %v864
    %2474 = vmatprep.subr.mxu0 %v871
    %2475 = vmatpush1.msra.mxu0 %v870
    %2476 = vmatprep.subr.mxu0 %v877
    %2477 = vmatpush1.msra.mxu0 %v876
    %2478 = vmatprep.subr.mxu0 %v883
    %2479 = vmatpush1.msra.mxu0 %v882
    %2480 = vmatprep.subr.mxu0 %v889
    %2481 = vmatpush1.msra.mxu0 %v888
    %2482 = vmatprep.subr.mxu0 %v895
    %2483 = vmatpush1.msra.mxu0 %v894
    %2484 = vmatprep.subr.mxu0 %v901
    %2485 = vmatpush1.msra.mxu0 %v900
    %2486 = vmatprep.subr.mxu0 %v907
    %2487 = vmatpush1.msra.mxu0 %v906
    %2488 = vmatprep.subr.mxu0 %v913
    %2489 = vmatpush1.msra.mxu0 %v912
    %2490 = vmatprep.subr.mxu0 %v919
    %2491 = vmatpush1.msra.mxu0 %v918
    %2492 = vmatprep.subr.mxu0 %v925
    %2493 = vmatpush1.msra.mxu0 %v924
    %2494 = vmatprep.subr.mxu0 %v931
    %2495 = vmatpush1.msra.mxu0 %v930
    %2496 = vmatprep.subr.mxu0 %v937
    %2497 = vmatpush1.msra.mxu0 %v936
    %2498 = vmatprep.subr.mxu0 %v943
    %2499 = vmatpush1.msra.mxu0 %v942
    %2500 = vmatprep.subr.mxu0 %v949
    %2501 = vmatpush1.msra.mxu0 %v948
    %2502 = vmatprep.subr.mxu0 %v955
    %2503 = vmatpush1.msra.mxu0 %v954
    %2504 = vmatprep.subr.mxu0 %v961
    %2505 = vmatpush1.msra.mxu0 %v960
    %2506 = vmatprep.subr.mxu0 %v967
    %2507 = vmatpush1.msra.mxu0 %v966
    %2508 = vmatprep.subr.mxu0 %v973
    %2509 = vmatpush1.msra.mxu0 %v972
    %2510 = vmatprep.subr.mxu0 %v979
    %2511 = vmatpush1.msra.mxu0 %v978
    %2512 = vmatprep.subr.mxu0 %v985
    %2513 = vmatpush1.msra.mxu0 %v984
    %2514 = vmatprep.mubr.f32.mxu0 %v2447
    %2515 = vmatmul.mubr.f32.gmra.mrb[0].mxu0 %v2446
    %v2516 = vpop.f32.mrb[0].mxu0
    %v2517 = vadd.f32 %v996, %v2516
    %v2518 = vpop.f32.mrb[0].mxu0
    %v2519 = vadd.f32 %v1000, %v2518
    %2520 = vdwg.mxu0
    %2521 = vmatprep.subr.mxu0 %v801
    %2522 = vmatpush1.msra.mxu0 %v800
    %2523 = vmatprep.subr.mxu0 %v807
    %2524 = vmatpush1.msra.mxu0 %v806
    %2525 = vmatprep.subr.mxu0 %v813
    %2526 = vmatpush1.msra.mxu0 %v812
    %2527 = vmatprep.subr.mxu0 %v819
    %2528 = vmatpush1.msra.mxu0 %v818
    %2529 = vmatprep.subr.mxu0 %v825
    %2530 = vmatpush1.msra.mxu0 %v824
    %2531 = vmatprep.subr.mxu0 %v831
    %2532 = vmatpush1.msra.mxu0 %v830
    %2533 = vmatprep.subr.mxu0 %v837
    %2534 = vmatpush1.msra.mxu0 %v836
    %2535 = vmatprep.subr.mxu0 %v843
    %2536 = vmatpush1.msra.mxu0 %v842
    %2537 = vmatprep.subr.mxu0 %v849
    %2538 = vmatpush1.msra.mxu0 %v848
    %2539 = vmatprep.subr.mxu0 %v855
    %2540 = vmatpush1.msra.mxu0 %v854
    %2541 = vmatprep.subr.mxu0 %v861
    %2542 = vmatpush1.msra.mxu0 %v860
    %2543 = vmatprep.subr.mxu0 %v867
    %2544 = vmatpush1.msra.mxu0 %v866
    %2545 = vmatprep.subr.mxu0 %v873
    %2546 = vmatpush1.msra.mxu0 %v872
    %2547 = vmatprep.subr.mxu0 %v879
    %2548 = vmatpush1.msra.mxu0 %v878
    %2549 = vmatprep.subr.mxu0 %v885
    %2550 = vmatpush1.msra.mxu0 %v884
    %2551 = vmatprep.subr.mxu0 %v891
    %2552 = vmatpush1.msra.mxu0 %v890
    %2553 = vmatprep.subr.mxu0 %v897
    %2554 = vmatpush1.msra.mxu0 %v896
    %2555 = vmatprep.subr.mxu0 %v903
    %2556 = vmatpush1.msra.mxu0 %v902
    %2557 = vmatprep.subr.mxu0 %v909
    %2558 = vmatpush1.msra.mxu0 %v908
    %2559 = vmatprep.subr.mxu0 %v915
    %2560 = vmatpush1.msra.mxu0 %v914
    %2561 = vmatprep.subr.mxu0 %v921
    %2562 = vmatpush1.msra.mxu0 %v920
    %2563 = vmatprep.subr.mxu0 %v927
    %2564 = vmatpush1.msra.mxu0 %v926
    %2565 = vmatprep.subr.mxu0 %v933
    %2566 = vmatpush1.msra.mxu0 %v932
    %2567 = vmatprep.subr.mxu0 %v939
    %2568 = vmatpush1.msra.mxu0 %v938
    %2569 = vmatprep.subr.mxu0 %v945
    %2570 = vmatpush1.msra.mxu0 %v944
    %2571 = vmatprep.subr.mxu0 %v951
    %2572 = vmatpush1.msra.mxu0 %v950
    %2573 = vmatprep.subr.mxu0 %v957
    %2574 = vmatpush1.msra.mxu0 %v956
    %2575 = vmatprep.subr.mxu0 %v963
    %2576 = vmatpush1.msra.mxu0 %v962
    %2577 = vmatprep.subr.mxu0 %v969
    %2578 = vmatpush1.msra.mxu0 %v968
    %2579 = vmatprep.subr.mxu0 %v975
    %2580 = vmatpush1.msra.mxu0 %v974
    %2581 = vmatprep.subr.mxu0 %v981
    %2582 = vmatpush1.msra.mxu0 %v980
    %2583 = vmatprep.subr.mxu0 %v987
    %2584 = vmatpush1.msra.mxu0 %v986
    %2585 = vmatprep.mubr.f32.mxu0 %v2447
    %2586 = vmatmul.mubr.f32.gmra.mrb[0].mxu0 %v2446
    %v2587 = vpop.f32.mrb[0].mxu0
    %v2588 = vadd.f32 %v1004, %v2587
    %v2589 = vpop.f32.mrb[0].mxu0
    %v2590 = vadd.f32 %v1008, %v2589
    %2591 = vdwg.mxu0
    %2592 = vmatprep.subr.mxu0 %v803
    %2593 = vmatpush1.msra.mxu0 %v802
    %2594 = vmatprep.subr.mxu0 %v809
    %2595 = vmatpush1.msra.mxu0 %v808
    %2596 = vmatprep.subr.mxu0 %v815
    %2597 = vmatpush1.msra.mxu0 %v814
    %2598 = vmatprep.subr.mxu0 %v821
    %2599 = vmatpush1.msra.mxu0 %v820
    %2600 = vmatprep.subr.mxu0 %v827
    %2601 = vmatpush1.msra.mxu0 %v826
    %2602 = vmatprep.subr.mxu0 %v833
    %2603 = vmatpush1.msra.mxu0 %v832
    %2604 = vmatprep.subr.mxu0 %v839
    %2605 = vmatpush1.msra.mxu0 %v838
    %2606 = vmatprep.subr.mxu0 %v845
    %2607 = vmatpush1.msra.mxu0 %v844
    %2608 = vmatprep.subr.mxu0 %v851
    %2609 = vmatpush1.msra.mxu0 %v850
    %2610 = vmatprep.subr.mxu0 %v857
    %2611 = vmatpush1.msra.mxu0 %v856
    %2612 = vmatprep.subr.mxu0 %v863
    %2613 = vmatpush1.msra.mxu0 %v862
    %2614 = vmatprep.subr.mxu0 %v869
    %2615 = vmatpush1.msra.mxu0 %v868
    %2616 = vmatprep.subr.mxu0 %v875
    %2617 = vmatpush1.msra.mxu0 %v874
    %2618 = vmatprep.subr.mxu0 %v881
    %2619 = vmatpush1.msra.mxu0 %v880
    %2620 = vmatprep.subr.mxu0 %v887
    %2621 = vmatpush1.msra.mxu0 %v886
    %2622 = vmatprep.subr.mxu0 %v893
    %2623 = vmatpush1.msra.mxu0 %v892
    %2624 = vmatprep.subr.mxu0 %v899
    %2625 = vmatpush1.msra.mxu0 %v898
    %2626 = vmatprep.subr.mxu0 %v905
    %2627 = vmatpush1.msra.mxu0 %v904
    %2628 = vmatprep.subr.mxu0 %v911
    %2629 = vmatpush1.msra.mxu0 %v910
    %2630 = vmatprep.subr.mxu0 %v917
    %2631 = vmatpush1.msra.mxu0 %v916
    %2632 = vmatprep.subr.mxu0 %v923
    %2633 = vmatpush1.msra.mxu0 %v922
    %2634 = vmatprep.subr.mxu0 %v929
    %2635 = vmatpush1.msra.mxu0 %v928
    %2636 = vmatprep.subr.mxu0 %v935
    %2637 = vmatpush1.msra.mxu0 %v934
    %2638 = vmatprep.subr.mxu0 %v941
    %2639 = vmatpush1.msra.mxu0 %v940
    %2640 = vmatprep.subr.mxu0 %v947
    %2641 = vmatpush1.msra.mxu0 %v946
    %2642 = vmatprep.subr.mxu0 %v953
    %2643 = vmatpush1.msra.mxu0 %v952
    %2644 = vmatprep.subr.mxu0 %v959
    %2645 = vmatpush1.msra.mxu0 %v958
    %2646 = vmatprep.subr.mxu0 %v965
    %2647 = vmatpush1.msra.mxu0 %v964
    %2648 = vmatprep.subr.mxu0 %v971
    %2649 = vmatpush1.msra.mxu0 %v970
    %2650 = vmatprep.subr.mxu0 %v977
    %2651 = vmatpush1.msra.mxu0 %v976
    %2652 = vmatprep.subr.mxu0 %v983
    %2653 = vmatpush1.msra.mxu0 %v982
    %2654 = vmatprep.subr.mxu0 %v989
    %2655 = vmatpush1.msra.mxu0 %v988
    %2656 = vmatprep.mubr.f32.mxu0 %v2447
    %2657 = vmatmul.mubr.f32.gmra.mrb[0].mxu0 %v2446
    %v2658 = vpop.f32.mrb[0].mxu0
    %v2659 = vadd.f32 %v1012, %v2658
    %v2660 = vpop.f32.mrb[0].mxu0
    %v2661 = vadd.f32 %v1016, %v2660
    %2662 = vdwg.mxu0
    %v2665 = vrot.slane %v2517, 6
    %v2666 = vrot.slane %v2519, 6
    %v2669 = vadd.f32 %v792, %v2665
    %v2670 = vadd.f32 %v793, %v2666
    %v2671 = vxor.u32 %v2669, 2147483648
    %v2672 = vxor.u32 %v2670, 2147483648
    %v2673 = vmul.f32 %v2671, 1.442695
    %v2674 = vpow.pop %v2673
    %v2675 = vmul.f32 %v2672, 1.442695
    %v2676 = vpow.pop %v2675
    %v2677 = vadd.f32 %v2674, 1.0
    %v2678 = vadd.f32 %v2676, 1.0
    %v2679 = vrcp.pop %v2677
    %v2680 = vmul.f32 1.0, %v2679
    %v2681 = vrcp.pop %v2678
    %v2682 = vmul.f32 1.0, %v2681
    %v2685 = vrot.slane %v2588, 6
    %v2686 = vrot.slane %v2590, 6
    %v2689 = vadd.f32 %v794, %v2685
    %v2690 = vadd.f32 %v795, %v2686
    %v2691 = vxor.u32 %v2689, 2147483648
    %v2692 = vxor.u32 %v2690, 2147483648
    %v2693 = vmul.f32 %v2691, 1.442695
    %v2694 = vpow.pop %v2693
    %v2695 = vmul.f32 %v2692, 1.442695
    %v2696 = vpow.pop %v2695
    %v2697 = vadd.f32 %v2694, 1.0
    %v2698 = vadd.f32 %v2696, 1.0
    %v2699 = vrcp.pop %v2697
    %v2700 = vmul.f32 1.0, %v2699
    %v2701 = vrcp.pop %v2698
    %v2702 = vmul.f32 1.0, %v2701
    %v2705 = vrot.slane %v2659, 6
    %v2706 = vrot.slane %v2661, 6
    %v2709 = vmul.f32 %v2680, %v2705
    %v2710 = vmul.f32 %v2682, %v2706
    %v2711 = vadd.f32 %v796, %v2709
    %v2712 = vadd.f32 %v797, %v2710
    %v2713 = vtanh.pop %v2711
    %v2714 = vtanh.pop %v2712
    %v2717 = vrot.slane %v2713, 2
    %v2718 = vrot.slane %v2714, 2
    %v2721 = vsub.f32 %v2446, %v2717
    %v2722 = vsub.f32 %v2447, %v2718
    %v2725 = vrot.slane %v2721, 6
    %v2726 = vrot.slane %v2722, 6
    %v2729 = vmul.f32 %v2700, %v2725
    %v2730 = vmul.f32 %v2702, %v2726
    %v2731 = vadd.f32 %v2713, %v2729
    %v2732 = vadd.f32 %v2714, %v2730
    %2733 = vst [vmem:[#allocation2 + $0x10] sm:$0xc] %v2731
    %2734 = vst [vmem:[#allocation2 + $0x18] sm:$0xc] %v2732
    %v2737 = vrot.slane %v2731, 2
    %v2738 = vrot.slane %v2732, 2
    %2741 = vmatprep.subr.mxu0 %v799
    %2742 = vmatpush1.msra.mxu0 %v798
    %2743 = vmatprep.subr.mxu0 %v805
    %2744 = vmatpush1.msra.mxu0 %v804
    %2745 = vmatprep.subr.mxu0 %v811
    %2746 = vmatpush1.msra.mxu0 %v810
    %2747 = vmatprep.subr.mxu0 %v817
    %2748 = vmatpush1.msra.mxu0 %v816
    %2749 = vmatprep.subr.mxu0 %v823
    %2750 = vmatpush1.msra.mxu0 %v822
    %2751 = vmatprep.subr.mxu0 %v829
    %2752 = vmatpush1.msra.mxu0 %v828
    %2753 = vmatprep.subr.mxu0 %v835
    %2754 = vmatpush1.msra.mxu0 %v834
    %2755 = vmatprep.subr.mxu0 %v841
    %2756 = vmatpush1.msra.mxu0 %v840
    %2757 = vmatprep.subr.mxu0 %v847
    %2758 = vmatpush1.msra.mxu0 %v846
    %2759 = vmatprep.subr.mxu0 %v853
    %2760 = vmatpush1.msra.mxu0 %v852
    %2761 = vmatprep.subr.mxu0 %v859
    %2762 = vmatpush1.msra.mxu0 %v858
    %2763 = vmatprep.subr.mxu0 %v865
    %2764 = vmatpush1.msra.mxu0 %v864
    %2765 = vmatprep.subr.mxu0 %v871
    %2766 = vmatpush1.msra.mxu0 %v870
    %2767 = vmatprep.subr.mxu0 %v877
    %2768 = vmatpush1.msra.mxu0 %v876
    %2769 = vmatprep.subr.mxu0 %v883
    %2770 = vmatpush1.msra.mxu0 %v882
    %2771 = vmatprep.subr.mxu0 %v889
    %2772 = vmatpush1.msra.mxu0 %v888
    %2773 = vmatprep.subr.mxu0 %v895
    %2774 = vmatpush1.msra.mxu0 %v894
    %2775 = vmatprep.subr.mxu0 %v901
    %2776 = vmatpush1.msra.mxu0 %v900
    %2777 = vmatprep.subr.mxu0 %v907
    %2778 = vmatpush1.msra.mxu0 %v906
    %2779 = vmatprep.subr.mxu0 %v913
    %2780 = vmatpush1.msra.mxu0 %v912
    %2781 = vmatprep.subr.mxu0 %v919
    %2782 = vmatpush1.msra.mxu0 %v918
    %2783 = vmatprep.subr.mxu0 %v925
    %2784 = vmatpush1.msra.mxu0 %v924
    %2785 = vmatprep.subr.mxu0 %v931
    %2786 = vmatpush1.msra.mxu0 %v930
    %2787 = vmatprep.subr.mxu0 %v937
    %2788 = vmatpush1.msra.mxu0 %v936
    %2789 = vmatprep.subr.mxu0 %v943
    %2790 = vmatpush1.msra.mxu0 %v942
    %2791 = vmatprep.subr.mxu0 %v949
    %2792 = vmatpush1.msra.mxu0 %v948
    %2793 = vmatprep.subr.mxu0 %v955
    %2794 = vmatpush1.msra.mxu0 %v954
    %2795 = vmatprep.subr.mxu0 %v961
    %2796 = vmatpush1.msra.mxu0 %v960
    %2797 = vmatprep.subr.mxu0 %v967
    %2798 = vmatpush1.msra.mxu0 %v966
    %2799 = vmatprep.subr.mxu0 %v973
    %2800 = vmatpush1.msra.mxu0 %v972
    %2801 = vmatprep.subr.mxu0 %v979
    %2802 = vmatpush1.msra.mxu0 %v978
    %2803 = vmatprep.subr.mxu0 %v985
    %2804 = vmatpush1.msra.mxu0 %v984
    %2805 = vmatprep.mubr.f32.mxu0 %v2738
    %2806 = vmatmul.mubr.f32.gmra.mrb[0].mxu0 %v2737
    %v2807 = vpop.f32.mrb[0].mxu0
    %v2808 = vadd.f32 %v996, %v2807
    %v2809 = vpop.f32.mrb[0].mxu0
    %v2810 = vadd.f32 %v1000, %v2809
    %2811 = vdwg.mxu0
    %2812 = vmatprep.subr.mxu0 %v801
    %2813 = vmatpush1.msra.mxu0 %v800
    %2814 = vmatprep.subr.mxu0 %v807
    %2815 = vmatpush1.msra.mxu0 %v806
    %2816 = vmatprep.subr.mxu0 %v813
    %2817 = vmatpush1.msra.mxu0 %v812
    %2818 = vmatprep.subr.mxu0 %v819
    %2819 = vmatpush1.msra.mxu0 %v818
    %2820 = vmatprep.subr.mxu0 %v825
    %2821 = vmatpush1.msra.mxu0 %v824
    %2822 = vmatprep.subr.mxu0 %v831
    %2823 = vmatpush1.msra.mxu0 %v830
    %2824 = vmatprep.subr.mxu0 %v837
    %2825 = vmatpush1.msra.mxu0 %v836
    %2826 = vmatprep.subr.mxu0 %v843
    %2827 = vmatpush1.msra.mxu0 %v842
    %2828 = vmatprep.subr.mxu0 %v849
    %2829 = vmatpush1.msra.mxu0 %v848
    %2830 = vmatprep.subr.mxu0 %v855
    %2831 = vmatpush1.msra.mxu0 %v854
    %2832 = vmatprep.subr.mxu0 %v861
    %2833 = vmatpush1.msra.mxu0 %v860
    %2834 = vmatprep.subr.mxu0 %v867
    %2835 = vmatpush1.msra.mxu0 %v866
    %2836 = vmatprep.subr.mxu0 %v873
    %2837 = vmatpush1.msra.mxu0 %v872
    %2838 = vmatprep.subr.mxu0 %v879
    %2839 = vmatpush1.msra.mxu0 %v878
    %2840 = vmatprep.subr.mxu0 %v885
    %2841 = vmatpush1.msra.mxu0 %v884
    %2842 = vmatprep.subr.mxu0 %v891
    %2843 = vmatpush1.msra.mxu0 %v890
    %2844 = vmatprep.subr.mxu0 %v897
    %2845 = vmatpush1.msra.mxu0 %v896
    %2846 = vmatprep.subr.mxu0 %v903
    %2847 = vmatpush1.msra.mxu0 %v902
    %2848 = vmatprep.subr.mxu0 %v909
    %2849 = vmatpush1.msra.mxu0 %v908
    %2850 = vmatprep.subr.mxu0 %v915
    %2851 = vmatpush1.msra.mxu0 %v914
    %2852 = vmatprep.subr.mxu0 %v921
    %2853 = vmatpush1.msra.mxu0 %v920
    %2854 = vmatprep.subr.mxu0 %v927
    %2855 = vmatpush1.msra.mxu0 %v926
    %2856 = vmatprep.subr.mxu0 %v933
    %2857 = vmatpush1.msra.mxu0 %v932
    %2858 = vmatprep.subr.mxu0 %v939
    %2859 = vmatpush1.msra.mxu0 %v938
    %2860 = vmatprep.subr.mxu0 %v945
    %2861 = vmatpush1.msra.mxu0 %v944
    %2862 = vmatprep.subr.mxu0 %v951
    %2863 = vmatpush1.msra.mxu0 %v950
    %2864 = vmatprep.subr.mxu0 %v957
    %2865 = vmatpush1.msra.mxu0 %v956
    %2866 = vmatprep.subr.mxu0 %v963
    %2867 = vmatpush1.msra.mxu0 %v962
    %2868 = vmatprep.subr.mxu0 %v969
    %2869 = vmatpush1.msra.mxu0 %v968
    %2870 = vmatprep.subr.mxu0 %v975
    %2871 = vmatpush1.msra.mxu0 %v974
    %2872 = vmatprep.subr.mxu0 %v981
    %2873 = vmatpush1.msra.mxu0 %v980
    %2874 = vmatprep.subr.mxu0 %v987
    %2875 = vmatpush1.msra.mxu0 %v986
    %2876 = vmatprep.mubr.f32.mxu0 %v2738
    %2877 = vmatmul.mubr.f32.gmra.mrb[0].mxu0 %v2737
    %v2878 = vpop.f32.mrb[0].mxu0
    %v2879 = vadd.f32 %v1004, %v2878
    %v2880 = vpop.f32.mrb[0].mxu0
    %v2881 = vadd.f32 %v1008, %v2880
    %2882 = vdwg.mxu0
    %2883 = vmatprep.subr.mxu0 %v803
    %2884 = vmatpush1.msra.mxu0 %v802
    %2885 = vmatprep.subr.mxu0 %v809
    %2886 = vmatpush1.msra.mxu0 %v808
    %2887 = vmatprep.subr.mxu0 %v815
    %2888 = vmatpush1.msra.mxu0 %v814
    %2889 = vmatprep.subr.mxu0 %v821
    %2890 = vmatpush1.msra.mxu0 %v820
    %2891 = vmatprep.subr.mxu0 %v827
    %2892 = vmatpush1.msra.mxu0 %v826
    %2893 = vmatprep.subr.mxu0 %v833
    %2894 = vmatpush1.msra.mxu0 %v832
    %2895 = vmatprep.subr.mxu0 %v839
    %2896 = vmatpush1.msra.mxu0 %v838
    %2897 = vmatprep.subr.mxu0 %v845
    %2898 = vmatpush1.msra.mxu0 %v844
    %2899 = vmatprep.subr.mxu0 %v851
    %2900 = vmatpush1.msra.mxu0 %v850
    %2901 = vmatprep.subr.mxu0 %v857
    %2902 = vmatpush1.msra.mxu0 %v856
    %2903 = vmatprep.subr.mxu0 %v863
    %2904 = vmatpush1.msra.mxu0 %v862
    %2905 = vmatprep.subr.mxu0 %v869
    %2906 = vmatpush1.msra.mxu0 %v868
    %2907 = vmatprep.subr.mxu0 %v875
    %2908 = vmatpush1.msra.mxu0 %v874
    %2909 = vmatprep.subr.mxu0 %v881
    %2910 = vmatpush1.msra.mxu0 %v880
    %2911 = vmatprep.subr.mxu0 %v887
    %2912 = vmatpush1.msra.mxu0 %v886
    %2913 = vmatprep.subr.mxu0 %v893
    %2914 = vmatpush1.msra.mxu0 %v892
    %2915 = vmatprep.subr.mxu0 %v899
    %2916 = vmatpush1.msra.mxu0 %v898
    %2917 = vmatprep.subr.mxu0 %v905
    %2918 = vmatpush1.msra.mxu0 %v904
    %2919 = vmatprep.subr.mxu0 %v911
    %2920 = vmatpush1.msra.mxu0 %v910
    %2921 = vmatprep.subr.mxu0 %v917
    %2922 = vmatpush1.msra.mxu0 %v916
    %2923 = vmatprep.subr.mxu0 %v923
    %2924 = vmatpush1.msra.mxu0 %v922
    %2925 = vmatprep.subr.mxu0 %v929
    %2926 = vmatpush1.msra.mxu0 %v928
    %2927 = vmatprep.subr.mxu0 %v935
    %2928 = vmatpush1.msra.mxu0 %v934
    %2929 = vmatprep.subr.mxu0 %v941
    %2930 = vmatpush1.msra.mxu0 %v940
    %2931 = vmatprep.subr.mxu0 %v947
    %2932 = vmatpush1.msra.mxu0 %v946
    %2933 = vmatprep.subr.mxu0 %v953
    %2934 = vmatpush1.msra.mxu0 %v952
    %2935 = vmatprep.subr.mxu0 %v959
    %2936 = vmatpush1.msra.mxu0 %v958
    %2937 = vmatprep.subr.mxu0 %v965
    %2938 = vmatpush1.msra.mxu0 %v964
    %2939 = vmatprep.subr.mxu0 %v971
    %2940 = vmatpush1.msra.mxu0 %v970
    %2941 = vmatprep.subr.mxu0 %v977
    %2942 = vmatpush1.msra.mxu0 %v976
    %2943 = vmatprep.subr.mxu0 %v983
    %2944 = vmatpush1.msra.mxu0 %v982
    %2945 = vmatprep.subr.mxu0 %v989
    %2946 = vmatpush1.msra.mxu0 %v988
    %2947 = vmatprep.mubr.f32.mxu0 %v2738
    %2948 = vmatmul.mubr.f32.gmra.mrb[0].mxu0 %v2737
    %v2949 = vpop.f32.mrb[0].mxu0
    %v2950 = vadd.f32 %v1012, %v2949
    %v2951 = vpop.f32.mrb[0].mxu0
    %v2952 = vadd.f32 %v1016, %v2951
    %2953 = vdwg.mxu0
    %v2956 = vrot.slane %v2808, 4
    %v2957 = vrot.slane %v2810, 4
    %v2960 = vadd.f32 %v792, %v2956
    %v2961 = vadd.f32 %v793, %v2957
    %v2962 = vxor.u32 %v2960, 2147483648
    %v2963 = vxor.u32 %v2961, 2147483648
    %v2964 = vmul.f32 %v2962, 1.442695
    %v2965 = vpow.pop %v2964
    %v2966 = vmul.f32 %v2963, 1.442695
    %v2967 = vpow.pop %v2966
    %v2968 = vadd.f32 %v2965, 1.0
    %v2969 = vadd.f32 %v2967, 1.0
    %v2970 = vrcp.pop %v2968
    %v2971 = vmul.f32 1.0, %v2970
    %v2972 = vrcp.pop %v2969
    %v2973 = vmul.f32 1.0, %v2972
    %v2976 = vrot.slane %v2879, 4
    %v2977 = vrot.slane %v2881, 4
    %v2980 = vadd.f32 %v794, %v2976
    %v2981 = vadd.f32 %v795, %v2977
    %v2982 = vxor.u32 %v2980, 2147483648
    %v2983 = vxor.u32 %v2981, 2147483648
    %v2984 = vmul.f32 %v2982, 1.442695
    %v2985 = vpow.pop %v2984
    %v2986 = vmul.f32 %v2983, 1.442695
    %v2987 = vpow.pop %v2986
    %v2988 = vadd.f32 %v2985, 1.0
    %v2989 = vadd.f32 %v2987, 1.0
    %v2990 = vrcp.pop %v2988
    %v2991 = vmul.f32 1.0, %v2990
    %v2992 = vrcp.pop %v2989
    %v2993 = vmul.f32 1.0, %v2992
    %v2996 = vrot.slane %v2950, 4
    %v2997 = vrot.slane %v2952, 4
    %v3000 = vmul.f32 %v2971, %v2996
    %v3001 = vmul.f32 %v2973, %v2997
    %v3002 = vadd.f32 %v796, %v3000
    %v3003 = vadd.f32 %v797, %v3001
    %v3004 = vtanh.pop %v3002
    %v3005 = vtanh.pop %v3003
    %v3008 = vrot.slane %v3004, 2
    %v3009 = vrot.slane %v3005, 2
    %v3012 = vsub.f32 %v2731, %v3008
    %v3013 = vsub.f32 %v2732, %v3009
    %v3016 = vrot.slane %v3012, 6
    %v3017 = vrot.slane %v3013, 6
    %v3020 = vmul.f32 %v2991, %v3016
    %v3021 = vmul.f32 %v2993, %v3017
    %v3022 = vadd.f32 %v3004, %v3020
    %v3023 = vadd.f32 %v3005, %v3021
    %3024 = vst [vmem:[#allocation2 + $0x10] sm:$0x30] %v3022
    %3025 = vst [vmem:[#allocation2 + $0x18] sm:$0x30] %v3023
    %v3028 = vrot.slane %v3022, 4
    %v3029 = vrot.slane %v3023, 4
    %3032 = vmatprep.subr.mxu0 %v799
    %3033 = vmatpush1.msra.mxu0 %v798
    %3034 = vmatprep.subr.mxu0 %v805
    %3035 = vmatpush1.msra.mxu0 %v804
    %3036 = vmatprep.subr.mxu0 %v811
    %3037 = vmatpush1.msra.mxu0 %v810
    %3038 = vmatprep.subr.mxu0 %v817
    %3039 = vmatpush1.msra.mxu0 %v816
    %3040 = vmatprep.subr.mxu0 %v823
    %3041 = vmatpush1.msra.mxu0 %v822
    %3042 = vmatprep.subr.mxu0 %v829
    %3043 = vmatpush1.msra.mxu0 %v828
    %3044 = vmatprep.subr.mxu0 %v835
    %3045 = vmatpush1.msra.mxu0 %v834
    %3046 = vmatprep.subr.mxu0 %v841
    %3047 = vmatpush1.msra.mxu0 %v840
    %3048 = vmatprep.subr.mxu0 %v847
    %3049 = vmatpush1.msra.mxu0 %v846
    %3050 = vmatprep.subr.mxu0 %v853
    %3051 = vmatpush1.msra.mxu0 %v852
    %3052 = vmatprep.subr.mxu0 %v859
    %3053 = vmatpush1.msra.mxu0 %v858
    %3054 = vmatprep.subr.mxu0 %v865
    %3055 = vmatpush1.msra.mxu0 %v864
    %3056 = vmatprep.subr.mxu0 %v871
    %3057 = vmatpush1.msra.mxu0 %v870
    %3058 = vmatprep.subr.mxu0 %v877
    %3059 = vmatpush1.msra.mxu0 %v876
    %3060 = vmatprep.subr.mxu0 %v883
    %3061 = vmatpush1.msra.mxu0 %v882
    %3062 = vmatprep.subr.mxu0 %v889
    %3063 = vmatpush1.msra.mxu0 %v888
    %3064 = vmatprep.subr.mxu0 %v895
    %3065 = vmatpush1.msra.mxu0 %v894
    %3066 = vmatprep.subr.mxu0 %v901
    %3067 = vmatpush1.msra.mxu0 %v900
    %3068 = vmatprep.subr.mxu0 %v907
    %3069 = vmatpush1.msra.mxu0 %v906
    %3070 = vmatprep.subr.mxu0 %v913
    %3071 = vmatpush1.msra.mxu0 %v912
    %3072 = vmatprep.subr.mxu0 %v919
    %3073 = vmatpush1.msra.mxu0 %v918
    %3074 = vmatprep.subr.mxu0 %v925
    %3075 = vmatpush1.msra.mxu0 %v924
    %3076 = vmatprep.subr.mxu0 %v931
    %3077 = vmatpush1.msra.mxu0 %v930
    %3078 = vmatprep.subr.mxu0 %v937
    %3079 = vmatpush1.msra.mxu0 %v936
    %3080 = vmatprep.subr.mxu0 %v943
    %3081 = vmatpush1.msra.mxu0 %v942
    %3082 = vmatprep.subr.mxu0 %v949
    %3083 = vmatpush1.msra.mxu0 %v948
    %3084 = vmatprep.subr.mxu0 %v955
    %3085 = vmatpush1.msra.mxu0 %v954
    %3086 = vmatprep.subr.mxu0 %v961
    %3087 = vmatpush1.msra.mxu0 %v960
    %3088 = vmatprep.subr.mxu0 %v967
    %3089 = vmatpush1.msra.mxu0 %v966
    %3090 = vmatprep.subr.mxu0 %v973
    %3091 = vmatpush1.msra.mxu0 %v972
    %3092 = vmatprep.subr.mxu0 %v979
    %3093 = vmatpush1.msra.mxu0 %v978
    %3094 = vmatprep.subr.mxu0 %v985
    %3095 = vmatpush1.msra.mxu0 %v984
    %3096 = vmatprep.mubr.f32.mxu0 %v3029
    %3097 = vmatmul.mubr.f32.gmra.mrb[0].mxu0 %v3028
    %v3098 = vpop.f32.mrb[0].mxu0
    %v3099 = vadd.f32 %v996, %v3098
    %v3100 = vpop.f32.mrb[0].mxu0
    %v3101 = vadd.f32 %v1000, %v3100
    %3102 = vdwg.mxu0
    %3103 = vmatprep.subr.mxu0 %v801
    %3104 = vmatpush1.msra.mxu0 %v800
    %3105 = vmatprep.subr.mxu0 %v807
    %3106 = vmatpush1.msra.mxu0 %v806
    %3107 = vmatprep.subr.mxu0 %v813
    %3108 = vmatpush1.msra.mxu0 %v812
    %3109 = vmatprep.subr.mxu0 %v819
    %3110 = vmatpush1.msra.mxu0 %v818
    %3111 = vmatprep.subr.mxu0 %v825
    %3112 = vmatpush1.msra.mxu0 %v824
    %3113 = vmatprep.subr.mxu0 %v831
    %3114 = vmatpush1.msra.mxu0 %v830
    %3115 = vmatprep.subr.mxu0 %v837
    %3116 = vmatpush1.msra.mxu0 %v836
    %3117 = vmatprep.subr.mxu0 %v843
    %3118 = vmatpush1.msra.mxu0 %v842
    %3119 = vmatprep.subr.mxu0 %v849
    %3120 = vmatpush1.msra.mxu0 %v848
    %3121 = vmatprep.subr.mxu0 %v855
    %3122 = vmatpush1.msra.mxu0 %v854
    %3123 = vmatprep.subr.mxu0 %v861
    %3124 = vmatpush1.msra.mxu0 %v860
    %3125 = vmatprep.subr.mxu0 %v867
    %3126 = vmatpush1.msra.mxu0 %v866
    %3127 = vmatprep.subr.mxu0 %v873
    %3128 = vmatpush1.msra.mxu0 %v872
    %3129 = vmatprep.subr.mxu0 %v879
    %3130 = vmatpush1.msra.mxu0 %v878
    %3131 = vmatprep.subr.mxu0 %v885
    %3132 = vmatpush1.msra.mxu0 %v884
    %3133 = vmatprep.subr.mxu0 %v891
    %3134 = vmatpush1.msra.mxu0 %v890
    %3135 = vmatprep.subr.mxu0 %v897
    %3136 = vmatpush1.msra.mxu0 %v896
    %3137 = vmatprep.subr.mxu0 %v903
    %3138 = vmatpush1.msra.mxu0 %v902
    %3139 = vmatprep.subr.mxu0 %v909
    %3140 = vmatpush1.msra.mxu0 %v908
    %3141 = vmatprep.subr.mxu0 %v915
    %3142 = vmatpush1.msra.mxu0 %v914
    %3143 = vmatprep.subr.mxu0 %v921
    %3144 = vmatpush1.msra.mxu0 %v920
    %3145 = vmatprep.subr.mxu0 %v927
    %3146 = vmatpush1.msra.mxu0 %v926
    %3147 = vmatprep.subr.mxu0 %v933
    %3148 = vmatpush1.msra.mxu0 %v932
    %3149 = vmatprep.subr.mxu0 %v939
    %3150 = vmatpush1.msra.mxu0 %v938
    %3151 = vmatprep.subr.mxu0 %v945
    %3152 = vmatpush1.msra.mxu0 %v944
    %3153 = vmatprep.subr.mxu0 %v951
    %3154 = vmatpush1.msra.mxu0 %v950
    %3155 = vmatprep.subr.mxu0 %v957
    %3156 = vmatpush1.msra.mxu0 %v956
    %3157 = vmatprep.subr.mxu0 %v963
    %3158 = vmatpush1.msra.mxu0 %v962
    %3159 = vmatprep.subr.mxu0 %v969
    %3160 = vmatpush1.msra.mxu0 %v968
    %3161 = vmatprep.subr.mxu0 %v975
    %3162 = vmatpush1.msra.mxu0 %v974
    %3163 = vmatprep.subr.mxu0 %v981
    %3164 = vmatpush1.msra.mxu0 %v980
    %3165 = vmatprep.subr.mxu0 %v987
    %3166 = vmatpush1.msra.mxu0 %v986
    %3167 = vmatprep.mubr.f32.mxu0 %v3029
    %3168 = vmatmul.mubr.f32.gmra.mrb[0].mxu0 %v3028
    %v3169 = vpop.f32.mrb[0].mxu0
    %v3170 = vadd.f32 %v1004, %v3169
    %v3171 = vpop.f32.mrb[0].mxu0
    %v3172 = vadd.f32 %v1008, %v3171
    %3173 = vdwg.mxu0
    %3174 = vmatprep.subr.mxu0 %v803
    %3175 = vmatpush1.msra.mxu0 %v802
    %3176 = vmatprep.subr.mxu0 %v809
    %3177 = vmatpush1.msra.mxu0 %v808
    %3178 = vmatprep.subr.mxu0 %v815
    %3179 = vmatpush1.msra.mxu0 %v814
    %3180 = vmatprep.subr.mxu0 %v821
    %3181 = vmatpush1.msra.mxu0 %v820
    %3182 = vmatprep.subr.mxu0 %v827
    %3183 = vmatpush1.msra.mxu0 %v826
    %3184 = vmatprep.subr.mxu0 %v833
    %3185 = vmatpush1.msra.mxu0 %v832
    %3186 = vmatprep.subr.mxu0 %v839
    %3187 = vmatpush1.msra.mxu0 %v838
    %3188 = vmatprep.subr.mxu0 %v845
    %3189 = vmatpush1.msra.mxu0 %v844
    %3190 = vmatprep.subr.mxu0 %v851
    %3191 = vmatpush1.msra.mxu0 %v850
    %3192 = vmatprep.subr.mxu0 %v857
    %3193 = vmatpush1.msra.mxu0 %v856
    %3194 = vmatprep.subr.mxu0 %v863
    %3195 = vmatpush1.msra.mxu0 %v862
    %3196 = vmatprep.subr.mxu0 %v869
    %3197 = vmatpush1.msra.mxu0 %v868
    %3198 = vmatprep.subr.mxu0 %v875
    %3199 = vmatpush1.msra.mxu0 %v874
    %3200 = vmatprep.subr.mxu0 %v881
    %3201 = vmatpush1.msra.mxu0 %v880
    %3202 = vmatprep.subr.mxu0 %v887
    %3203 = vmatpush1.msra.mxu0 %v886
    %3204 = vmatprep.subr.mxu0 %v893
    %3205 = vmatpush1.msra.mxu0 %v892
    %3206 = vmatprep.subr.mxu0 %v899
    %3207 = vmatpush1.msra.mxu0 %v898
    %3208 = vmatprep.subr.mxu0 %v905
    %3209 = vmatpush1.msra.mxu0 %v904
    %3210 = vmatprep.subr.mxu0 %v911
    %3211 = vmatpush1.msra.mxu0 %v910
    %3212 = vmatprep.subr.mxu0 %v917
    %3213 = vmatpush1.msra.mxu0 %v916
    %3214 = vmatprep.subr.mxu0 %v923
    %3215 = vmatpush1.msra.mxu0 %v922
    %3216 = vmatprep.subr.mxu0 %v929
    %3217 = vmatpush1.msra.mxu0 %v928
    %3218 = vmatprep.subr.mxu0 %v935
    %3219 = vmatpush1.msra.mxu0 %v934
    %3220 = vmatprep.subr.mxu0 %v941
    %3221 = vmatpush1.msra.mxu0 %v940
    %3222 = vmatprep.subr.mxu0 %v947
    %3223 = vmatpush1.msra.mxu0 %v946
    %3224 = vmatprep.subr.mxu0 %v953
    %3225 = vmatpush1.msra.mxu0 %v952
    %3226 = vmatprep.subr.mxu0 %v959
    %3227 = vmatpush1.msra.mxu0 %v958
    %3228 = vmatprep.subr.mxu0 %v965
    %3229 = vmatpush1.msra.mxu0 %v964
    %3230 = vmatprep.subr.mxu0 %v971
    %3231 = vmatpush1.msra.mxu0 %v970
    %3232 = vmatprep.subr.mxu0 %v977
    %3233 = vmatpush1.msra.mxu0 %v976
    %3234 = vmatprep.subr.mxu0 %v983
    %3235 = vmatpush1.msra.mxu0 %v982
    %3236 = vmatprep.subr.mxu0 %v989
    %3237 = vmatpush1.msra.mxu0 %v988
    %3238 = vmatprep.mubr.f32.mxu0 %v3029
    %3239 = vmatmul.mubr.f32.gmra.mrb[0].mxu0 %v3028
    %v3240 = vpop.f32.mrb[0].mxu0
    %v3241 = vadd.f32 %v1012, %v3240
    %v3242 = vpop.f32.mrb[0].mxu0
    %v3243 = vadd.f32 %v1016, %v3242
    %3244 = vdwg.mxu0
    %v3247 = vrot.slane %v3099, 2
    %v3248 = vrot.slane %v3101, 2
    %v3251 = vadd.f32 %v792, %v3247
    %v3252 = vadd.f32 %v793, %v3248
    %v3253 = vxor.u32 %v3251, 2147483648
    %v3254 = vxor.u32 %v3252, 2147483648
    %v3255 = vmul.f32 %v3253, 1.442695
    %v3256 = vpow.pop %v3255
    %v3257 = vmul.f32 %v3254, 1.442695
    %v3258 = vpow.pop %v3257
    %v3259 = vadd.f32 %v3256, 1.0
    %v3260 = vadd.f32 %v3258, 1.0
    %v3261 = vrcp.pop %v3259
    %v3262 = vmul.f32 1.0, %v3261
    %v3263 = vrcp.pop %v3260
    %v3264 = vmul.f32 1.0, %v3263
    %v3267 = vrot.slane %v3170, 2
    %v3268 = vrot.slane %v3172, 2
    %v3271 = vadd.f32 %v794, %v3267
    %v3272 = vadd.f32 %v795, %v3268
    %v3273 = vxor.u32 %v3271, 2147483648
    %v3274 = vxor.u32 %v3272, 2147483648
    %v3275 = vmul.f32 %v3273, 1.442695
    %v3276 = vpow.pop %v3275
    %v3277 = vmul.f32 %v3274, 1.442695
    %v3278 = vpow.pop %v3277
    %v3279 = vadd.f32 %v3276, 1.0
    %v3280 = vadd.f32 %v3278, 1.0
    %v3281 = vrcp.pop %v3279
    %v3282 = vmul.f32 1.0, %v3281
    %v3283 = vrcp.pop %v3280
    %v3284 = vmul.f32 1.0, %v3283
    %v3287 = vrot.slane %v3241, 2
    %v3288 = vrot.slane %v3243, 2
    %v3291 = vmul.f32 %v3262, %v3287
    %v3292 = vmul.f32 %v3264, %v3288
    %v3293 = vadd.f32 %v796, %v3291
    %v3294 = vadd.f32 %v797, %v3292
    %v3295 = vtanh.pop %v3293
    %v3296 = vtanh.pop %v3294
    %v3299 = vrot.slane %v3295, 2
    %v3300 = vrot.slane %v3296, 2
    %v3303 = vsub.f32 %v3022, %v3299
    %v3304 = vsub.f32 %v3023, %v3300
    %v3307 = vrot.slane %v3303, 6
    %v3308 = vrot.slane %v3304, 6
    %v3311 = vmul.f32 %v3282, %v3307
    %v3312 = vmul.f32 %v3284, %v3308
    %v3313 = vadd.f32 %v3295, %v3311
    %v3314 = vadd.f32 %v3296, %v3312
    %3315 = vst [vmem:[#allocation2 + $0x10] sm:$0xc0] %v3313
    %3316 = vst [vmem:[#allocation2 + $0x18] sm:$0xc0] %v3314
    %v3319 = vcombine.high %v3313, %v3314
    %v3321 = vunpack.c.l.s4 1983009808
    %v3322 = vunpack.c.0.s8 %v3321
    %v3323 = vlaneseq
    %v3324 = vshrl.u32 %v3323, 7
    %v3325 = vsub.s32 %v3322, %v3324
    %v3326 = vrot.slane %v3319, %v3325
    %v3327 = vcombine.high %v3326, %v3326
    %3329 = vst [vmem:[#allocation12] sm:$0xf] %v3327
    %v3330 = vld [vmem:[#allocation2] sm:$0xff]
    %v3331 = vld [vmem:[#allocation2 + $0x8] sm:$0xff]
    %v3332 = vld [vmem:[#allocation2 + $0x10] sm:$0xff]
    %v3333 = vld [vmem:[#allocation2 + $0x18] sm:$0xff]
    %v3334 = vld [vmem:[#allocation8] sm:$0xff]
    %v3335 = vld [vmem:[#allocation8 + $0x8] sm:$0xff]
    %v3336 = vld [vmem:[#allocation8 + $0x10] sm:$0xff]
    %v3337 = vld [vmem:[#allocation8 + $0x18] sm:$0xff]
    %v3338 = vld [vmem:[#allocation8 + $0x20] sm:$0xff]
    %v3339 = vld [vmem:[#allocation8 + $0x28] sm:$0xff]
    %v3340 = vld [vmem:[#allocation8 + $0x30] sm:$0xff]
    %v3341 = vld [vmem:[#allocation8 + $0x38] sm:$0xff]
    %v3342 = vld [vmem:[#allocation8 + $0x40] sm:$0xff]
    %v3343 = vld [vmem:[#allocation8 + $0x48] sm:$0xff]
    %v3344 = vld [vmem:[#allocation8 + $0x50] sm:$0xff]
    %v3345 = vld [vmem:[#allocation8 + $0x58] sm:$0xff]
    %v3346 = vld [vmem:[#allocation8 + $0x60] sm:$0xff]
    %v3347 = vld [vmem:[#allocation8 + $0x68] sm:$0xff]
    %v3348 = vld [vmem:[#allocation8 + $0x70] sm:$0xff]
    %v3349 = vld [vmem:[#allocation8 + $0x78] sm:$0xff]
    %v3350 = vld [vmem:[#allocation8 + $0x80] sm:$0xff]
    %v3351 = vld [vmem:[#allocation8 + $0x88] sm:$0xff]
    %v3352 = vld [vmem:[#allocation8 + $0x90] sm:$0xff]
    %v3353 = vld [vmem:[#allocation8 + $0x98] sm:$0xff]
    %v3354 = vld [vmem:[#allocation8 + $0xa0] sm:$0xff]
    %v3355 = vld [vmem:[#allocation8 + $0xa8] sm:$0xff]
    %v3356 = vld [vmem:[#allocation8 + $0xb0] sm:$0xff]
    %v3357 = vld [vmem:[#allocation8 + $0xb8] sm:$0xff]
    %v3358 = vld [vmem:[#allocation8 + $0xc0] sm:$0xff]
    %v3359 = vld [vmem:[#allocation8 + $0xc8] sm:$0xff]
    %v3360 = vld [vmem:[#allocation8 + $0xd0] sm:$0xff]
    %v3361 = vld [vmem:[#allocation8 + $0xd8] sm:$0xff]
    %v3362 = vld [vmem:[#allocation8 + $0xe0] sm:$0xff]
    %v3363 = vld [vmem:[#allocation8 + $0xe8] sm:$0xff]
    %v3364 = vld [vmem:[#allocation8 + $0xf0] sm:$0xff]
    %v3365 = vld [vmem:[#allocation8 + $0xf8] sm:$0xff]
    %v3366 = vld [vmem:[#allocation8 + $0x100] sm:$0xff]
    %v3367 = vld [vmem:[#allocation8 + $0x108] sm:$0xff]
    %v3368 = vld [vmem:[#allocation8 + $0x110] sm:$0xff]
    %v3369 = vld [vmem:[#allocation8 + $0x118] sm:$0xff]
    %v3370 = vld [vmem:[#allocation8 + $0x120] sm:$0xff]
    %v3371 = vld [vmem:[#allocation8 + $0x128] sm:$0xff]
    %v3372 = vld [vmem:[#allocation8 + $0x130] sm:$0xff]
    %v3373 = vld [vmem:[#allocation8 + $0x138] sm:$0xff]
    %v3374 = vld [vmem:[#allocation8 + $0x140] sm:$0xff]
    %v3375 = vld [vmem:[#allocation8 + $0x148] sm:$0xff]
    %v3376 = vld [vmem:[#allocation8 + $0x150] sm:$0xff]
    %v3377 = vld [vmem:[#allocation8 + $0x158] sm:$0xff]
    %v3378 = vld [vmem:[#allocation8 + $0x160] sm:$0xff]
    %v3379 = vld [vmem:[#allocation8 + $0x168] sm:$0xff]
    %v3380 = vld [vmem:[#allocation8 + $0x170] sm:$0xff]
    %v3381 = vld [vmem:[#allocation8 + $0x178] sm:$0xff]
    %v3382 = vld [vmem:[#allocation8 + $0x180] sm:$0xff]
    %v3383 = vld [vmem:[#allocation8 + $0x188] sm:$0xff]
    %v3384 = vld [vmem:[#allocation8 + $0x190] sm:$0xff]
    %v3385 = vld [vmem:[#allocation8 + $0x198] sm:$0xff]
    %v3386 = vld [vmem:[#allocation8 + $0x1a0] sm:$0xff]
    %v3387 = vld [vmem:[#allocation8 + $0x1a8] sm:$0xff]
    %v3388 = vld [vmem:[#allocation8 + $0x1b0] sm:$0xff]
    %v3389 = vld [vmem:[#allocation8 + $0x1b8] sm:$0xff]
    %v3390 = vld [vmem:[#allocation8 + $0x1c0] sm:$0xff]
    %v3391 = vld [vmem:[#allocation8 + $0x1c8] sm:$0xff]
    %v3392 = vld [vmem:[#allocation8 + $0x1d0] sm:$0xff]
    %v3393 = vld [vmem:[#allocation8 + $0x1d8] sm:$0xff]
    %v3394 = vld [vmem:[#allocation8 + $0x1e0] sm:$0xff]
    %v3395 = vld [vmem:[#allocation8 + $0x1e8] sm:$0xff]
    %v3396 = vld [vmem:[#allocation8 + $0x1f0] sm:$0xff]
    %v3397 = vld [vmem:[#allocation8 + $0x1f8] sm:$0xff]
    %v3398 = vld [vmem:[#allocation8 + $0x200] sm:$0xff]
    %v3399 = vld [vmem:[#allocation8 + $0x208] sm:$0xff]
    %v3400 = vld [vmem:[#allocation8 + $0x210] sm:$0xff]
    %v3401 = vld [vmem:[#allocation8 + $0x218] sm:$0xff]
    %v3402 = vld [vmem:[#allocation8 + $0x220] sm:$0xff]
    %v3403 = vld [vmem:[#allocation8 + $0x228] sm:$0xff]
    %v3404 = vld [vmem:[#allocation8 + $0x230] sm:$0xff]
    %v3405 = vld [vmem:[#allocation8 + $0x238] sm:$0xff]
    %v3406 = vld [vmem:[#allocation8 + $0x240] sm:$0xff]
    %v3407 = vld [vmem:[#allocation8 + $0x248] sm:$0xff]
    %v3408 = vld [vmem:[#allocation8 + $0x250] sm:$0xff]
    %v3409 = vld [vmem:[#allocation8 + $0x258] sm:$0xff]
    %v3410 = vld [vmem:[#allocation8 + $0x260] sm:$0xff]
    %v3411 = vld [vmem:[#allocation8 + $0x268] sm:$0xff]
    %v3412 = vld [vmem:[#allocation8 + $0x270] sm:$0xff]
    %v3413 = vld [vmem:[#allocation8 + $0x278] sm:$0xff]
    %v3414 = vld [vmem:[#allocation8 + $0x280] sm:$0xff]
    %v3415 = vld [vmem:[#allocation8 + $0x288] sm:$0xff]
    %v3416 = vld [vmem:[#allocation8 + $0x290] sm:$0xff]
    %v3417 = vld [vmem:[#allocation8 + $0x298] sm:$0xff]
    %v3418 = vld [vmem:[#allocation8 + $0x2a0] sm:$0xff]
    %v3419 = vld [vmem:[#allocation8 + $0x2a8] sm:$0xff]
    %v3420 = vld [vmem:[#allocation8 + $0x2b0] sm:$0xff]
    %v3421 = vld [vmem:[#allocation8 + $0x2b8] sm:$0xff]
    %v3422 = vld [vmem:[#allocation8 + $0x2c0] sm:$0xff]
    %v3423 = vld [vmem:[#allocation8 + $0x2c8] sm:$0xff]
    %v3424 = vld [vmem:[#allocation8 + $0x2d0] sm:$0xff]
    %v3425 = vld [vmem:[#allocation8 + $0x2d8] sm:$0xff]
    %v3426 = vld [vmem:[#allocation8 + $0x2e0] sm:$0xff]
    %v3427 = vld [vmem:[#allocation8 + $0x2e8] sm:$0xff]
    %v3428 = vld [vmem:[#allocation8 + $0x2f0] sm:$0xff]
    %v3429 = vld [vmem:[#allocation8 + $0x2f8] sm:$0xff]
    %v3430 = vld [vmem:[#allocation8 + $0x300] sm:$0xff]
    %v3431 = vld [vmem:[#allocation8 + $0x308] sm:$0xff]
    %v3432 = vld [vmem:[#allocation8 + $0x310] sm:$0xff]
    %v3433 = vld [vmem:[#allocation8 + $0x318] sm:$0xff]
    %v3434 = vld [vmem:[#allocation8 + $0x320] sm:$0xff]
    %v3435 = vld [vmem:[#allocation8 + $0x328] sm:$0xff]
    %v3436 = vld [vmem:[#allocation8 + $0x330] sm:$0xff]
    %v3437 = vld [vmem:[#allocation8 + $0x338] sm:$0xff]
    %v3438 = vld [vmem:[#allocation8 + $0x340] sm:$0xff]
    %v3439 = vld [vmem:[#allocation8 + $0x348] sm:$0xff]
    %v3440 = vld [vmem:[#allocation8 + $0x350] sm:$0xff]
    %v3441 = vld [vmem:[#allocation8 + $0x358] sm:$0xff]
    %v3442 = vld [vmem:[#allocation8 + $0x360] sm:$0xff]
    %v3443 = vld [vmem:[#allocation8 + $0x368] sm:$0xff]
    %v3444 = vld [vmem:[#allocation8 + $0x370] sm:$0xff]
    %v3445 = vld [vmem:[#allocation8 + $0x378] sm:$0xff]
    %v3446 = vld [vmem:[#allocation8 + $0x380] sm:$0xff]
    %v3447 = vld [vmem:[#allocation8 + $0x388] sm:$0xff]
    %v3448 = vld [vmem:[#allocation8 + $0x390] sm:$0xff]
    %v3449 = vld [vmem:[#allocation8 + $0x398] sm:$0xff]
    %v3450 = vld [vmem:[#allocation8 + $0x3a0] sm:$0xff]
    %v3451 = vld [vmem:[#allocation8 + $0x3a8] sm:$0xff]
    %v3452 = vld [vmem:[#allocation8 + $0x3b0] sm:$0xff]
    %v3453 = vld [vmem:[#allocation8 + $0x3b8] sm:$0xff]
    %v3454 = vld [vmem:[#allocation8 + $0x3c0] sm:$0xff]
    %v3455 = vld [vmem:[#allocation8 + $0x3c8] sm:$0xff]
    %v3456 = vld [vmem:[#allocation8 + $0x3d0] sm:$0xff]
    %v3457 = vld [vmem:[#allocation8 + $0x3d8] sm:$0xff]
    %v3458 = vld [vmem:[#allocation8 + $0x3e0] sm:$0xff]
    %v3459 = vld [vmem:[#allocation8 + $0x3e8] sm:$0xff]
    %v3460 = vld [vmem:[#allocation8 + $0x3f0] sm:$0xff]
    %v3461 = vld [vmem:[#allocation8 + $0x3f8] sm:$0xff]
    %v3462 = vld [vmem:[%s9] sm:$0xf]
    %v3464 = vlaneseq
    %v3465 = vshrl.u32 %v3464, 7
    %v3466 = vsub.s32 0, %v3465
    %v3467 = vrot.slane %v3462, %v3466
    %v3468 = vlaneseq
    %v3469 = vshrl.u32 %v3468, 7
    %v3470 = vsub.s32 1, %v3469
    %v3471 = vrot.slane %v3462, %v3470
    %v3472 = vlaneseq
    %v3473 = vshrl.u32 %v3472, 7
    %v3474 = vsub.s32 2, %v3473
    %v3475 = vrot.slane %v3462, %v3474
    %v3476 = vlaneseq
    %v3477 = vshrl.u32 %v3476, 7
    %v3478 = vsub.s32 3, %v3477
    %v3479 = vrot.slane %v3462, %v3478
    %3484 = vmatprep.subr.mxu0 %v3335
    %3485 = vmatpush1.msra.mxu0 %v3334
    %3486 = vmatprep.subr.mxu0 %v3339
    %3487 = vmatpush1.msra.mxu0 %v3338
    %3488 = vmatprep.subr.mxu0 %v3343
    %3489 = vmatpush1.msra.mxu0 %v3342
    %3490 = vmatprep.subr.mxu0 %v3347
    %3491 = vmatpush1.msra.mxu0 %v3346
    %3492 = vmatprep.subr.mxu0 %v3351
    %3493 = vmatpush1.msra.mxu0 %v3350
    %3494 = vmatprep.subr.mxu0 %v3355
    %3495 = vmatpush1.msra.mxu0 %v3354
    %3496 = vmatprep.subr.mxu0 %v3359
    %3497 = vmatpush1.msra.mxu0 %v3358
    %3498 = vmatprep.subr.mxu0 %v3363
    %3499 = vmatpush1.msra.mxu0 %v3362
    %3500 = vmatprep.subr.mxu0 %v3367
    %3501 = vmatpush1.msra.mxu0 %v3366
    %3502 = vmatprep.subr.mxu0 %v3371
    %3503 = vmatpush1.msra.mxu0 %v3370
    %3504 = vmatprep.subr.mxu0 %v3375
    %3505 = vmatpush1.msra.mxu0 %v3374
    %3506 = vmatprep.subr.mxu0 %v3379
    %3507 = vmatpush1.msra.mxu0 %v3378
    %3508 = vmatprep.subr.mxu0 %v3383
    %3509 = vmatpush1.msra.mxu0 %v3382
    %3510 = vmatprep.subr.mxu0 %v3387
    %3511 = vmatpush1.msra.mxu0 %v3386
    %3512 = vmatprep.subr.mxu0 %v3391
    %3513 = vmatpush1.msra.mxu0 %v3390
    %3514 = vmatprep.subr.mxu0 %v3395
    %3515 = vmatpush1.msra.mxu0 %v3394
    %3516 = vmatprep.subr.mxu0 %v3399
    %3517 = vmatpush1.msra.mxu0 %v3398
    %3518 = vmatprep.subr.mxu0 %v3403
    %3519 = vmatpush1.msra.mxu0 %v3402
    %3520 = vmatprep.subr.mxu0 %v3407
    %3521 = vmatpush1.msra.mxu0 %v3406
    %3522 = vmatprep.subr.mxu0 %v3411
    %3523 = vmatpush1.msra.mxu0 %v3410
    %3524 = vmatprep.subr.mxu0 %v3415
    %3525 = vmatpush1.msra.mxu0 %v3414
    %3526 = vmatprep.subr.mxu0 %v3419
    %3527 = vmatpush1.msra.mxu0 %v3418
    %3528 = vmatprep.subr.mxu0 %v3423
    %3529 = vmatpush1.msra.mxu0 %v3422
    %3530 = vmatprep.subr.mxu0 %v3427
    %3531 = vmatpush1.msra.mxu0 %v3426
    %3532 = vmatprep.subr.mxu0 %v3431
    %3533 = vmatpush1.msra.mxu0 %v3430
    %3534 = vmatprep.subr.mxu0 %v3435
    %3535 = vmatpush1.msra.mxu0 %v3434
    %3536 = vmatprep.subr.mxu0 %v3439
    %3537 = vmatpush1.msra.mxu0 %v3438
    %3538 = vmatprep.subr.mxu0 %v3443
    %3539 = vmatpush1.msra.mxu0 %v3442
    %3540 = vmatprep.subr.mxu0 %v3447
    %3541 = vmatpush1.msra.mxu0 %v3446
    %3542 = vmatprep.subr.mxu0 %v3451
    %3543 = vmatpush1.msra.mxu0 %v3450
    %3544 = vmatprep.subr.mxu0 %v3455
    %3545 = vmatpush1.msra.mxu0 %v3454
    %3546 = vmatprep.subr.mxu0 %v3459
    %3547 = vmatpush1.msra.mxu0 %v3458
    %3548 = vmatprep.mubr.f32.mxu0 %v3331
    %3549 = vmatmul.mubr.f32.gmra.mrb[0].mxu0 %v3330
    %v3550 = vpop.f32.mrb[0].mxu0
    %v3551 = vadd.f32 %v3467, %v3550
    %v3552 = vpop.f32.mrb[0].mxu0
    %v3553 = vadd.f32 %v3471, %v3552
    %3554 = vmatprep.mubr.f32.mxu0 %v3333
    %3555 = vmatmul.mubr.f32.gmra.mrb[0].mxu0 %v3332
    %v3556 = vpop.f32.mrb[0].mxu0
    %v3557 = vadd.f32 %v3467, %v3556
    %v3558 = vpop.f32.mrb[0].mxu0
    %v3559 = vadd.f32 %v3471, %v3558
    %3560 = vdwg.mxu0
    %3561 = vmatprep.subr.mxu0 %v3337
    %3562 = vmatpush1.msra.mxu0 %v3336
    %3563 = vmatprep.subr.mxu0 %v3341
    %3564 = vmatpush1.msra.mxu0 %v3340
    %3565 = vmatprep.subr.mxu0 %v3345
    %3566 = vmatpush1.msra.mxu0 %v3344
    %3567 = vmatprep.subr.mxu0 %v3349
    %3568 = vmatpush1.msra.mxu0 %v3348
    %3569 = vmatprep.subr.mxu0 %v3353
    %3570 = vmatpush1.msra.mxu0 %v3352
    %3571 = vmatprep.subr.mxu0 %v3357
    %3572 = vmatpush1.msra.mxu0 %v3356
    %3573 = vmatprep.subr.mxu0 %v3361
    %3574 = vmatpush1.msra.mxu0 %v3360
    %3575 = vmatprep.subr.mxu0 %v3365
    %3576 = vmatpush1.msra.mxu0 %v3364
    %3577 = vmatprep.subr.mxu0 %v3369
    %3578 = vmatpush1.msra.mxu0 %v3368
    %3579 = vmatprep.subr.mxu0 %v3373
    %3580 = vmatpush1.msra.mxu0 %v3372
    %3581 = vmatprep.subr.mxu0 %v3377
    %3582 = vmatpush1.msra.mxu0 %v3376
    %3583 = vmatprep.subr.mxu0 %v3381
    %3584 = vmatpush1.msra.mxu0 %v3380
    %3585 = vmatprep.subr.mxu0 %v3385
    %3586 = vmatpush1.msra.mxu0 %v3384
    %3587 = vmatprep.subr.mxu0 %v3389
    %3588 = vmatpush1.msra.mxu0 %v3388
    %3589 = vmatprep.subr.mxu0 %v3393
    %3590 = vmatpush1.msra.mxu0 %v3392
    %3591 = vmatprep.subr.mxu0 %v3397
    %3592 = vmatpush1.msra.mxu0 %v3396
    %3593 = vmatprep.subr.mxu0 %v3401
    %3594 = vmatpush1.msra.mxu0 %v3400
    %3595 = vmatprep.subr.mxu0 %v3405
    %3596 = vmatpush1.msra.mxu0 %v3404
    %3597 = vmatprep.subr.mxu0 %v3409
    %3598 = vmatpush1.msra.mxu0 %v3408
    %3599 = vmatprep.subr.mxu0 %v3413
    %3600 = vmatpush1.msra.mxu0 %v3412
    %3601 = vmatprep.subr.mxu0 %v3417
    %3602 = vmatpush1.msra.mxu0 %v3416
    %3603 = vmatprep.subr.mxu0 %v3421
    %3604 = vmatpush1.msra.mxu0 %v3420
    %3605 = vmatprep.subr.mxu0 %v3425
    %3606 = vmatpush1.msra.mxu0 %v3424
    %3607 = vmatprep.subr.mxu0 %v3429
    %3608 = vmatpush1.msra.mxu0 %v3428
    %3609 = vmatprep.subr.mxu0 %v3433
    %3610 = vmatpush1.msra.mxu0 %v3432
    %3611 = vmatprep.subr.mxu0 %v3437
    %3612 = vmatpush1.msra.mxu0 %v3436
    %3613 = vmatprep.subr.mxu0 %v3441
    %3614 = vmatpush1.msra.mxu0 %v3440
    %3615 = vmatprep.subr.mxu0 %v3445
    %3616 = vmatpush1.msra.mxu0 %v3444
    %3617 = vmatprep.subr.mxu0 %v3449
    %3618 = vmatpush1.msra.mxu0 %v3448
    %3619 = vmatprep.subr.mxu0 %v3453
    %3620 = vmatpush1.msra.mxu0 %v3452
    %3621 = vmatprep.subr.mxu0 %v3457
    %3622 = vmatpush1.msra.mxu0 %v3456
    %3623 = vmatprep.subr.mxu0 %v3461
    %3624 = vmatpush1.msra.mxu0 %v3460
    %3625 = vmatprep.mubr.f32.mxu0 %v3331
    %3626 = vmatmul.mubr.f32.gmra.mrb[0].mxu0 %v3330
    %v3627 = vpop.f32.mrb[0].mxu0
    %v3628 = vadd.f32 %v3475, %v3627
    %v3629 = vpop.f32.mrb[0].mxu0
    %v3630 = vadd.f32 %v3479, %v3629
    %3631 = vmatprep.mubr.f32.mxu0 %v3333
    %3632 = vmatmul.mubr.f32.gmra.mrb[0].mxu0 %v3332
    %v3633 = vpop.f32.mrb[0].mxu0
    %v3634 = vadd.f32 %v3475, %v3633
    %v3635 = vpop.f32.mrb[0].mxu0
    %v3636 = vadd.f32 %v3479, %v3635
    %3637 = vdwg.mxu0
    %vm3638 = vcmp.gt.f32.partialorder %v3551, 0.0
    %vm3639 = vcmp.gt.f32.partialorder %v3553, 0.0
    %vm3640 = vcmp.gt.f32.partialorder %v3628, 0.0
    %vm3641 = vcmp.gt.f32.partialorder %v3630, 0.0
    %vm3642 = vcmp.gt.f32.partialorder %v3557, 0.0
    %vm3643 = vcmp.gt.f32.partialorder %v3559, 0.0
    %vm3644 = vcmp.gt.f32.partialorder %v3634, 0.0
    %vm3645 = vcmp.gt.f32.partialorder %v3636, 0.0
    %v3646 = vmin.f32 %v3551, 0.0
    %v3647 = vmin.f32 %v3553, 0.0
    %v3648 = vmin.f32 %v3628, 0.0
    %v3649 = vmin.f32 %v3630, 0.0
    %v3650 = vmin.f32 %v3557, 0.0
    %v3651 = vmin.f32 %v3559, 0.0
    %v3652 = vmin.f32 %v3634, 0.0
    %v3653 = vmin.f32 %v3636, 0.0
    %v3654 = vmul.f32 %v3646, 1.442695
    %v3655 = vpow.pop %v3654
    %v3656 = vmul.f32 %v3647, 1.442695
    %v3657 = vpow.pop %v3656
    %v3658 = vmul.f32 %v3648, 1.442695
    %v3659 = vpow.pop %v3658
    %v3660 = vmul.f32 %v3649, 1.442695
    %v3661 = vpow.pop %v3660
    %v3662 = vmul.f32 %v3650, 1.442695
    %v3663 = vpow.pop %v3662
    %v3664 = vmul.f32 %v3651, 1.442695
    %v3665 = vpow.pop %v3664
    %v3666 = vmul.f32 %v3652, 1.442695
    %v3667 = vpow.pop %v3666
    %v3668 = vmul.f32 %v3653, 1.442695
    %v3669 = vpow.pop %v3668
    %v3670 = vsub.f32 %v3655, 1.0
    %v3671 = vsub.f32 %v3657, 1.0
    %v3672 = vsub.f32 %v3659, 1.0
    %v3673 = vsub.f32 %v3661, 1.0
    %v3674 = vsub.f32 %v3663, 1.0
    %v3675 = vsub.f32 %v3665, 1.0
    %v3676 = vsub.f32 %v3667, 1.0
    %v3677 = vsub.f32 %v3669, 1.0
    %v3678 = vsel %vm3638, %v3551, %v3670
    %v3679 = vsel %vm3639, %v3553, %v3671
    %v3680 = vsel %vm3640, %v3628, %v3672
    %v3681 = vsel %vm3641, %v3630, %v3673
    %v3682 = vsel %vm3642, %v3557, %v3674
    %v3683 = vsel %vm3643, %v3559, %v3675
    %v3684 = vsel %vm3644, %v3634, %v3676
    %v3685 = vsel %vm3645, %v3636, %v3677
    %v3686 = vld [vmem:[#allocation9] sm:$0xff]
    %v3687 = vld [vmem:[#allocation9 + $0x8] sm:$0xff]
    %v3688 = vld [vmem:[#allocation9 + $0x10] sm:$0xff]
    %v3689 = vld [vmem:[#allocation9 + $0x18] sm:$0xff]
    %v3690 = vld [vmem:[#allocation9 + $0x20] sm:$0xff]
    %v3691 = vld [vmem:[#allocation9 + $0x28] sm:$0xff]
    %v3692 = vld [vmem:[#allocation9 + $0x30] sm:$0xff]
    %v3693 = vld [vmem:[#allocation9 + $0x38] sm:$0xff]
    %v3694 = vld [vmem:[#allocation9 + $0x40] sm:$0xff]
    %v3695 = vld [vmem:[#allocation9 + $0x48] sm:$0xff]
    %v3696 = vld [vmem:[#allocation9 + $0x50] sm:$0xff]
    %v3697 = vld [vmem:[#allocation9 + $0x58] sm:$0xff]
    %v3698 = vld [vmem:[#allocation9 + $0x60] sm:$0xff]
    %v3699 = vld [vmem:[#allocation9 + $0x68] sm:$0xff]
    %v3700 = vld [vmem:[#allocation9 + $0x70] sm:$0xff]
    %v3701 = vld [vmem:[#allocation9 + $0x78] sm:$0xff]
    %v3702 = vld [vmem:[#allocation9 + $0x80] sm:$0xff]
    %v3703 = vld [vmem:[#allocation9 + $0x88] sm:$0xff]
    %v3704 = vld [vmem:[#allocation9 + $0x90] sm:$0xff]
    %v3705 = vld [vmem:[#allocation9 + $0x98] sm:$0xff]
    %v3706 = vld [vmem:[#allocation9 + $0xa0] sm:$0xff]
    %v3707 = vld [vmem:[#allocation9 + $0xa8] sm:$0xff]
    %v3708 = vld [vmem:[#allocation9 + $0xb0] sm:$0xff]
    %v3709 = vld [vmem:[#allocation9 + $0xb8] sm:$0xff]
    %v3710 = vld [vmem:[#allocation9 + $0xc0] sm:$0xff]
    %v3711 = vld [vmem:[#allocation9 + $0xc8] sm:$0xff]
    %v3712 = vld [vmem:[#allocation9 + $0xd0] sm:$0xff]
    %v3713 = vld [vmem:[#allocation9 + $0xd8] sm:$0xff]
    %v3714 = vld [vmem:[#allocation9 + $0xe0] sm:$0xff]
    %v3715 = vld [vmem:[#allocation9 + $0xe8] sm:$0xff]
    %v3716 = vld [vmem:[#allocation9 + $0xf0] sm:$0xff]
    %v3717 = vld [vmem:[#allocation9 + $0xf8] sm:$0xff]
    %v3718 = vld [vmem:[#allocation9 + $0x100] sm:$0xff]
    %v3719 = vld [vmem:[#allocation9 + $0x108] sm:$0xff]
    %v3720 = vld [vmem:[#allocation9 + $0x110] sm:$0xff]
    %v3721 = vld [vmem:[#allocation9 + $0x118] sm:$0xff]
    %v3722 = vld [vmem:[#allocation9 + $0x120] sm:$0xff]
    %v3723 = vld [vmem:[#allocation9 + $0x128] sm:$0xff]
    %v3724 = vld [vmem:[#allocation9 + $0x130] sm:$0xff]
    %v3725 = vld [vmem:[#allocation9 + $0x138] sm:$0xff]
    %v3726 = vld [vmem:[#allocation9 + $0x140] sm:$0xff]
    %v3727 = vld [vmem:[#allocation9 + $0x148] sm:$0xff]
    %v3728 = vld [vmem:[#allocation9 + $0x150] sm:$0xff]
    %v3729 = vld [vmem:[#allocation9 + $0x158] sm:$0xff]
    %v3730 = vld [vmem:[#allocation9 + $0x160] sm:$0xff]
    %v3731 = vld [vmem:[#allocation9 + $0x168] sm:$0xff]
    %v3732 = vld [vmem:[#allocation9 + $0x170] sm:$0xff]
    %v3733 = vld [vmem:[#allocation9 + $0x178] sm:$0xff]
    %v3734 = vld [vmem:[#allocation9 + $0x180] sm:$0xff]
    %v3735 = vld [vmem:[#allocation9 + $0x188] sm:$0xff]
    %v3736 = vld [vmem:[#allocation9 + $0x190] sm:$0xff]
    %v3737 = vld [vmem:[#allocation9 + $0x198] sm:$0xff]
    %v3738 = vld [vmem:[#allocation9 + $0x1a0] sm:$0xff]
    %v3739 = vld [vmem:[#allocation9 + $0x1a8] sm:$0xff]
    %v3740 = vld [vmem:[#allocation9 + $0x1b0] sm:$0xff]
    %v3741 = vld [vmem:[#allocation9 + $0x1b8] sm:$0xff]
    %v3742 = vld [vmem:[#allocation9 + $0x1c0] sm:$0xff]
    %v3743 = vld [vmem:[#allocation9 + $0x1c8] sm:$0xff]
    %v3744 = vld [vmem:[#allocation9 + $0x1d0] sm:$0xff]
    %v3745 = vld [vmem:[#allocation9 + $0x1d8] sm:$0xff]
    %v3746 = vld [vmem:[#allocation9 + $0x1e0] sm:$0xff]
    %v3747 = vld [vmem:[#allocation9 + $0x1e8] sm:$0xff]
    %v3748 = vld [vmem:[#allocation9 + $0x1f0] sm:$0xff]
    %v3749 = vld [vmem:[#allocation9 + $0x1f8] sm:$0xff]
    %v3750 = vld [vmem:[#allocation9 + $0x200] sm:$0xff]
    %v3751 = vld [vmem:[#allocation9 + $0x208] sm:$0xff]
    %v3752 = vld [vmem:[#allocation9 + $0x210] sm:$0xff]
    %v3753 = vld [vmem:[#allocation9 + $0x218] sm:$0xff]
    %v3754 = vld [vmem:[#allocation9 + $0x220] sm:$0xff]
    %v3755 = vld [vmem:[#allocation9 + $0x228] sm:$0xff]
    %v3756 = vld [vmem:[#allocation9 + $0x230] sm:$0xff]
    %v3757 = vld [vmem:[#allocation9 + $0x238] sm:$0xff]
    %v3758 = vld [vmem:[#allocation9 + $0x240] sm:$0xff]
    %v3759 = vld [vmem:[#allocation9 + $0x248] sm:$0xff]
    %v3760 = vld [vmem:[#allocation9 + $0x250] sm:$0xff]
    %v3761 = vld [vmem:[#allocation9 + $0x258] sm:$0xff]
    %v3762 = vld [vmem:[#allocation9 + $0x260] sm:$0xff]
    %v3763 = vld [vmem:[#allocation9 + $0x268] sm:$0xff]
    %v3764 = vld [vmem:[#allocation9 + $0x270] sm:$0xff]
    %v3765 = vld [vmem:[#allocation9 + $0x278] sm:$0xff]
    %v3766 = vld [vmem:[#allocation9 + $0x280] sm:$0xff]
    %v3767 = vld [vmem:[#allocation9 + $0x288] sm:$0xff]
    %v3768 = vld [vmem:[#allocation9 + $0x290] sm:$0xff]
    %v3769 = vld [vmem:[#allocation9 + $0x298] sm:$0xff]
    %v3770 = vld [vmem:[#allocation9 + $0x2a0] sm:$0xff]
    %v3771 = vld [vmem:[#allocation9 + $0x2a8] sm:$0xff]
    %v3772 = vld [vmem:[#allocation9 + $0x2b0] sm:$0xff]
    %v3773 = vld [vmem:[#allocation9 + $0x2b8] sm:$0xff]
    %v3774 = vld [vmem:[#allocation9 + $0x2c0] sm:$0xff]
    %v3775 = vld [vmem:[#allocation9 + $0x2c8] sm:$0xff]
    %v3776 = vld [vmem:[#allocation9 + $0x2d0] sm:$0xff]
    %v3777 = vld [vmem:[#allocation9 + $0x2d8] sm:$0xff]
    %v3778 = vld [vmem:[#allocation9 + $0x2e0] sm:$0xff]
    %v3779 = vld [vmem:[#allocation9 + $0x2e8] sm:$0xff]
    %v3780 = vld [vmem:[#allocation9 + $0x2f0] sm:$0xff]
    %v3781 = vld [vmem:[#allocation9 + $0x2f8] sm:$0xff]
    %v3782 = vld [vmem:[#allocation9 + $0x300] sm:$0xff]
    %v3783 = vld [vmem:[#allocation9 + $0x308] sm:$0xff]
    %v3784 = vld [vmem:[#allocation9 + $0x310] sm:$0xff]
    %v3785 = vld [vmem:[#allocation9 + $0x318] sm:$0xff]
    %v3786 = vld [vmem:[#allocation9 + $0x320] sm:$0xff]
    %v3787 = vld [vmem:[#allocation9 + $0x328] sm:$0xff]
    %v3788 = vld [vmem:[#allocation9 + $0x330] sm:$0xff]
    %v3789 = vld [vmem:[#allocation9 + $0x338] sm:$0xff]
    %v3790 = vld [vmem:[#allocation9 + $0x340] sm:$0xff]
    %v3791 = vld [vmem:[#allocation9 + $0x348] sm:$0xff]
    %v3792 = vld [vmem:[#allocation9 + $0x350] sm:$0xff]
    %v3793 = vld [vmem:[#allocation9 + $0x358] sm:$0xff]
    %v3794 = vld [vmem:[#allocation9 + $0x360] sm:$0xff]
    %v3795 = vld [vmem:[#allocation9 + $0x368] sm:$0xff]
    %v3796 = vld [vmem:[#allocation9 + $0x370] sm:$0xff]
    %v3797 = vld [vmem:[#allocation9 + $0x378] sm:$0xff]
    %v3798 = vld [vmem:[#allocation9 + $0x380] sm:$0xff]
    %v3799 = vld [vmem:[#allocation9 + $0x388] sm:$0xff]
    %v3800 = vld [vmem:[#allocation9 + $0x390] sm:$0xff]
    %v3801 = vld [vmem:[#allocation9 + $0x398] sm:$0xff]
    %v3802 = vld [vmem:[#allocation9 + $0x3a0] sm:$0xff]
    %v3803 = vld [vmem:[#allocation9 + $0x3a8] sm:$0xff]
    %v3804 = vld [vmem:[#allocation9 + $0x3b0] sm:$0xff]
    %v3805 = vld [vmem:[#allocation9 + $0x3b8] sm:$0xff]
    %v3806 = vld [vmem:[#allocation9 + $0x3c0] sm:$0xff]
    %v3807 = vld [vmem:[#allocation9 + $0x3c8] sm:$0xff]
    %v3808 = vld [vmem:[#allocation9 + $0x3d0] sm:$0xff]
    %v3809 = vld [vmem:[#allocation9 + $0x3d8] sm:$0xff]
    %v3810 = vld [vmem:[#allocation9 + $0x3e0] sm:$0xff]
    %v3811 = vld [vmem:[#allocation9 + $0x3e8] sm:$0xff]
    %v3812 = vld [vmem:[#allocation9 + $0x3f0] sm:$0xff]
    %v3813 = vld [vmem:[#allocation9 + $0x3f8] sm:$0xff]
    %v3814 = vld [vmem:[%s11] sm:$0x3]
    %v3816 = vlaneseq
    %v3817 = vshrl.u32 %v3816, 7
    %v3818 = vsub.s32 0, %v3817
    %v3819 = vrot.slane %v3814, %v3818
    %v3820 = vlaneseq
    %v3821 = vshrl.u32 %v3820, 7
    %v3822 = vsub.s32 1, %v3821
    %v3823 = vrot.slane %v3814, %v3822
    %3826 = vmatprep.subr.mxu0 %v3687
    %3827 = vmatpush1.msra.mxu0 %v3686
    %3828 = vmatprep.subr.mxu0 %v3689
    %3829 = vmatpush1.msra.mxu0 %v3688
    %3830 = vmatprep.subr.mxu0 %v3691
    %3831 = vmatpush1.msra.mxu0 %v3690
    %3832 = vmatprep.subr.mxu0 %v3693
    %3833 = vmatpush1.msra.mxu0 %v3692
    %3834 = vmatprep.subr.mxu0 %v3695
    %3835 = vmatpush1.msra.mxu0 %v3694
    %3836 = vmatprep.subr.mxu0 %v3697
    %3837 = vmatpush1.msra.mxu0 %v3696
    %3838 = vmatprep.subr.mxu0 %v3699
    %3839 = vmatpush1.msra.mxu0 %v3698
    %3840 = vmatprep.subr.mxu0 %v3701
    %3841 = vmatpush1.msra.mxu0 %v3700
    %3842 = vmatprep.subr.mxu0 %v3703
    %3843 = vmatpush1.msra.mxu0 %v3702
    %3844 = vmatprep.subr.mxu0 %v3705
    %3845 = vmatpush1.msra.mxu0 %v3704
    %3846 = vmatprep.subr.mxu0 %v3707
    %3847 = vmatpush1.msra.mxu0 %v3706
    %3848 = vmatprep.subr.mxu0 %v3709
    %3849 = vmatpush1.msra.mxu0 %v3708
    %3850 = vmatprep.subr.mxu0 %v3711
    %3851 = vmatpush1.msra.mxu0 %v3710
    %3852 = vmatprep.subr.mxu0 %v3713
    %3853 = vmatpush1.msra.mxu0 %v3712
    %3854 = vmatprep.subr.mxu0 %v3715
    %3855 = vmatpush1.msra.mxu0 %v3714
    %3856 = vmatprep.subr.mxu0 %v3717
    %3857 = vmatpush1.msra.mxu0 %v3716
    %3858 = vmatprep.subr.mxu0 %v3719
    %3859 = vmatpush1.msra.mxu0 %v3718
    %3860 = vmatprep.subr.mxu0 %v3721
    %3861 = vmatpush1.msra.mxu0 %v3720
    %3862 = vmatprep.subr.mxu0 %v3723
    %3863 = vmatpush1.msra.mxu0 %v3722
    %3864 = vmatprep.subr.mxu0 %v3725
    %3865 = vmatpush1.msra.mxu0 %v3724
    %3866 = vmatprep.subr.mxu0 %v3727
    %3867 = vmatpush1.msra.mxu0 %v3726
    %3868 = vmatprep.subr.mxu0 %v3729
    %3869 = vmatpush1.msra.mxu0 %v3728
    %3870 = vmatprep.subr.mxu0 %v3731
    %3871 = vmatpush1.msra.mxu0 %v3730
    %3872 = vmatprep.subr.mxu0 %v3733
    %3873 = vmatpush1.msra.mxu0 %v3732
    %3874 = vmatprep.subr.mxu0 %v3735
    %3875 = vmatpush1.msra.mxu0 %v3734
    %3876 = vmatprep.subr.mxu0 %v3737
    %3877 = vmatpush1.msra.mxu0 %v3736
    %3878 = vmatprep.subr.mxu0 %v3739
    %3879 = vmatpush1.msra.mxu0 %v3738
    %3880 = vmatprep.subr.mxu0 %v3741
    %3881 = vmatpush1.msra.mxu0 %v3740
    %3882 = vmatprep.subr.mxu0 %v3743
    %3883 = vmatpush1.msra.mxu0 %v3742
    %3884 = vmatprep.subr.mxu0 %v3745
    %3885 = vmatpush1.msra.mxu0 %v3744
    %3886 = vmatprep.subr.mxu0 %v3747
    %3887 = vmatpush1.msra.mxu0 %v3746
    %3888 = vmatprep.subr.mxu0 %v3749
    %3889 = vmatpush1.msra.mxu0 %v3748
    %3890 = vmatprep.mubr.f32.mxu0 %v3679
    %3891 = vmatmul.mubr.f32.gmra.mrb[0].mxu0 %v3678
    %v3892 = vpop.f32.mrb[0].mxu0
    %v3893 = vadd.f32 %v3819, %v3892
    %v3894 = vpop.f32.mrb[0].mxu0
    %v3895 = vadd.f32 %v3823, %v3894
    %3896 = vmatprep.mubr.f32.mxu0 %v3683
    %3897 = vmatmul.mubr.f32.gmra.mrb[0].mxu0 %v3682
    %v3898 = vpop.f32.mrb[0].mxu0
    %v3899 = vadd.f32 %v3819, %v3898
    %v3900 = vpop.f32.mrb[0].mxu0
    %v3901 = vadd.f32 %v3823, %v3900
    %3902 = vdwg.mxu0
    %3903 = vmatprep.subr.mxu0 %v3751
    %3904 = vmatpush1.msra.mxu0 %v3750
    %3905 = vmatprep.subr.mxu0 %v3753
    %3906 = vmatpush1.msra.mxu0 %v3752
    %3907 = vmatprep.subr.mxu0 %v3755
    %3908 = vmatpush1.msra.mxu0 %v3754
    %3909 = vmatprep.subr.mxu0 %v3757
    %3910 = vmatpush1.msra.mxu0 %v3756
    %3911 = vmatprep.subr.mxu0 %v3759
    %3912 = vmatpush1.msra.mxu0 %v3758
    %3913 = vmatprep.subr.mxu0 %v3761
    %3914 = vmatpush1.msra.mxu0 %v3760
    %3915 = vmatprep.subr.mxu0 %v3763
    %3916 = vmatpush1.msra.mxu0 %v3762
    %3917 = vmatprep.subr.mxu0 %v3765
    %3918 = vmatpush1.msra.mxu0 %v3764
    %3919 = vmatprep.subr.mxu0 %v3767
    %3920 = vmatpush1.msra.mxu0 %v3766
    %3921 = vmatprep.subr.mxu0 %v3769
    %3922 = vmatpush1.msra.mxu0 %v3768
    %3923 = vmatprep.subr.mxu0 %v3771
    %3924 = vmatpush1.msra.mxu0 %v3770
    %3925 = vmatprep.subr.mxu0 %v3773
    %3926 = vmatpush1.msra.mxu0 %v3772
    %3927 = vmatprep.subr.mxu0 %v3775
    %3928 = vmatpush1.msra.mxu0 %v3774
    %3929 = vmatprep.subr.mxu0 %v3777
    %3930 = vmatpush1.msra.mxu0 %v3776
    %3931 = vmatprep.subr.mxu0 %v3779
    %3932 = vmatpush1.msra.mxu0 %v3778
    %3933 = vmatprep.subr.mxu0 %v3781
    %3934 = vmatpush1.msra.mxu0 %v3780
    %3935 = vmatprep.subr.mxu0 %v3783
    %3936 = vmatpush1.msra.mxu0 %v3782
    %3937 = vmatprep.subr.mxu0 %v3785
    %3938 = vmatpush1.msra.mxu0 %v3784
    %3939 = vmatprep.subr.mxu0 %v3787
    %3940 = vmatpush1.msra.mxu0 %v3786
    %3941 = vmatprep.subr.mxu0 %v3789
    %3942 = vmatpush1.msra.mxu0 %v3788
    %3943 = vmatprep.subr.mxu0 %v3791
    %3944 = vmatpush1.msra.mxu0 %v3790
    %3945 = vmatprep.subr.mxu0 %v3793
    %3946 = vmatpush1.msra.mxu0 %v3792
    %3947 = vmatprep.subr.mxu0 %v3795
    %3948 = vmatpush1.msra.mxu0 %v3794
    %3949 = vmatprep.subr.mxu0 %v3797
    %3950 = vmatpush1.msra.mxu0 %v3796
    %3951 = vmatprep.subr.mxu0 %v3799
    %3952 = vmatpush1.msra.mxu0 %v3798
    %3953 = vmatprep.subr.mxu0 %v3801
    %3954 = vmatpush1.msra.mxu0 %v3800
    %3955 = vmatprep.subr.mxu0 %v3803
    %3956 = vmatpush1.msra.mxu0 %v3802
    %3957 = vmatprep.subr.mxu0 %v3805
    %3958 = vmatpush1.msra.mxu0 %v3804
    %3959 = vmatprep.subr.mxu0 %v3807
    %3960 = vmatpush1.msra.mxu0 %v3806
    %3961 = vmatprep.subr.mxu0 %v3809
    %3962 = vmatpush1.msra.mxu0 %v3808
    %3963 = vmatprep.subr.mxu0 %v3811
    %3964 = vmatpush1.msra.mxu0 %v3810
    %3965 = vmatprep.subr.mxu0 %v3813
    %3966 = vmatpush1.msra.mxu0 %v3812
    %3967 = vmatprep.mubr.f32.mxu0 %v3681
    %3968 = vmatmul.mubr.f32.gmra.mrb[0].mxu0 %v3680
    %v3969 = vpop.f32.mrb[0].mxu0
    %v3970 = vadd.f32 %v3893, %v3969
    %v3971 = vpop.f32.mrb[0].mxu0
    %v3972 = vadd.f32 %v3895, %v3971
    %3973 = vmatprep.mubr.f32.mxu0 %v3685
    %3974 = vmatmul.mubr.f32.gmra.mrb[0].mxu0 %v3684
    %v3975 = vpop.f32.mrb[0].mxu0
    %v3976 = vadd.f32 %v3899, %v3975
    %v3977 = vpop.f32.mrb[0].mxu0
    %v3978 = vadd.f32 %v3901, %v3977
    %3979 = vdwg.mxu0
    %vm3980 = vcmp.gt.f32.partialorder %v3970, 0.0
    %vm3981 = vcmp.gt.f32.partialorder %v3972, 0.0
    %vm3982 = vcmp.gt.f32.partialorder %v3976, 0.0
    %vm3983 = vcmp.gt.f32.partialorder %v3978, 0.0
    %v3984 = vmin.f32 %v3970, 0.0
    %v3985 = vmin.f32 %v3972, 0.0
    %v3986 = vmin.f32 %v3976, 0.0
    %v3987 = vmin.f32 %v3978, 0.0
    %v3988 = vmul.f32 %v3984, 1.442695
    %v3989 = vpow.pop %v3988
    %v3990 = vmul.f32 %v3985, 1.442695
    %v3991 = vpow.pop %v3990
    %v3992 = vmul.f32 %v3986, 1.442695
    %v3993 = vpow.pop %v3992
    %v3994 = vmul.f32 %v3987, 1.442695
    %v3995 = vpow.pop %v3994
    %v3996 = vsub.f32 %v3989, 1.0
    %v3997 = vsub.f32 %v3991, 1.0
    %v3998 = vsub.f32 %v3993, 1.0
    %v3999 = vsub.f32 %v3995, 1.0
    %v4000 = vsel %vm3980, %v3970, %v3996
    %v4001 = vsel %vm3981, %v3972, %v3997
    %v4002 = vsel %vm3982, %v3976, %v3998
    %v4003 = vsel %vm3983, %v3978, %v3999
    %v4004 = vld [vmem:[#allocation11] sm:$0xff]
    %v4005 = vld [vmem:[#allocation11 + $0x8] sm:$0xff]
    %v4006 = vld [vmem:[#allocation11 + $0x10] sm:$0xff]
    %v4007 = vld [vmem:[#allocation11 + $0x18] sm:$0xff]
    %v4008 = vld [vmem:[#allocation11 + $0x20] sm:$0xff]
    %v4009 = vld [vmem:[#allocation11 + $0x28] sm:$0xff]
    %v4010 = vld [vmem:[#allocation11 + $0x30] sm:$0xff]
    %v4011 = vld [vmem:[#allocation11 + $0x38] sm:$0xff]
    %v4012 = vld [vmem:[#allocation11 + $0x40] sm:$0xff]
    %v4013 = vld [vmem:[#allocation11 + $0x48] sm:$0xff]
    %v4014 = vld [vmem:[#allocation11 + $0x50] sm:$0xff]
    %v4015 = vld [vmem:[#allocation11 + $0x58] sm:$0xff]
    %v4016 = vld [vmem:[#allocation11 + $0x60] sm:$0xff]
    %v4017 = vld [vmem:[#allocation11 + $0x68] sm:$0xff]
    %v4018 = vld [vmem:[#allocation11 + $0x70] sm:$0xff]
    %v4019 = vld [vmem:[#allocation11 + $0x78] sm:$0xff]
    %v4020 = vld [vmem:[#allocation11 + $0x80] sm:$0xff]
    %v4021 = vld [vmem:[#allocation11 + $0x88] sm:$0xff]
    %v4022 = vld [vmem:[#allocation11 + $0x90] sm:$0xff]
    %v4023 = vld [vmem:[#allocation11 + $0x98] sm:$0xff]
    %v4024 = vld [vmem:[#allocation11 + $0xa0] sm:$0xff]
    %v4025 = vld [vmem:[#allocation11 + $0xa8] sm:$0xff]
    %v4026 = vld [vmem:[#allocation11 + $0xb0] sm:$0xff]
    %v4027 = vld [vmem:[#allocation11 + $0xb8] sm:$0xff]
    %v4028 = vld [vmem:[#allocation11 + $0xc0] sm:$0xff]
    %v4029 = vld [vmem:[#allocation11 + $0xc8] sm:$0xff]
    %v4030 = vld [vmem:[#allocation11 + $0xd0] sm:$0xff]
    %v4031 = vld [vmem:[#allocation11 + $0xd8] sm:$0xff]
    %v4032 = vld [vmem:[#allocation11 + $0xe0] sm:$0xff]
    %v4033 = vld [vmem:[#allocation11 + $0xe8] sm:$0xff]
    %v4034 = vld [vmem:[#allocation11 + $0xf0] sm:$0xff]
    %v4035 = vld [vmem:[#allocation11 + $0xf8] sm:$0xff]
    %v4036 = vld [vmem:[%s13] sm:$0x1]
    %v4038 = vlaneseq
    %v4039 = vshrl.u32 %v4038, 7
    %v4040 = vsub.s32 0, %v4039
    %v4041 = vrot.slane %v4036, %v4040
    %4043 = vmatprep.subr.mxu0 0.0
    %4044 = vmatpush1.msra.mxu0 %v4004
    %4045 = vmatprep.subr.mxu0 0.0
    %4046 = vmatpush1.msra.mxu0 %v4005
    %4047 = vmatprep.subr.mxu0 0.0
    %4048 = vmatpush1.msra.mxu0 %v4006
    %4049 = vmatprep.subr.mxu0 0.0
    %4050 = vmatpush1.msra.mxu0 %v4007
    %4051 = vmatprep.subr.mxu0 0.0
    %4052 = vmatpush1.msra.mxu0 %v4008
    %4053 = vmatprep.subr.mxu0 0.0
    %4054 = vmatpush1.msra.mxu0 %v4009
    %4055 = vmatprep.subr.mxu0 0.0
    %4056 = vmatpush1.msra.mxu0 %v4010
    %4057 = vmatprep.subr.mxu0 0.0
    %4058 = vmatpush1.msra.mxu0 %v4011
    %4059 = vmatprep.subr.mxu0 0.0
    %4060 = vmatpush1.msra.mxu0 %v4012
    %4061 = vmatprep.subr.mxu0 0.0
    %4062 = vmatpush1.msra.mxu0 %v4013
    %4063 = vmatprep.subr.mxu0 0.0
    %4064 = vmatpush1.msra.mxu0 %v4014
    %4065 = vmatprep.subr.mxu0 0.0
    %4066 = vmatpush1.msra.mxu0 %v4015
    %4067 = vmatprep.subr.mxu0 0.0
    %4068 = vmatpush1.msra.mxu0 %v4016
    %4069 = vmatprep.subr.mxu0 0.0
    %4070 = vmatpush1.msra.mxu0 %v4017
    %4071 = vmatprep.subr.mxu0 0.0
    %4072 = vmatpush1.msra.mxu0 %v4018
    %4073 = vmatprep.subr.mxu0 0.0
    %4074 = vmatpush1.msra.mxu0 %v4019
    %4075 = vmatprep.subr.mxu0 0.0
    %4076 = vmatpush1.msra.mxu0 %v4020
    %4077 = vmatprep.subr.mxu0 0.0
    %4078 = vmatpush1.msra.mxu0 %v4021
    %4079 = vmatprep.subr.mxu0 0.0
    %4080 = vmatpush1.msra.mxu0 %v4022
    %4081 = vmatprep.subr.mxu0 0.0
    %4082 = vmatpush1.msra.mxu0 %v4023
    %4083 = vmatprep.subr.mxu0 0.0
    %4084 = vmatpush1.msra.mxu0 %v4024
    %4085 = vmatprep.subr.mxu0 0.0
    %4086 = vmatpush1.msra.mxu0 %v4025
    %4087 = vmatprep.subr.mxu0 0.0
    %4088 = vmatpush1.msra.mxu0 %v4026
    %4089 = vmatprep.subr.mxu0 0.0
    %4090 = vmatpush1.msra.mxu0 %v4027
    %4091 = vmatprep.subr.mxu0 0.0
    %4092 = vmatpush1.msra.mxu0 %v4028
    %4093 = vmatprep.subr.mxu0 0.0
    %4094 = vmatpush1.msra.mxu0 %v4029
    %4095 = vmatprep.subr.mxu0 0.0
    %4096 = vmatpush1.msra.mxu0 %v4030
    %4097 = vmatprep.subr.mxu0 0.0
    %4098 = vmatpush1.msra.mxu0 %v4031
    %4099 = vmatprep.subr.mxu0 0.0
    %4100 = vmatpush1.msra.mxu0 %v4032
    %4101 = vmatprep.subr.mxu0 0.0
    %4102 = vmatpush1.msra.mxu0 %v4033
    %4103 = vmatprep.subr.mxu0 0.0
    %4104 = vmatpush1.msra.mxu0 %v4034
    %4105 = vmatprep.subr.mxu0 0.0
    %4106 = vmatpush1.msra.mxu0 %v4035
    %4107 = vmatprep.mubr.f32.mxu0 %v4001
    %4108 = vmatmul.mubr.f32.gmra.mrb[0].mxu0 %v4000
    %v4109 = vpop.f32.mrb[0].mxu0
    %v4110 = vadd.f32 %v4041, %v4109
    %v4111 = vpop.f32.mrb[0].mxu0
    %4112 = vmatprep.mubr.f32.mxu0 %v4003
    %4113 = vmatmul.mubr.f32.gmra.mrb[0].mxu0 %v4002
    %v4114 = vpop.f32.mrb[0].mxu0
    %v4115 = vadd.f32 %v4041, %v4114
    %v4116 = vpop.f32.mrb[0].mxu0
    %4117 = vdwg.mxu0
    %vm4118 = vcmp.gt.f32.partialorder %v4110, 0.0
    %vm4119 = vcmp.gt.f32.partialorder %v4115, 0.0
    %v4120 = vmin.f32 %v4110, 0.0
    %v4121 = vmin.f32 %v4115, 0.0
    %v4122 = vmul.f32 %v4120, 1.442695
    %v4123 = vpow.pop %v4122
    %v4124 = vmul.f32 %v4121, 1.442695
    %v4125 = vpow.pop %v4124
    %v4126 = vsub.f32 %v4123, 1.0
    %v4127 = vsub.f32 %v4125, 1.0
    %v4128 = vsel %vm4118, %v4110, %v4126
    %v4129 = vsel %vm4119, %v4115, %v4127
    %v4130 = vld [vmem:[%s14] sm:$0xff]
    %v4131 = vld [vmem:[%s14 + $0x8] sm:$0xff]
    %v4132 = vld [vmem:[%s14 + $0x10] sm:$0xff]
    %v4133 = vld [vmem:[%s14 + $0x18] sm:$0xff]
    %v4134 = vld [vmem:[%s14 + $0x20] sm:$0xff]
    %v4135 = vld [vmem:[%s14 + $0x28] sm:$0xff]
    %v4136 = vld [vmem:[%s14 + $0x30] sm:$0xff]
    %v4137 = vld [vmem:[%s14 + $0x38] sm:$0xff]
    %v4138 = vld [vmem:[%s14 + $0x40] sm:$0xff]
    %v4139 = vld [vmem:[%s14 + $0x48] sm:$0xff]
    %v4140 = vld [vmem:[%s14 + $0x50] sm:$0xff]
    %v4141 = vld [vmem:[%s14 + $0x58] sm:$0xff]
    %v4142 = vld [vmem:[%s14 + $0x60] sm:$0xff]
    %v4143 = vld [vmem:[%s14 + $0x68] sm:$0xff]
    %v4144 = vld [vmem:[%s14 + $0x70] sm:$0xff]
    %v4145 = vld [vmem:[%s14 + $0x78] sm:$0xff]
    %v4146 = vld [vmem:[%s15] sm:$0x1]
    %v4148 = vlaneseq
    %v4149 = vshrl.u32 %v4148, 7
    %v4150 = vsub.s32 0, %v4149
    %v4151 = vrot.slane %v4146, %v4150
    %4153 = vmatprep.subr.mxu0 0.0
    %4154 = vmatpush1.msra.mxu0 %v4130
    %4155 = vmatprep.subr.mxu0 0.0
    %4156 = vmatpush1.msra.mxu0 %v4131
    %4157 = vmatprep.subr.mxu0 0.0
    %4158 = vmatpush1.msra.mxu0 %v4132
    %4159 = vmatprep.subr.mxu0 0.0
    %4160 = vmatpush1.msra.mxu0 %v4133
    %4161 = vmatprep.subr.mxu0 0.0
    %4162 = vmatpush1.msra.mxu0 %v4134
    %4163 = vmatprep.subr.mxu0 0.0
    %4164 = vmatpush1.msra.mxu0 %v4135
    %4165 = vmatprep.subr.mxu0 0.0
    %4166 = vmatpush1.msra.mxu0 %v4136
    %4167 = vmatprep.subr.mxu0 0.0
    %4168 = vmatpush1.msra.mxu0 %v4137
    %4169 = vmatprep.subr.mxu0 0.0
    %4170 = vmatpush1.msra.mxu0 %v4138
    %4171 = vmatprep.subr.mxu0 0.0
    %4172 = vmatpush1.msra.mxu0 %v4139
    %4173 = vmatprep.subr.mxu0 0.0
    %4174 = vmatpush1.msra.mxu0 %v4140
    %4175 = vmatprep.subr.mxu0 0.0
    %4176 = vmatpush1.msra.mxu0 %v4141
    %4177 = vmatprep.subr.mxu0 0.0
    %4178 = vmatpush1.msra.mxu0 %v4142
    %4179 = vmatprep.subr.mxu0 0.0
    %4180 = vmatpush1.msra.mxu0 %v4143
    %4181 = vmatprep.subr.mxu0 0.0
    %4182 = vmatpush1.msra.mxu0 %v4144
    %4183 = vmatprep.subr.mxu0 0.0
    %4184 = vmatpush1.msra.mxu0 %v4145
    %4185 = vmatprep.subr.mxu0 0.0
    %4186 = vmatpush1.msra.mxu0 0.0
    %4187 = vmatprep.subr.mxu0 0.0
    %4188 = vmatpush1.msra.mxu0 0.0
    %4189 = vmatprep.subr.mxu0 0.0
    %4190 = vmatpush1.msra.mxu0 0.0
    %4191 = vmatprep.subr.mxu0 0.0
    %4192 = vmatpush1.msra.mxu0 0.0
    %4193 = vmatprep.subr.mxu0 0.0
    %4194 = vmatpush1.msra.mxu0 0.0
    %4195 = vmatprep.subr.mxu0 0.0
    %4196 = vmatpush1.msra.mxu0 0.0
    %4197 = vmatprep.subr.mxu0 0.0
    %4198 = vmatpush1.msra.mxu0 0.0
    %4199 = vmatprep.subr.mxu0 0.0
    %4200 = vmatpush1.msra.mxu0 0.0
    %4201 = vmatprep.subr.mxu0 0.0
    %4202 = vmatpush1.msra.mxu0 0.0
    %4203 = vmatprep.subr.mxu0 0.0
    %4204 = vmatpush1.msra.mxu0 0.0
    %4205 = vmatprep.subr.mxu0 0.0
    %4206 = vmatpush1.msra.mxu0 0.0
    %4207 = vmatprep.subr.mxu0 0.0
    %4208 = vmatpush1.msra.mxu0 0.0
    %4209 = vmatprep.subr.mxu0 0.0
    %4210 = vmatpush1.msra.mxu0 0.0
    %4211 = vmatprep.subr.mxu0 0.0
    %4212 = vmatpush1.msra.mxu0 0.0
    %4213 = vmatprep.subr.mxu0 0.0
    %4214 = vmatpush1.msra.mxu0 0.0
    %4215 = vmatprep.subr.mxu0 0.0
    %4216 = vmatpush1.msra.mxu0 0.0
    %4217 = vmatprep.mubr.f32.mxu0 0.0
    %4218 = vmatmul.mubr.f32.gmra.mrb[0].mxu0 %v4128
    %v4219 = vpop.f32.mrb[0].mxu0
    %v4220 = vadd.f32 %v4151, %v4219
    %v4221 = vpop.f32.mrb[0].mxu0
    %4222 = vmatprep.mubr.f32.mxu0 0.0
    %4223 = vmatmul.mubr.f32.gmra.mrb[0].mxu0 %v4129
    %v4224 = vpop.f32.mrb[0].mxu0
    %v4225 = vadd.f32 %v4151, %v4224
    %v4226 = vpop.f32.mrb[0].mxu0
    %4227 = vdwg.mxu0
    %v4228 = vtanh.pop %v4220
    %v4229 = vtanh.pop %v4225
    %v4230 = vld [vmem:[%s16] sm:$0x1]
    %v4232 = vlaneseq
    %v4233 = vshrl.u32 %v4232, 7
    %v4234 = vsub.s32 0, %v4233
    %v4235 = vrot.slane %v4230, %v4234
    %v4237 = vmul.f32 %v4228, %v4235
    %v4238 = vmul.f32 %v4229, %v4235
    %v4239 = vld [vmem:[%s17] sm:$0x1]
    %v4241 = vlaneseq
    %v4242 = vshrl.u32 %v4241, 7
    %v4243 = vsub.s32 0, %v4242
    %v4244 = vrot.slane %v4239, %v4243
    %v4246 = vadd.f32 %v4237, %v4244
    %v4247 = vadd.f32 %v4238, %v4244
    %4248 = vst [vmem:[%s18] sm:$0xff] %v4246
    %4249 = vst [vmem:[%s18 + $0x8] sm:$0xff] %v4247
    // Predicated region
    $region94: #{actor_forward.1} parent=1 // pred_check
      _
    $region95: #{actor_forward.1} parent=1 // pred_check_branch
      %4251 = sbr.rel (0) target = $region97
    $region96: #{actor_forward.1} parent=1 // pred_region
      _
    $region97: #{actor_forward.1} parent=1 // pred_fallthru
      _
    // Predicated region
    $region98: #{actor_forward.1} parent=1 // pred_check
      _
    $region99: #{actor_forward.1} parent=1 // pred_check_branch
      %4253 = sbr.rel (0) target = $region101
    $region100: #{actor_forward.1} parent=1 // pred_region
      %s4255 = ssub.s32 64, 64
      %4256 = vsyncadd [#allocation5], %s4255
      %s4258 = sshll.u32 [#allocation12], 4
      %s4259 = int_to_ptr.vmem [resolvable:$true] %s4258
      %4261 = dma.vmem_to_hbm [thread:$0]  %s4259, 64, %s19, [#allocation5]
    $region101: #{actor_forward.1} parent=1 // pred_fallthru
      _
    // Predicated region
    $region102: #{actor_forward.1} parent=1 // pred_check
      _
    $region103: #{actor_forward.1} parent=1 // pred_check_branch
      %4263 = sbr.rel (0) target = $region105
    $region104: #{actor_forward.1} parent=1 // pred_region
      _
    $region105: #{actor_forward.1} parent=1 // pred_fallthru
      _
    // Predicated region
    $region106: #{actor_forward.1} parent=1 // pred_check
      _
    $region107: #{actor_forward.1} parent=1 // pred_check_branch
      %4265 = sbr.rel (0) target = $region109
    $region108: #{actor_forward.1} parent=1 // pred_region
      %4266 = dma.done [#allocation5], 64
    $region109: #{actor_forward.1} parent=1 // pred_fallthru
      _
    %4267 = vsyncpa [#allocation4], 1
    %4268 = vsyncpa [#allocation7], 1
    %4269 = vsyncpa [#allocation10], 1
    %4270 = vsyncpa [#allocation5], 1

</llo_original>
